<compile_context>
chip_gen: v5e
topology: v5e:2x2
jax: 0.10.0
libtpu: 0.0.40
codegen_flags: <defaults>
</compile_context>

<pallas_src>
import functools

import jax
import jax.numpy as jnp
from jax.experimental import pallas as pl
from jax.experimental.pallas import tpu as pltpu  # noqa: F401  (kept for TPU backend)

# ---------------- config (small, consistent with a ViT vision tower) --------
IMAGE_SIZE = 16
PATCH_SIZE = 8
CHANNELS = 3
HIDDEN = 32
HEADS = 4
HEAD_DIM = HIDDEN // HEADS
INTERMEDIATE = 64
NUM_LAYERS = 3
SELECT_LAYER = -2
SELECT_FEATURE = "patch"
LN_EPS = 1e-5

NUM_PATCHES = (IMAGE_SIZE // PATCH_SIZE) ** 2       # 4
SEQ = NUM_PATCHES + 1                               # 5 (CLS + patches)
SEQ_PAD = ((SEQ + 7) // 8) * 8                      # 8 (full sublanes)


# ---------------------------- fused Pallas kernel ----------------------------
def _ln(x, g, b):
    mu = jnp.mean(x, axis=-1, keepdims=True)
    var = jnp.mean((x - mu) ** 2, axis=-1, keepdims=True)
    return (x - mu) * jax.lax.rsqrt(var + LN_EPS) * g + b


def _bdot(a, b):
    """Dense matmul with bf16 MXU operands, f32 accumulation."""
    return jnp.dot(a.astype(jnp.bfloat16), b.astype(jnp.bfloat16),
                   preferred_element_type=jnp.float32)


def _fused_tower_kernel(
    # --- resident inputs (all full VMEM blocks, single invocation) ---
    patches_ref,            # (B*S_pad, K)   zero rows at CLS + pad positions
    patch_w_ref,            # (K, D)
    pos_cls_ref,            # (B*S_pad, D)   cls+pos[0] at row 0, pos[1:] at patch rows
    pre_g_ref, pre_b_ref,   # (1, D)
    bias_ref,               # (B*S_pad, B*S_pad) additive mask: 0 same-batch real keys,
                            #                    -1e9 cross-batch / pad keys
    # --- stacked per-layer weights, resident ---
    ln1_g_ref, ln1_b_ref,   # (L, 1, D)
    wqkv_ref, bqkv_ref,     # (L, D, 3D), (L, 1, 3D)   (1/sqrt(hd) folded into q part)
    wo_ref, bo_ref,         # (L, D, D),  (L, 1, D)
    ln2_g_ref, ln2_b_ref,   # (L, 1, D)
    w1_ref, b1_ref,         # (L, D, F),  (L, 1, F)
    w2_ref, b2_ref,         # (L, F, D),  (L, 1, D)
    # --- output ---
    hs_out_ref,             # (L+1, B*S_pad, D)  all hidden states
    *, num_layers, num_heads, head_dim,
):
    D = num_heads * head_dim

    # ---- patch embedding + CLS/pos add + pre-layernorm ----------------------
    emb = _bdot(patches_ref[...], patch_w_ref[...])
    x = _ln(emb + pos_cls_ref[...], pre_g_ref[...], pre_b_ref[...])
    hs_out_ref[0] = x.astype(hs_out_ref.dtype)

    bias = bias_ref[...]                               # (BS, BS), loaded once

    # ---- encoder layers, statically unrolled (hidden slab stays in vregs) ---
    for l in range(num_layers):
        # -- self attention --
        h = _ln(x, ln1_g_ref[l], ln1_b_ref[l])
        qkv = _bdot(h, wqkv_ref[l]) + bqkv_ref[l]      # (BS, 3D)
        q = qkv[:, 0:D]                                # scale already folded in
        k = qkv[:, D:2 * D]
        v = qkv[:, 2 * D:3 * D]

        head_outs = []
        for hh in range(num_heads):                    # static loop, H=4
            cs = slice(hh * head_dim, (hh + 1) * head_dim)
            # merged-batch scores: (BS, hd) x (BS, hd)^T -> (BS, BS), f32
            s = jax.lax.dot_general(
                q[:, cs], k[:, cs], (((1,), (1,)), ((), ())),
                preferred_element_type=jnp.float32) + bias
            s = s - jnp.max(s, axis=-1, keepdims=True)
            p = jnp.exp(s)
            p = p * pl.reciprocal(jnp.sum(p, axis=-1, keepdims=True), approx=True)
            head_outs.append(
                jnp.dot(p, v[:, cs], preferred_element_type=jnp.float32))
        attn = jnp.concatenate(head_outs, axis=-1)     # (BS, D)

        attn = _bdot(attn, wo_ref[l]) + bo_ref[l]
        x = x + attn

        # -- MLP (quick_gelu) --
        h2 = _ln(x, ln2_g_ref[l], ln2_b_ref[l])
        f = _bdot(h2, w1_ref[l]) + b1_ref[l]
        f = f * jax.nn.sigmoid(1.702 * f)              # quick_gelu (CLIP default)
        f = _bdot(f, w2_ref[l]) + b2_ref[l]
        x = x + f

        hs_out_ref[l + 1] = x.astype(hs_out_ref.dtype)


# ---------------------------- wrappers ---------------------------------------
def _stack_layer_params(layers):
    """Stack per-layer params into (L, ...) arrays; fuse QKV and fold 1/sqrt(d)."""
    scale = 1.0 / (HEAD_DIM ** 0.5)

    def stk(name):
        return jnp.stack([lp[name] for lp in layers], axis=0)

    wqkv = jnp.stack(
        [jnp.concatenate([lp["wq"] * scale, lp["wk"], lp["wv"]], axis=1)
         for lp in layers], axis=0)                           # (L, D, 3D)
    bqkv = jnp.stack(
        [jnp.concatenate([lp["bq"] * scale, lp["bk"], lp["bv"]], axis=1)
         for lp in layers], axis=0)                           # (L, 1, 3D)
    return {
        "ln1_g": stk("ln1_g"), "ln1_b": stk("ln1_b"),
        "wqkv": wqkv, "bqkv": bqkv,
        "wo": stk("wo"), "bo": stk("bo"),
        "ln2_g": stk("ln2_g"), "ln2_b": stk("ln2_b"),
        "w1": stk("w1"), "b1": stk("b1"),
        "w2": stk("w2"), "b2": stk("b2"),
    }


def _fused_tower(patches_flat, pos_cls_flat, attn_bias, params, stacked):
    BS, _ = patches_flat.shape
    D, L = HIDDEN, NUM_LAYERS

    kern = functools.partial(
        _fused_tower_kernel,
        num_layers=L, num_heads=HEADS, head_dim=HEAD_DIM)

    # Single invocation (no grid): every input / the output is a resident full VMEM
    # block (default BlockSpecs); ~150 KB total, far under the scoped VMEM limit.
    hs_out = pl.pallas_call(
        kern,
        out_shape=jax.ShapeDtypeStruct((L + 1, BS, D), jnp.float32),
    )(
        patches_flat, params["patch_w"], pos_cls_flat,
        params["pre_ln_g"], params["pre_ln_b"], attn_bias,
        stacked["ln1_g"], stacked["ln1_b"],
        stacked["wqkv"], stacked["bqkv"],
        stacked["wo"], stacked["bo"],
        stacked["ln2_g"], stacked["ln2_b"],
        stacked["w1"], stacked["b1"],
        stacked["w2"], stacked["b2"],
    )
    return hs_out


# ---------------------------- model forward ----------------------------------
def clip_vision_tower_forward(images, params):
    """images: (B, C, H, W) NCHW float32.  Returns (image_features, hidden_states)."""
    B, C, H, W = images.shape
    ps = PATCH_SIZE
    gh, gw = H // ps, W // ps
    P = gh * gw
    S = P + 1
    D = HIDDEN
    K = C * ps * ps
    BS = B * SEQ_PAD

    x = images.astype(jnp.float32)
    # im2col glue: (B, C, H, W) -> (B, P, C*ps*ps)  (matches conv stride=ps, no bias)
    patches = (
        x.reshape(B, C, gh, ps, gw, ps)
        .transpose(0, 2, 4, 1, 3, 5)
        .reshape(B, P, K)
    )
    # Layout plumbing: place patches at token rows 1..P of a padded S_pad token axis
    # (row 0 = CLS, trailing rows = pad) so a single matmul + pos/CLS add builds the
    # full hidden slab inside the kernel with no in-kernel shuffles.
    patches_padded = jnp.zeros((B, SEQ_PAD, K), jnp.float32).at[:, 1:1 + P].set(patches)
    patches_flat = patches_padded.reshape(BS, K)

    pos = params["pos"][0]          # (S, D)
    cls = params["cls"][0, 0]       # (D,)
    pos_cls = jnp.zeros((SEQ_PAD, D), jnp.float32)
    pos_cls = pos_cls.at[0].set(cls + pos[0])
    pos_cls = pos_cls.at[1:1 + P].set(pos[1:1 + P])
    pos_cls_flat = jnp.tile(pos_cls, (B, 1))            # (B*S_pad, D)

    # Block-diagonal additive attention bias over the merged (B*S_pad) token axis:
    # 0 for same-batch real keys, -1e9 for cross-batch blocks and pad keys.
    row = jnp.arange(BS)
    same_batch = (row[:, None] // SEQ_PAD) == (row[None, :] // SEQ_PAD)
    real_key = (row[None, :] % SEQ_PAD) < S
    attn_bias = jnp.where(same_batch & real_key, 0.0, -1e9).astype(jnp.float32)

    stacked = _stack_layer_params(params["layers"])
    hs_out = _fused_tower(patches_flat, pos_cls_flat, attn_bias, params, stacked)

    hs_out = hs_out.reshape(NUM_LAYERS + 1, B, SEQ_PAD, D)[:, :, :S]
    hidden_states = [hs_out[i] for i in range(NUM_LAYERS + 1)]

    feats = hidden_states[SELECT_LAYER]
    if SELECT_FEATURE == "patch":
        feats = feats[:, 1:]        # drop CLS token
    # TODO(synk): HF CLIPVisionModel also applies post_layernorm for pooler_output;
    # not needed for feature_select('patch', select_layer=-2) semantics.
    return feats.astype(images.dtype), hidden_states


# ---------------------------- pure-JAX reference ------------------------------
def _reference_forward(images, params):
    B, C, H, W = images.shape
    ps = PATCH_SIZE
    gh, gw = H // ps, W // ps
    P = gh * gw
    x = images.astype(jnp.float32)
    patches = (
        x.reshape(B, C, gh, ps, gw, ps)
        .transpose(0, 2, 4, 1, 3, 5)
        .reshape(B, P, C * ps * ps)
    )
    pe = patches @ params["patch_w"]
    hidden = jnp.concatenate(
        [jnp.broadcast_to(params["cls"], (B, 1, HIDDEN)), pe], axis=1
    ) + params["pos"]

    def ln(z, g, b):
        mu = jnp.mean(z, -1, keepdims=True)
        var = jnp.mean((z - mu) ** 2, -1, keepdims=True)
        return (z - mu) * jax.lax.rsqrt(var + LN_EPS) * g + b

    hidden = ln(hidden, params["pre_ln_g"], params["pre_ln_b"])
    hs = [hidden]
    for lp in params["layers"]:
        h = ln(hidden, lp["ln1_g"], lp["ln1_b"])
        q = h @ lp["wq"] + lp["bq"]
        k = h @ lp["wk"] + lp["bk"]
        v = h @ lp["wv"] + lp["bv"]
        B_, S_, _ = q.shape
        q = q.reshape(B_, S_, HEADS, HEAD_DIM).transpose(0, 2, 1, 3) / (HEAD_DIM ** 0.5)
        k = k.reshape(B_, S_, HEADS, HEAD_DIM).transpose(0, 2, 1, 3)
        v = v.reshape(B_, S_, HEADS, HEAD_DIM).transpose(0, 2, 1, 3)
        s = jnp.einsum("bhqd,bhkd->bhqk", q, k)
        p = jax.nn.softmax(s, axis=-1)
        o = jnp.einsum("bhqk,bhkd->bhqd", p, v)
        o = o.transpose(0, 2, 1, 3).reshape(B_, S_, HIDDEN)
        hidden = hidden + (o @ lp["wo"] + lp["bo"])
        h2 = ln(hidden, lp["ln2_g"], lp["ln2_b"])
        f = h2 @ lp["w1"] + lp["b1"]
        f = f * jax.nn.sigmoid(1.702 * f)
        hidden = hidden + (f @ lp["w2"] + lp["b2"])
        hs.append(hidden)
    feats = hs[SELECT_LAYER]
    if SELECT_FEATURE == "patch":
        feats = feats[:, 1:]
    return feats.astype(images.dtype)


# ---------------------------- deterministic params ----------------------------
def init_params(key):
    D, F = HIDDEN, INTERMEDIATE
    patch_dim = CHANNELS * PATCH_SIZE * PATCH_SIZE
    num_pos = NUM_PATCHES + 1
    keys = iter(jax.random.split(key, 16 + 8 * NUM_LAYERS))

    def nrm(shape, scale=0.02):
        return (scale * jax.random.normal(next(keys), shape)).astype(jnp.float32)

    params = {
        "patch_w": nrm((patch_dim, D)),
        "cls": nrm((1, 1, D)),
        "pos": nrm((1, num_pos, D)),
        "pre_ln_g": jnp.ones((1, D), jnp.float32),
        "pre_ln_b": jnp.zeros((1, D), jnp.float32),
        "layers": [],
    }
    for _ in range(NUM_LAYERS):
        lp = {
            "ln1_g": jnp.ones((1, D), jnp.float32),
            "ln1_b": jnp.zeros((1, D), jnp.float32),
            "wq": nrm((D, D)), "bq": nrm((1, D)),
            "wk": nrm((D, D)), "bk": nrm((1, D)),
            "wv": nrm((D, D)), "bv": nrm((1, D)),
            "wo": nrm((D, D)), "bo": nrm((1, D)),
            "ln2_g": jnp.ones((1, D), jnp.float32),
            "ln2_b": jnp.zeros((1, D), jnp.float32),
            "w1": nrm((D, F)), "b1": nrm((1, F)),
            "w2": nrm((F, D)), "b2": nrm((1, D)),
        }
        params["layers"].append(lp)
    return params


if __name__ == "__main__":
    key = jax.random.PRNGKey(0)
    kp, kx = jax.random.split(key)
    params = init_params(kp)

    images = jax.random.normal(
        kx, (2, CHANNELS, IMAGE_SIZE, IMAGE_SIZE), dtype=jnp.float32
    )

    feats, hidden_states = clip_vision_tower_forward(images, params)
    feats = jax.block_until_ready(feats)

    expected_tokens = NUM_PATCHES
    assert feats.shape == (2, expected_tokens, HIDDEN), feats.shape
    assert feats.dtype == images.dtype
    assert len(hidden_states) == NUM_LAYERS + 1

    ref = _reference_forward(images, params)
    # Tolerance slightly relaxed vs. pure-f32: dense matmuls use bf16 MXU operands
    # (f32 accumulation); any structural bug would blow past this by orders of magnitude.
    err = float(jnp.max(jnp.abs(feats - ref)))
    assert jnp.allclose(feats, ref, rtol=1e-2, atol=2e-2), err

    print("KERNEL_OK")
</pallas_src>

<mosaic_0001>
module attributes {stable_mosaic.version = 11 : i64} {
  func.func @_fused_tower_kernel(%arg0: memref<16x192xf32, #tpu.memory_space<vmem>>, %arg1: memref<192x32xf32, #tpu.memory_space<vmem>>, %arg2: memref<16x32xf32, #tpu.memory_space<vmem>>, %arg3: memref<1x32xf32, #tpu.memory_space<vmem>>, %arg4: memref<1x32xf32, #tpu.memory_space<vmem>>, %arg5: memref<16x16xf32, #tpu.memory_space<vmem>>, %arg6: memref<3x1x32xf32, #tpu.memory_space<vmem>>, %arg7: memref<3x1x32xf32, #tpu.memory_space<vmem>>, %arg8: memref<3x32x96xf32, #tpu.memory_space<vmem>>, %arg9: memref<3x1x96xf32, #tpu.memory_space<vmem>>, %arg10: memref<3x32x32xf32, #tpu.memory_space<vmem>>, %arg11: memref<3x1x32xf32, #tpu.memory_space<vmem>>, %arg12: memref<3x1x32xf32, #tpu.memory_space<vmem>>, %arg13: memref<3x1x32xf32, #tpu.memory_space<vmem>>, %arg14: memref<3x32x64xf32, #tpu.memory_space<vmem>>, %arg15: memref<3x1x64xf32, #tpu.memory_space<vmem>>, %arg16: memref<3x64x32xf32, #tpu.memory_space<vmem>>, %arg17: memref<3x1x32xf32, #tpu.memory_space<vmem>>, %arg18: memref<4x16x32xf32, #tpu.memory_space<vmem>>) attributes {dimension_semantics = [], scalar_prefetch = 0 : i64, scratch_operands = 0 : i64, tpu.core_type = #tpu.core_type<tc>} {
    %c0 = arith.constant 0 : index
    %c0_0 = arith.constant 0 : index
    %0 = vector.load %arg0[%c0, %c0_0] : memref<16x192xf32, #tpu.memory_space<vmem>>, vector<16x192xf32>
    %c0_1 = arith.constant 0 : index
    %c0_2 = arith.constant 0 : index
    %1 = vector.load %arg1[%c0_1, %c0_2] : memref<192x32xf32, #tpu.memory_space<vmem>>, vector<192x32xf32>
    %2 = arith.truncf %0 : vector<16x192xf32> to vector<16x192xbf16>
    %3 = arith.truncf %1 : vector<192x32xf32> to vector<192x32xbf16>
    %cst = arith.constant dense<0.000000e+00> : vector<16x32xf32>
    %4 = tpu.matmul %2, %3, %cst {dimension_numbers = #tpu.dot_dimension_numbers<[1], [0], [0], [1], [0, 0, 1, 1], [], []>} : vector<16x192xbf16>, vector<192x32xbf16>, vector<16x32xf32> -> vector<16x32xf32>
    %c0_3 = arith.constant 0 : index
    %c0_4 = arith.constant 0 : index
    %5 = vector.load %arg2[%c0_3, %c0_4] : memref<16x32xf32, #tpu.memory_space<vmem>>, vector<16x32xf32>
    %6 = arith.addf %4, %5 : vector<16x32xf32>
    %c0_5 = arith.constant 0 : index
    %c0_6 = arith.constant 0 : index
    %7 = vector.load %arg3[%c0_5, %c0_6] : memref<1x32xf32, #tpu.memory_space<vmem>>, vector<1x32xf32>
    %c0_7 = arith.constant 0 : index
    %c0_8 = arith.constant 0 : index
    %8 = vector.load %arg4[%c0_7, %c0_8] : memref<1x32xf32, #tpu.memory_space<vmem>>, vector<1x32xf32>
    %cst_9 = arith.constant dense<0.000000e+00> : vector<16xf32>
    %9 = vector.multi_reduction <add>, %6, %cst_9 [1] : vector<16x32xf32> to vector<16xf32>
    %10 = vector.shape_cast %9 : vector<16xf32> to vector<16x1xf32>
    %cst_10 = arith.constant 3.200000e+01 : f32
    %11 = vector.broadcast %cst_10 : f32 to vector<16x1xf32>
    %12 = arith.divf %10, %11 : vector<16x1xf32>
    %13 = vector.broadcast %12 : vector<16x1xf32> to vector<16x32xf32>
    %14 = arith.subf %6, %13 : vector<16x32xf32>
    %15 = arith.mulf %14, %14 : vector<16x32xf32>
    %cst_11 = arith.constant dense<0.000000e+00> : vector<16xf32>
    %16 = vector.multi_reduction <add>, %15, %cst_11 [1] : vector<16x32xf32> to vector<16xf32>
    %17 = vector.shape_cast %16 : vector<16xf32> to vector<16x1xf32>
    %cst_12 = arith.constant 3.200000e+01 : f32
    %18 = vector.broadcast %cst_12 : f32 to vector<16x1xf32>
    %19 = arith.divf %17, %18 : vector<16x1xf32>
    %20 = vector.broadcast %12 : vector<16x1xf32> to vector<16x32xf32>
    %21 = arith.subf %6, %20 : vector<16x32xf32>
    %cst_13 = arith.constant 9.99999974E-6 : f32
    %22 = vector.broadcast %cst_13 : f32 to vector<16x1xf32>
    %23 = arith.addf %19, %22 : vector<16x1xf32>
    %24 = math.rsqrt %23 : vector<16x1xf32>
    %25 = vector.broadcast %24 : vector<16x1xf32> to vector<16x32xf32>
    %26 = arith.mulf %21, %25 : vector<16x32xf32>
    %27 = vector.broadcast %7 : vector<1x32xf32> to vector<16x32xf32>
    %28 = arith.mulf %26, %27 : vector<16x32xf32>
    %29 = vector.broadcast %8 : vector<1x32xf32> to vector<16x32xf32>
    %30 = arith.addf %28, %29 : vector<16x32xf32>
    %c0_14 = arith.constant 0 : index
    %c0_15 = arith.constant 0 : index
    %c0_16 = arith.constant 0 : index
    %31 = vector.load %arg18[%c0_14, %c0_15, %c0_16] : memref<4x16x32xf32, #tpu.memory_space<vmem>>, vector<1x16x32xf32>
    %32 = vector.shape_cast %31 : vector<1x16x32xf32> to vector<16x32xf32>
    %33 = vector.shape_cast %30 : vector<16x32xf32> to vector<1x16x32xf32>
    tpu.vector_store %arg18[%c0_14, %c0_15, %c0_16], %33 {strides = array<i32>} : memref<4x16x32xf32, #tpu.memory_space<vmem>>, vector<1x16x32xf32>,
    %c0_17 = arith.constant 0 : index
    %c0_18 = arith.constant 0 : index
    %34 = vector.load %arg5[%c0_17, %c0_18] : memref<16x16xf32, #tpu.memory_space<vmem>>, vector<16x16xf32>
    %c0_19 = arith.constant 0 : index
    %c0_20 = arith.constant 0 : index
    %c0_21 = arith.constant 0 : index
    %35 = vector.load %arg6[%c0_19, %c0_20, %c0_21] : memref<3x1x32xf32, #tpu.memory_space<vmem>>, vector<1x1x32xf32>
    %36 = vector.shape_cast %35 : vector<1x1x32xf32> to vector<1x32xf32>
    %c0_22 = arith.constant 0 : index
    %c0_23 = arith.constant 0 : index
    %c0_24 = arith.constant 0 : index
    %37 = vector.load %arg7[%c0_22, %c0_23, %c0_24] : memref<3x1x32xf32, #tpu.memory_space<vmem>>, vector<1x1x32xf32>
    %38 = vector.shape_cast %37 : vector<1x1x32xf32> to vector<1x32xf32>
    %cst_25 = arith.constant dense<0.000000e+00> : vector<16xf32>
    %39 = vector.multi_reduction <add>, %30, %cst_25 [1] : vector<16x32xf32> to vector<16xf32>
    %40 = vector.shape_cast %39 : vector<16xf32> to vector<16x1xf32>
    %cst_26 = arith.constant 3.200000e+01 : f32
    %41 = vector.broadcast %cst_26 : f32 to vector<16x1xf32>
    %42 = arith.divf %40, %41 : vector<16x1xf32>
    %43 = vector.broadcast %42 : vector<16x1xf32> to vector<16x32xf32>
    %44 = arith.subf %30, %43 : vector<16x32xf32>
    %45 = arith.mulf %44, %44 : vector<16x32xf32>
    %cst_27 = arith.constant dense<0.000000e+00> : vector<16xf32>
    %46 = vector.multi_reduction <add>, %45, %cst_27 [1] : vector<16x32xf32> to vector<16xf32>
    %47 = vector.shape_cast %46 : vector<16xf32> to vector<16x1xf32>
    %cst_28 = arith.constant 3.200000e+01 : f32
    %48 = vector.broadcast %cst_28 : f32 to vector<16x1xf32>
    %49 = arith.divf %47, %48 : vector<16x1xf32>
    %50 = vector.broadcast %42 : vector<16x1xf32> to vector<16x32xf32>
    %51 = arith.subf %30, %50 : vector<16x32xf32>
    %cst_29 = arith.constant 9.99999974E-6 : f32
    %52 = vector.broadcast %cst_29 : f32 to vector<16x1xf32>
    %53 = arith.addf %49, %52 : vector<16x1xf32>
    %54 = math.rsqrt %53 : vector<16x1xf32>
    %55 = vector.broadcast %54 : vector<16x1xf32> to vector<16x32xf32>
    %56 = arith.mulf %51, %55 : vector<16x32xf32>
    %57 = vector.broadcast %36 : vector<1x32xf32> to vector<16x32xf32>
    %58 = arith.mulf %56, %57 : vector<16x32xf32>
    %59 = vector.broadcast %38 : vector<1x32xf32> to vector<16x32xf32>
    %60 = arith.addf %58, %59 : vector<16x32xf32>
    %c0_30 = arith.constant 0 : index
    %c0_31 = arith.constant 0 : index
    %c0_32 = arith.constant 0 : index
    %61 = vector.load %arg8[%c0_30, %c0_31, %c0_32] : memref<3x32x96xf32, #tpu.memory_space<vmem>>, vector<1x32x96xf32>
    %62 = vector.shape_cast %61 : vector<1x32x96xf32> to vector<32x96xf32>
    %63 = arith.truncf %60 : vector<16x32xf32> to vector<16x32xbf16>
    %64 = arith.truncf %62 : vector<32x96xf32> to vector<32x96xbf16>
    %cst_33 = arith.constant dense<0.000000e+00> : vector<16x96xf32>
    %65 = tpu.matmul %63, %64, %cst_33 {dimension_numbers = #tpu.dot_dimension_numbers<[1], [0], [0], [1], [0, 0, 1, 1], [], []>} : vector<16x32xbf16>, vector<32x96xbf16>, vector<16x96xf32> -> vector<16x96xf32>
    %c0_34 = arith.constant 0 : index
    %c0_35 = arith.constant 0 : index
    %c0_36 = arith.constant 0 : index
    %66 = vector.load %arg9[%c0_34, %c0_35, %c0_36] : memref<3x1x96xf32, #tpu.memory_space<vmem>>, vector<1x1x96xf32>
    %67 = vector.shape_cast %66 : vector<1x1x96xf32> to vector<1x96xf32>
    %68 = vector.broadcast %67 : vector<1x96xf32> to vector<16x96xf32>
    %69 = arith.addf %65, %68 : vector<16x96xf32>
    %70 = vector.extract_strided_slice %69 {offsets = [0, 0], sizes = [16, 32], strides = [1, 1]} : vector<16x96xf32> to vector<16x32xf32>
    %71 = vector.extract_strided_slice %69 {offsets = [0, 32], sizes = [16, 32], strides = [1, 1]} : vector<16x96xf32> to vector<16x32xf32>
    %72 = vector.extract_strided_slice %69 {offsets = [0, 64], sizes = [16, 32], strides = [1, 1]} : vector<16x96xf32> to vector<16x32xf32>
    %73 = vector.extract_strided_slice %70 {offsets = [0, 0], sizes = [16, 8], strides = [1, 1]} : vector<16x32xf32> to vector<16x8xf32>
    %74 = vector.extract_strided_slice %71 {offsets = [0, 0], sizes = [16, 8], strides = [1, 1]} : vector<16x32xf32> to vector<16x8xf32>
    %cst_37 = arith.constant dense<0.000000e+00> : vector<16x16xf32>
    %75 = tpu.matmul %73, %74, %cst_37 {dimension_numbers = #tpu.dot_dimension_numbers<[1], [1], [0], [0], [0, 0, 1, 0], [], []>} : vector<16x8xf32>, vector<16x8xf32>, vector<16x16xf32> -> vector<16x16xf32>
    %76 = arith.addf %75, %34 : vector<16x16xf32>
    %cst_38 = arith.constant dense<0xFF800000> : vector<16xf32>
    %77 = vector.multi_reduction <maximumf>, %76, %cst_38 [1] : vector<16x16xf32> to vector<16xf32>
    %78 = vector.shape_cast %77 : vector<16xf32> to vector<16x1xf32>
    %79 = vector.broadcast %78 : vector<16x1xf32> to vector<16x16xf32>
    %80 = arith.subf %76, %79 : vector<16x16xf32>
    %81 = math.exp %80 : vector<16x16xf32>
    %cst_39 = arith.constant dense<0.000000e+00> : vector<16xf32>
    %82 = vector.multi_reduction <add>, %81, %cst_39 [1] : vector<16x16xf32> to vector<16xf32>
    %83 = vector.shape_cast %82 : vector<16xf32> to vector<16x1xf32>
    %84 = tpu.reciprocal %83 {approx = true} : vector<16x1xf32> -> vector<16x1xf32>
    %85 = vector.broadcast %84 : vector<16x1xf32> to vector<16x16xf32>
    %86 = arith.mulf %81, %85 : vector<16x16xf32>
    %87 = vector.extract_strided_slice %72 {offsets = [0, 0], sizes = [16, 8], strides = [1, 1]} : vector<16x32xf32> to vector<16x8xf32>
    %cst_40 = arith.constant dense<0.000000e+00> : vector<16x8xf32>
    %88 = tpu.matmul %86, %87, %cst_40 {dimension_numbers = #tpu.dot_dimension_numbers<[1], [0], [0], [1], [0, 0, 1, 1], [], []>} : vector<16x16xf32>, vector<16x8xf32>, vector<16x8xf32> -> vector<16x8xf32>
    %89 = vector.extract_strided_slice %70 {offsets = [0, 8], sizes = [16, 8], strides = [1, 1]} : vector<16x32xf32> to vector<16x8xf32>
    %90 = vector.extract_strided_slice %71 {offsets = [0, 8], sizes = [16, 8], strides = [1, 1]} : vector<16x32xf32> to vector<16x8xf32>
    %cst_41 = arith.constant dense<0.000000e+00> : vector<16x16xf32>
    %91 = tpu.matmul %89, %90, %cst_41 {dimension_numbers = #tpu.dot_dimension_numbers<[1], [1], [0], [0], [0, 0, 1, 0], [], []>} : vector<16x8xf32>, vector<16x8xf32>, vector<16x16xf32> -> vector<16x16xf32>
    %92 = arith.addf %91, %34 : vector<16x16xf32>
    %cst_42 = arith.constant dense<0xFF800000> : vector<16xf32>
    %93 = vector.multi_reduction <maximumf>, %92, %cst_42 [1] : vector<16x16xf32> to vector<16xf32>
    %94 = vector.shape_cast %93 : vector<16xf32> to vector<16x1xf32>
    %95 = vector.broadcast %94 : vector<16x1xf32> to vector<16x16xf32>
    %96 = arith.subf %92, %95 : vector<16x16xf32>
    %97 = math.exp %96 : vector<16x16xf32>
    %cst_43 = arith.constant dense<0.000000e+00> : vector<16xf32>
    %98 = vector.multi_reduction <add>, %97, %cst_43 [1] : vector<16x16xf32> to vector<16xf32>
    %99 = vector.shape_cast %98 : vector<16xf32> to vector<16x1xf32>
    %100 = tpu.reciprocal %99 {approx = true} : vector<16x1xf32> -> vector<16x1xf32>
    %101 = vector.broadcast %100 : vector<16x1xf32> to vector<16x16xf32>
    %102 = arith.mulf %97, %101 : vector<16x16xf32>
    %103 = vector.extract_strided_slice %72 {offsets = [0, 8], sizes = [16, 8], strides = [1, 1]} : vector<16x32xf32> to vector<16x8xf32>
    %cst_44 = arith.constant dense<0.000000e+00> : vector<16x8xf32>
    %104 = tpu.matmul %102, %103, %cst_44 {dimension_numbers = #tpu.dot_dimension_numbers<[1], [0], [0], [1], [0, 0, 1, 1], [], []>} : vector<16x16xf32>, vector<16x8xf32>, vector<16x8xf32> -> vector<16x8xf32>
    %105 = vector.extract_strided_slice %70 {offsets = [0, 16], sizes = [16, 8], strides = [1, 1]} : vector<16x32xf32> to vector<16x8xf32>
    %106 = vector.extract_strided_slice %71 {offsets = [0, 16], sizes = [16, 8], strides = [1, 1]} : vector<16x32xf32> to vector<16x8xf32>
    %cst_45 = arith.constant dense<0.000000e+00> : vector<16x16xf32>
    %107 = tpu.matmul %105, %106, %cst_45 {dimension_numbers = #tpu.dot_dimension_numbers<[1], [1], [0], [0], [0, 0, 1, 0], [], []>} : vector<16x8xf32>, vector<16x8xf32>, vector<16x16xf32> -> vector<16x16xf32>
    %108 = arith.addf %107, %34 : vector<16x16xf32>
    %cst_46 = arith.constant dense<0xFF800000> : vector<16xf32>
    %109 = vector.multi_reduction <maximumf>, %108, %cst_46 [1] : vector<16x16xf32> to vector<16xf32>
    %110 = vector.shape_cast %109 : vector<16xf32> to vector<16x1xf32>
    %111 = vector.broadcast %110 : vector<16x1xf32> to vector<16x16xf32>
    %112 = arith.subf %108, %111 : vector<16x16xf32>
    %113 = math.exp %112 : vector<16x16xf32>
    %cst_47 = arith.constant dense<0.000000e+00> : vector<16xf32>
    %114 = vector.multi_reduction <add>, %113, %cst_47 [1] : vector<16x16xf32> to vector<16xf32>
    %115 = vector.shape_cast %114 : vector<16xf32> to vector<16x1xf32>
    %116 = tpu.reciprocal %115 {approx = true} : vector<16x1xf32> -> vector<16x1xf32>
    %117 = vector.broadcast %116 : vector<16x1xf32> to vector<16x16xf32>
    %118 = arith.mulf %113, %117 : vector<16x16xf32>
    %119 = vector.extract_strided_slice %72 {offsets = [0, 16], sizes = [16, 8], strides = [1, 1]} : vector<16x32xf32> to vector<16x8xf32>
    %cst_48 = arith.constant dense<0.000000e+00> : vector<16x8xf32>
    %120 = tpu.matmul %118, %119, %cst_48 {dimension_numbers = #tpu.dot_dimension_numbers<[1], [0], [0], [1], [0, 0, 1, 1], [], []>} : vector<16x16xf32>, vector<16x8xf32>, vector<16x8xf32> -> vector<16x8xf32>
    %121 = vector.extract_strided_slice %70 {offsets = [0, 24], sizes = [16, 8], strides = [1, 1]} : vector<16x32xf32> to vector<16x8xf32>
    %122 = vector.extract_strided_slice %71 {offsets = [0, 24], sizes = [16, 8], strides = [1, 1]} : vector<16x32xf32> to vector<16x8xf32>
    %cst_49 = arith.constant dense<0.000000e+00> : vector<16x16xf32>
    %123 = tpu.matmul %121, %122, %cst_49 {dimension_numbers = #tpu.dot_dimension_numbers<[1], [1], [0], [0], [0, 0, 1, 0], [], []>} : vector<16x8xf32>, vector<16x8xf32>, vector<16x16xf32> -> vector<16x16xf32>
    %124 = arith.addf %123, %34 : vector<16x16xf32>
    %cst_50 = arith.constant dense<0xFF800000> : vector<16xf32>
    %125 = vector.multi_reduction <maximumf>, %124, %cst_50 [1] : vector<16x16xf32> to vector<16xf32>
    %126 = vector.shape_cast %125 : vector<16xf32> to vector<16x1xf32>
    %127 = vector.broadcast %126 : vector<16x1xf32> to vector<16x16xf32>
    %128 = arith.subf %124, %127 : vector<16x16xf32>
    %129 = math.exp %128 : vector<16x16xf32>
    %cst_51 = arith.constant dense<0.000000e+00> : vector<16xf32>
    %130 = vector.multi_reduction <add>, %129, %cst_51 [1] : vector<16x16xf32> to vector<16xf32>
    %131 = vector.shape_cast %130 : vector<16xf32> to vector<16x1xf32>
    %132 = tpu.reciprocal %131 {approx = true} : vector<16x1xf32> -> vector<16x1xf32>
    %133 = vector.broadcast %132 : vector<16x1xf32> to vector<16x16xf32>
    %134 = arith.mulf %129, %133 : vector<16x16xf32>
    %135 = vector.extract_strided_slice %72 {offsets = [0, 24], sizes = [16, 8], strides = [1, 1]} : vector<16x32xf32> to vector<16x8xf32>
    %cst_52 = arith.constant dense<0.000000e+00> : vector<16x8xf32>
    %136 = tpu.matmul %134, %135, %cst_52 {dimension_numbers = #tpu.dot_dimension_numbers<[1], [0], [0], [1], [0, 0, 1, 1], [], []>} : vector<16x16xf32>, vector<16x8xf32>, vector<16x8xf32> -> vector<16x8xf32>
    %137 = tpu.concatenate %88, %104, %120, %136 in 1 : vector<16x8xf32>, vector<16x8xf32>, vector<16x8xf32>, vector<16x8xf32> -> vector<16x32xf32>
    %c0_53 = arith.constant 0 : index
    %c0_54 = arith.constant 0 : index
    %c0_55 = arith.constant 0 : index
    %138 = vector.load %arg10[%c0_53, %c0_54, %c0_55] : memref<3x32x32xf32, #tpu.memory_space<vmem>>, vector<1x32x32xf32>
    %139 = vector.shape_cast %138 : vector<1x32x32xf32> to vector<32x32xf32>
    %140 = arith.truncf %137 : vector<16x32xf32> to vector<16x32xbf16>
    %141 = arith.truncf %139 : vector<32x32xf32> to vector<32x32xbf16>
    %cst_56 = arith.constant dense<0.000000e+00> : vector<16x32xf32>
    %142 = tpu.matmul %140, %141, %cst_56 {dimension_numbers = #tpu.dot_dimension_numbers<[1], [0], [0], [1], [0, 0, 1, 1], [], []>} : vector<16x32xbf16>, vector<32x32xbf16>, vector<16x32xf32> -> vector<16x32xf32>
    %c0_57 = arith.constant 0 : index
    %c0_58 = arith.constant 0 : index
    %c0_59 = arith.constant 0 : index
    %143 = vector.load %arg11[%c0_57, %c0_58, %c0_59] : memref<3x1x32xf32, #tpu.memory_space<vmem>>, vector<1x1x32xf32>
    %144 = vector.shape_cast %143 : vector<1x1x32xf32> to vector<1x32xf32>
    %145 = vector.broadcast %144 : vector<1x32xf32> to vector<16x32xf32>
    %146 = arith.addf %142, %145 : vector<16x32xf32>
    %147 = arith.addf %30, %146 : vector<16x32xf32>
    %c0_60 = arith.constant 0 : index
    %c0_61 = arith.constant 0 : index
    %c0_62 = arith.constant 0 : index
    %148 = vector.load %arg12[%c0_60, %c0_61, %c0_62] : memref<3x1x32xf32, #tpu.memory_space<vmem>>, vector<1x1x32xf32>
    %149 = vector.shape_cast %148 : vector<1x1x32xf32> to vector<1x32xf32>
    %c0_63 = arith.constant 0 : index
    %c0_64 = arith.constant 0 : index
    %c0_65 = arith.constant 0 : index
    %150 = vector.load %arg13[%c0_63, %c0_64, %c0_65] : memref<3x1x32xf32, #tpu.memory_space<vmem>>, vector<1x1x32xf32>
    %151 = vector.shape_cast %150 : vector<1x1x32xf32> to vector<1x32xf32>
    %cst_66 = arith.constant dense<0.000000e+00> : vector<16xf32>
    %152 = vector.multi_reduction <add>, %147, %cst_66 [1] : vector<16x32xf32> to vector<16xf32>
    %153 = vector.shape_cast %152 : vector<16xf32> to vector<16x1xf32>
    %cst_67 = arith.constant 3.200000e+01 : f32
    %154 = vector.broadcast %cst_67 : f32 to vector<16x1xf32>
    %155 = arith.divf %153, %154 : vector<16x1xf32>
    %156 = vector.broadcast %155 : vector<16x1xf32> to vector<16x32xf32>
    %157 = arith.subf %147, %156 : vector<16x32xf32>
    %158 = arith.mulf %157, %157 : vector<16x32xf32>
    %cst_68 = arith.constant dense<0.000000e+00> : vector<16xf32>
    %159 = vector.multi_reduction <add>, %158, %cst_68 [1] : vector<16x32xf32> to vector<16xf32>
    %160 = vector.shape_cast %159 : vector<16xf32> to vector<16x1xf32>
    %cst_69 = arith.constant 3.200000e+01 : f32
    %161 = vector.broadcast %cst_69 : f32 to vector<16x1xf32>
    %162 = arith.divf %160, %161 : vector<16x1xf32>
    %163 = vector.broadcast %155 : vector<16x1xf32> to vector<16x32xf32>
    %164 = arith.subf %147, %163 : vector<16x32xf32>
    %cst_70 = arith.constant 9.99999974E-6 : f32
    %165 = vector.broadcast %cst_70 : f32 to vector<16x1xf32>
    %166 = arith.addf %162, %165 : vector<16x1xf32>
    %167 = math.rsqrt %166 : vector<16x1xf32>
    %168 = vector.broadcast %167 : vector<16x1xf32> to vector<16x32xf32>
    %169 = arith.mulf %164, %168 : vector<16x32xf32>
    %170 = vector.broadcast %149 : vector<1x32xf32> to vector<16x32xf32>
    %171 = arith.mulf %169, %170 : vector<16x32xf32>
    %172 = vector.broadcast %151 : vector<1x32xf32> to vector<16x32xf32>
    %173 = arith.addf %171, %172 : vector<16x32xf32>
    %c0_71 = arith.constant 0 : index
    %c0_72 = arith.constant 0 : index
    %c0_73 = arith.constant 0 : index
    %174 = vector.load %arg14[%c0_71, %c0_72, %c0_73] : memref<3x32x64xf32, #tpu.memory_space<vmem>>, vector<1x32x64xf32>
    %175 = vector.shape_cast %174 : vector<1x32x64xf32> to vector<32x64xf32>
    %176 = arith.truncf %173 : vector<16x32xf32> to vector<16x32xbf16>
    %177 = arith.truncf %175 : vector<32x64xf32> to vector<32x64xbf16>
    %cst_74 = arith.constant dense<0.000000e+00> : vector<16x64xf32>
    %178 = tpu.matmul %176, %177, %cst_74 {dimension_numbers = #tpu.dot_dimension_numbers<[1], [0], [0], [1], [0, 0, 1, 1], [], []>} : vector<16x32xbf16>, vector<32x64xbf16>, vector<16x64xf32> -> vector<16x64xf32>
    %c0_75 = arith.constant 0 : index
    %c0_76 = arith.constant 0 : index
    %c0_77 = arith.constant 0 : index
    %179 = vector.load %arg15[%c0_75, %c0_76, %c0_77] : memref<3x1x64xf32, #tpu.memory_space<vmem>>, vector<1x1x64xf32>
    %180 = vector.shape_cast %179 : vector<1x1x64xf32> to vector<1x64xf32>
    %181 = vector.broadcast %180 : vector<1x64xf32> to vector<16x64xf32>
    %182 = arith.addf %178, %181 : vector<16x64xf32>
    %cst_78 = arith.constant 1.702000e+00 : f32
    %183 = vector.broadcast %cst_78 : f32 to vector<16x64xf32>
    %184 = arith.mulf %183, %182 : vector<16x64xf32>
    %185 = arith.negf %184 : vector<16x64xf32>
    %186 = math.exp %185 : vector<16x64xf32>
    %cst_79 = arith.constant 1.000000e+00 : f32
    %187 = vector.broadcast %cst_79 : f32 to vector<16x64xf32>
    %188 = arith.addf %187, %186 : vector<16x64xf32>
    %189 = arith.divf %187, %188 : vector<16x64xf32>
    %190 = arith.mulf %182, %189 : vector<16x64xf32>
    %c0_80 = arith.constant 0 : index
    %c0_81 = arith.constant 0 : index
    %c0_82 = arith.constant 0 : index
    %191 = vector.load %arg16[%c0_80, %c0_81, %c0_82] : memref<3x64x32xf32, #tpu.memory_space<vmem>>, vector<1x64x32xf32>
    %192 = vector.shape_cast %191 : vector<1x64x32xf32> to vector<64x32xf32>
    %193 = arith.truncf %190 : vector<16x64xf32> to vector<16x64xbf16>
    %194 = arith.truncf %192 : vector<64x32xf32> to vector<64x32xbf16>
    %cst_83 = arith.constant dense<0.000000e+00> : vector<16x32xf32>
    %195 = tpu.matmul %193, %194, %cst_83 {dimension_numbers = #tpu.dot_dimension_numbers<[1], [0], [0], [1], [0, 0, 1, 1], [], []>} : vector<16x64xbf16>, vector<64x32xbf16>, vector<16x32xf32> -> vector<16x32xf32>
    %c0_84 = arith.constant 0 : index
    %c0_85 = arith.constant 0 : index
    %c0_86 = arith.constant 0 : index
    %196 = vector.load %arg17[%c0_84, %c0_85, %c0_86] : memref<3x1x32xf32, #tpu.memory_space<vmem>>, vector<1x1x32xf32>
    %197 = vector.shape_cast %196 : vector<1x1x32xf32> to vector<1x32xf32>
    %198 = vector.broadcast %197 : vector<1x32xf32> to vector<16x32xf32>
    %199 = arith.addf %195, %198 : vector<16x32xf32>
    %200 = arith.addf %147, %199 : vector<16x32xf32>
    %c1 = arith.constant 1 : index
    %c0_87 = arith.constant 0 : index
    %c0_88 = arith.constant 0 : index
    %201 = vector.load %arg18[%c1, %c0_87, %c0_88] : memref<4x16x32xf32, #tpu.memory_space<vmem>>, vector<1x16x32xf32>
    %202 = vector.shape_cast %201 : vector<1x16x32xf32> to vector<16x32xf32>
    %203 = vector.shape_cast %200 : vector<16x32xf32> to vector<1x16x32xf32>
    tpu.vector_store %arg18[%c1, %c0_87, %c0_88], %203 {strides = array<i32>} : memref<4x16x32xf32, #tpu.memory_space<vmem>>, vector<1x16x32xf32>,
    %c1_89 = arith.constant 1 : index
    %c0_90 = arith.constant 0 : index
    %c0_91 = arith.constant 0 : index
    %204 = vector.load %arg6[%c1_89, %c0_90, %c0_91] : memref<3x1x32xf32, #tpu.memory_space<vmem>>, vector<1x1x32xf32>
    %205 = vector.shape_cast %204 : vector<1x1x32xf32> to vector<1x32xf32>
    %c1_92 = arith.constant 1 : index
    %c0_93 = arith.constant 0 : index
    %c0_94 = arith.constant 0 : index
    %206 = vector.load %arg7[%c1_92, %c0_93, %c0_94] : memref<3x1x32xf32, #tpu.memory_space<vmem>>, vector<1x1x32xf32>
    %207 = vector.shape_cast %206 : vector<1x1x32xf32> to vector<1x32xf32>
    %cst_95 = arith.constant dense<0.000000e+00> : vector<16xf32>
    %208 = vector.multi_reduction <add>, %200, %cst_95 [1] : vector<16x32xf32> to vector<16xf32>
    %209 = vector.shape_cast %208 : vector<16xf32> to vector<16x1xf32>
    %cst_96 = arith.constant 3.200000e+01 : f32
    %210 = vector.broadcast %cst_96 : f32 to vector<16x1xf32>
    %211 = arith.divf %209, %210 : vector<16x1xf32>
    %212 = vector.broadcast %211 : vector<16x1xf32> to vector<16x32xf32>
    %213 = arith.subf %200, %212 : vector<16x32xf32>
    %214 = arith.mulf %213, %213 : vector<16x32xf32>
    %cst_97 = arith.constant dense<0.000000e+00> : vector<16xf32>
    %215 = vector.multi_reduction <add>, %214, %cst_97 [1] : vector<16x32xf32> to vector<16xf32>
    %216 = vector.shape_cast %215 : vector<16xf32> to vector<16x1xf32>
    %cst_98 = arith.constant 3.200000e+01 : f32
    %217 = vector.broadcast %cst_98 : f32 to vector<16x1xf32>
    %218 = arith.divf %216, %217 : vector<16x1xf32>
    %219 = vector.broadcast %211 : vector<16x1xf32> to vector<16x32xf32>
    %220 = arith.subf %200, %219 : vector<16x32xf32>
    %cst_99 = arith.constant 9.99999974E-6 : f32
    %221 = vector.broadcast %cst_99 : f32 to vector<16x1xf32>
    %222 = arith.addf %218, %221 : vector<16x1xf32>
    %223 = math.rsqrt %222 : vector<16x1xf32>
    %224 = vector.broadcast %223 : vector<16x1xf32> to vector<16x32xf32>
    %225 = arith.mulf %220, %224 : vector<16x32xf32>
    %226 = vector.broadcast %205 : vector<1x32xf32> to vector<16x32xf32>
    %227 = arith.mulf %225, %226 : vector<16x32xf32>
    %228 = vector.broadcast %207 : vector<1x32xf32> to vector<16x32xf32>
    %229 = arith.addf %227, %228 : vector<16x32xf32>
    %c1_100 = arith.constant 1 : index
    %c0_101 = arith.constant 0 : index
    %c0_102 = arith.constant 0 : index
    %230 = vector.load %arg8[%c1_100, %c0_101, %c0_102] : memref<3x32x96xf32, #tpu.memory_space<vmem>>, vector<1x32x96xf32>
    %231 = vector.shape_cast %230 : vector<1x32x96xf32> to vector<32x96xf32>
    %232 = arith.truncf %229 : vector<16x32xf32> to vector<16x32xbf16>
    %233 = arith.truncf %231 : vector<32x96xf32> to vector<32x96xbf16>
    %cst_103 = arith.constant dense<0.000000e+00> : vector<16x96xf32>
    %234 = tpu.matmul %232, %233, %cst_103 {dimension_numbers = #tpu.dot_dimension_numbers<[1], [0], [0], [1], [0, 0, 1, 1], [], []>} : vector<16x32xbf16>, vector<32x96xbf16>, vector<16x96xf32> -> vector<16x96xf32>
    %c1_104 = arith.constant 1 : index
    %c0_105 = arith.constant 0 : index
    %c0_106 = arith.constant 0 : index
    %235 = vector.load %arg9[%c1_104, %c0_105, %c0_106] : memref<3x1x96xf32, #tpu.memory_space<vmem>>, vector<1x1x96xf32>
    %236 = vector.shape_cast %235 : vector<1x1x96xf32> to vector<1x96xf32>
    %237 = vector.broadcast %236 : vector<1x96xf32> to vector<16x96xf32>
    %238 = arith.addf %234, %237 : vector<16x96xf32>
    %239 = vector.extract_strided_slice %238 {offsets = [0, 0], sizes = [16, 32], strides = [1, 1]} : vector<16x96xf32> to vector<16x32xf32>
    %240 = vector.extract_strided_slice %238 {offsets = [0, 32], sizes = [16, 32], strides = [1, 1]} : vector<16x96xf32> to vector<16x32xf32>
    %241 = vector.extract_strided_slice %238 {offsets = [0, 64], sizes = [16, 32], strides = [1, 1]} : vector<16x96xf32> to vector<16x32xf32>
    %242 = vector.extract_strided_slice %239 {offsets = [0, 0], sizes = [16, 8], strides = [1, 1]} : vector<16x32xf32> to vector<16x8xf32>
    %243 = vector.extract_strided_slice %240 {offsets = [0, 0], sizes = [16, 8], strides = [1, 1]} : vector<16x32xf32> to vector<16x8xf32>
    %cst_107 = arith.constant dense<0.000000e+00> : vector<16x16xf32>
    %244 = tpu.matmul %242, %243, %cst_107 {dimension_numbers = #tpu.dot_dimension_numbers<[1], [1], [0], [0], [0, 0, 1, 0], [], []>} : vector<16x8xf32>, vector<16x8xf32>, vector<16x16xf32> -> vector<16x16xf32>
    %245 = arith.addf %244, %34 : vector<16x16xf32>
    %cst_108 = arith.constant dense<0xFF800000> : vector<16xf32>
    %246 = vector.multi_reduction <maximumf>, %245, %cst_108 [1] : vector<16x16xf32> to vector<16xf32>
    %247 = vector.shape_cast %246 : vector<16xf32> to vector<16x1xf32>
    %248 = vector.broadcast %247 : vector<16x1xf32> to vector<16x16xf32>
    %249 = arith.subf %245, %248 : vector<16x16xf32>
    %250 = math.exp %249 : vector<16x16xf32>
    %cst_109 = arith.constant dense<0.000000e+00> : vector<16xf32>
    %251 = vector.multi_reduction <add>, %250, %cst_109 [1] : vector<16x16xf32> to vector<16xf32>
    %252 = vector.shape_cast %251 : vector<16xf32> to vector<16x1xf32>
    %253 = tpu.reciprocal %252 {approx = true} : vector<16x1xf32> -> vector<16x1xf32>
    %254 = vector.broadcast %253 : vector<16x1xf32> to vector<16x16xf32>
    %255 = arith.mulf %250, %254 : vector<16x16xf32>
    %256 = vector.extract_strided_slice %241 {offsets = [0, 0], sizes = [16, 8], strides = [1, 1]} : vector<16x32xf32> to vector<16x8xf32>
    %cst_110 = arith.constant dense<0.000000e+00> : vector<16x8xf32>
    %257 = tpu.matmul %255, %256, %cst_110 {dimension_numbers = #tpu.dot_dimension_numbers<[1], [0], [0], [1], [0, 0, 1, 1], [], []>} : vector<16x16xf32>, vector<16x8xf32>, vector<16x8xf32> -> vector<16x8xf32>
    %258 = vector.extract_strided_slice %239 {offsets = [0, 8], sizes = [16, 8], strides = [1, 1]} : vector<16x32xf32> to vector<16x8xf32>
    %259 = vector.extract_strided_slice %240 {offsets = [0, 8], sizes = [16, 8], strides = [1, 1]} : vector<16x32xf32> to vector<16x8xf32>
    %cst_111 = arith.constant dense<0.000000e+00> : vector<16x16xf32>
    %260 = tpu.matmul %258, %259, %cst_111 {dimension_numbers = #tpu.dot_dimension_numbers<[1], [1], [0], [0], [0, 0, 1, 0], [], []>} : vector<16x8xf32>, vector<16x8xf32>, vector<16x16xf32> -> vector<16x16xf32>
    %261 = arith.addf %260, %34 : vector<16x16xf32>
    %cst_112 = arith.constant dense<0xFF800000> : vector<16xf32>
    %262 = vector.multi_reduction <maximumf>, %261, %cst_112 [1] : vector<16x16xf32> to vector<16xf32>
    %263 = vector.shape_cast %262 : vector<16xf32> to vector<16x1xf32>
    %264 = vector.broadcast %263 : vector<16x1xf32> to vector<16x16xf32>
    %265 = arith.subf %261, %264 : vector<16x16xf32>
    %266 = math.exp %265 : vector<16x16xf32>
    %cst_113 = arith.constant dense<0.000000e+00> : vector<16xf32>
    %267 = vector.multi_reduction <add>, %266, %cst_113 [1] : vector<16x16xf32> to vector<16xf32>
    %268 = vector.shape_cast %267 : vector<16xf32> to vector<16x1xf32>
    %269 = tpu.reciprocal %268 {approx = true} : vector<16x1xf32> -> vector<16x1xf32>
    %270 = vector.broadcast %269 : vector<16x1xf32> to vector<16x16xf32>
    %271 = arith.mulf %266, %270 : vector<16x16xf32>
    %272 = vector.extract_strided_slice %241 {offsets = [0, 8], sizes = [16, 8], strides = [1, 1]} : vector<16x32xf32> to vector<16x8xf32>
    %cst_114 = arith.constant dense<0.000000e+00> : vector<16x8xf32>
    %273 = tpu.matmul %271, %272, %cst_114 {dimension_numbers = #tpu.dot_dimension_numbers<[1], [0], [0], [1], [0, 0, 1, 1], [], []>} : vector<16x16xf32>, vector<16x8xf32>, vector<16x8xf32> -> vector<16x8xf32>
    %274 = vector.extract_strided_slice %239 {offsets = [0, 16], sizes = [16, 8], strides = [1, 1]} : vector<16x32xf32> to vector<16x8xf32>
    %275 = vector.extract_strided_slice %240 {offsets = [0, 16], sizes = [16, 8], strides = [1, 1]} : vector<16x32xf32> to vector<16x8xf32>
    %cst_115 = arith.constant dense<0.000000e+00> : vector<16x16xf32>
    %276 = tpu.matmul %274, %275, %cst_115 {dimension_numbers = #tpu.dot_dimension_numbers<[1], [1], [0], [0], [0, 0, 1, 0], [], []>} : vector<16x8xf32>, vector<16x8xf32>, vector<16x16xf32> -> vector<16x16xf32>
    %277 = arith.addf %276, %34 : vector<16x16xf32>
    %cst_116 = arith.constant dense<0xFF800000> : vector<16xf32>
    %278 = vector.multi_reduction <maximumf>, %277, %cst_116 [1] : vector<16x16xf32> to vector<16xf32>
    %279 = vector.shape_cast %278 : vector<16xf32> to vector<16x1xf32>
    %280 = vector.broadcast %279 : vector<16x1xf32> to vector<16x16xf32>
    %281 = arith.subf %277, %280 : vector<16x16xf32>
    %282 = math.exp %281 : vector<16x16xf32>
    %cst_117 = arith.constant dense<0.000000e+00> : vector<16xf32>
    %283 = vector.multi_reduction <add>, %282, %cst_117 [1] : vector<16x16xf32> to vector<16xf32>
    %284 = vector.shape_cast %283 : vector<16xf32> to vector<16x1xf32>
    %285 = tpu.reciprocal %284 {approx = true} : vector<16x1xf32> -> vector<16x1xf32>
    %286 = vector.broadcast %285 : vector<16x1xf32> to vector<16x16xf32>
    %287 = arith.mulf %282, %286 : vector<16x16xf32>
    %288 = vector.extract_strided_slice %241 {offsets = [0, 16], sizes = [16, 8], strides = [1, 1]} : vector<16x32xf32> to vector<16x8xf32>
    %cst_118 = arith.constant dense<0.000000e+00> : vector<16x8xf32>
    %289 = tpu.matmul %287, %288, %cst_118 {dimension_numbers = #tpu.dot_dimension_numbers<[1], [0], [0], [1], [0, 0, 1, 1], [], []>} : vector<16x16xf32>, vector<16x8xf32>, vector<16x8xf32> -> vector<16x8xf32>
    %290 = vector.extract_strided_slice %239 {offsets = [0, 24], sizes = [16, 8], strides = [1, 1]} : vector<16x32xf32> to vector<16x8xf32>
    %291 = vector.extract_strided_slice %240 {offsets = [0, 24], sizes = [16, 8], strides = [1, 1]} : vector<16x32xf32> to vector<16x8xf32>
    %cst_119 = arith.constant dense<0.000000e+00> : vector<16x16xf32>
    %292 = tpu.matmul %290, %291, %cst_119 {dimension_numbers = #tpu.dot_dimension_numbers<[1], [1], [0], [0], [0, 0, 1, 0], [], []>} : vector<16x8xf32>, vector<16x8xf32>, vector<16x16xf32> -> vector<16x16xf32>
    %293 = arith.addf %292, %34 : vector<16x16xf32>
    %cst_120 = arith.constant dense<0xFF800000> : vector<16xf32>
    %294 = vector.multi_reduction <maximumf>, %293, %cst_120 [1] : vector<16x16xf32> to vector<16xf32>
    %295 = vector.shape_cast %294 : vector<16xf32> to vector<16x1xf32>
    %296 = vector.broadcast %295 : vector<16x1xf32> to vector<16x16xf32>
    %297 = arith.subf %293, %296 : vector<16x16xf32>
    %298 = math.exp %297 : vector<16x16xf32>
    %cst_121 = arith.constant dense<0.000000e+00> : vector<16xf32>
    %299 = vector.multi_reduction <add>, %298, %cst_121 [1] : vector<16x16xf32> to vector<16xf32>
    %300 = vector.shape_cast %299 : vector<16xf32> to vector<16x1xf32>
    %301 = tpu.reciprocal %300 {approx = true} : vector<16x1xf32> -> vector<16x1xf32>
    %302 = vector.broadcast %301 : vector<16x1xf32> to vector<16x16xf32>
    %303 = arith.mulf %298, %302 : vector<16x16xf32>
    %304 = vector.extract_strided_slice %241 {offsets = [0, 24], sizes = [16, 8], strides = [1, 1]} : vector<16x32xf32> to vector<16x8xf32>
    %cst_122 = arith.constant dense<0.000000e+00> : vector<16x8xf32>
    %305 = tpu.matmul %303, %304, %cst_122 {dimension_numbers = #tpu.dot_dimension_numbers<[1], [0], [0], [1], [0, 0, 1, 1], [], []>} : vector<16x16xf32>, vector<16x8xf32>, vector<16x8xf32> -> vector<16x8xf32>
    %306 = tpu.concatenate %257, %273, %289, %305 in 1 : vector<16x8xf32>, vector<16x8xf32>, vector<16x8xf32>, vector<16x8xf32> -> vector<16x32xf32>
    %c1_123 = arith.constant 1 : index
    %c0_124 = arith.constant 0 : index
    %c0_125 = arith.constant 0 : index
    %307 = vector.load %arg10[%c1_123, %c0_124, %c0_125] : memref<3x32x32xf32, #tpu.memory_space<vmem>>, vector<1x32x32xf32>
    %308 = vector.shape_cast %307 : vector<1x32x32xf32> to vector<32x32xf32>
    %309 = arith.truncf %306 : vector<16x32xf32> to vector<16x32xbf16>
    %310 = arith.truncf %308 : vector<32x32xf32> to vector<32x32xbf16>
    %cst_126 = arith.constant dense<0.000000e+00> : vector<16x32xf32>
    %311 = tpu.matmul %309, %310, %cst_126 {dimension_numbers = #tpu.dot_dimension_numbers<[1], [0], [0], [1], [0, 0, 1, 1], [], []>} : vector<16x32xbf16>, vector<32x32xbf16>, vector<16x32xf32> -> vector<16x32xf32>
    %c1_127 = arith.constant 1 : index
    %c0_128 = arith.constant 0 : index
    %c0_129 = arith.constant 0 : index
    %312 = vector.load %arg11[%c1_127, %c0_128, %c0_129] : memref<3x1x32xf32, #tpu.memory_space<vmem>>, vector<1x1x32xf32>
    %313 = vector.shape_cast %312 : vector<1x1x32xf32> to vector<1x32xf32>
    %314 = vector.broadcast %313 : vector<1x32xf32> to vector<16x32xf32>
    %315 = arith.addf %311, %314 : vector<16x32xf32>
    %316 = arith.addf %200, %315 : vector<16x32xf32>
    %c1_130 = arith.constant 1 : index
    %c0_131 = arith.constant 0 : index
    %c0_132 = arith.constant 0 : index
    %317 = vector.load %arg12[%c1_130, %c0_131, %c0_132] : memref<3x1x32xf32, #tpu.memory_space<vmem>>, vector<1x1x32xf32>
    %318 = vector.shape_cast %317 : vector<1x1x32xf32> to vector<1x32xf32>
    %c1_133 = arith.constant 1 : index
    %c0_134 = arith.constant 0 : index
    %c0_135 = arith.constant 0 : index
    %319 = vector.load %arg13[%c1_133, %c0_134, %c0_135] : memref<3x1x32xf32, #tpu.memory_space<vmem>>, vector<1x1x32xf32>
    %320 = vector.shape_cast %319 : vector<1x1x32xf32> to vector<1x32xf32>
    %cst_136 = arith.constant dense<0.000000e+00> : vector<16xf32>
    %321 = vector.multi_reduction <add>, %316, %cst_136 [1] : vector<16x32xf32> to vector<16xf32>
    %322 = vector.shape_cast %321 : vector<16xf32> to vector<16x1xf32>
    %cst_137 = arith.constant 3.200000e+01 : f32
    %323 = vector.broadcast %cst_137 : f32 to vector<16x1xf32>
    %324 = arith.divf %322, %323 : vector<16x1xf32>
    %325 = vector.broadcast %324 : vector<16x1xf32> to vector<16x32xf32>
    %326 = arith.subf %316, %325 : vector<16x32xf32>
    %327 = arith.mulf %326, %326 : vector<16x32xf32>
    %cst_138 = arith.constant dense<0.000000e+00> : vector<16xf32>
    %328 = vector.multi_reduction <add>, %327, %cst_138 [1] : vector<16x32xf32> to vector<16xf32>
    %329 = vector.shape_cast %328 : vector<16xf32> to vector<16x1xf32>
    %cst_139 = arith.constant 3.200000e+01 : f32
    %330 = vector.broadcast %cst_139 : f32 to vector<16x1xf32>
    %331 = arith.divf %329, %330 : vector<16x1xf32>
    %332 = vector.broadcast %324 : vector<16x1xf32> to vector<16x32xf32>
    %333 = arith.subf %316, %332 : vector<16x32xf32>
    %cst_140 = arith.constant 9.99999974E-6 : f32
    %334 = vector.broadcast %cst_140 : f32 to vector<16x1xf32>
    %335 = arith.addf %331, %334 : vector<16x1xf32>
    %336 = math.rsqrt %335 : vector<16x1xf32>
    %337 = vector.broadcast %336 : vector<16x1xf32> to vector<16x32xf32>
    %338 = arith.mulf %333, %337 : vector<16x32xf32>
    %339 = vector.broadcast %318 : vector<1x32xf32> to vector<16x32xf32>
    %340 = arith.mulf %338, %339 : vector<16x32xf32>
    %341 = vector.broadcast %320 : vector<1x32xf32> to vector<16x32xf32>
    %342 = arith.addf %340, %341 : vector<16x32xf32>
    %c1_141 = arith.constant 1 : index
    %c0_142 = arith.constant 0 : index
    %c0_143 = arith.constant 0 : index
    %343 = vector.load %arg14[%c1_141, %c0_142, %c0_143] : memref<3x32x64xf32, #tpu.memory_space<vmem>>, vector<1x32x64xf32>
    %344 = vector.shape_cast %343 : vector<1x32x64xf32> to vector<32x64xf32>
    %345 = arith.truncf %342 : vector<16x32xf32> to vector<16x32xbf16>
    %346 = arith.truncf %344 : vector<32x64xf32> to vector<32x64xbf16>
    %cst_144 = arith.constant dense<0.000000e+00> : vector<16x64xf32>
    %347 = tpu.matmul %345, %346, %cst_144 {dimension_numbers = #tpu.dot_dimension_numbers<[1], [0], [0], [1], [0, 0, 1, 1], [], []>} : vector<16x32xbf16>, vector<32x64xbf16>, vector<16x64xf32> -> vector<16x64xf32>
    %c1_145 = arith.constant 1 : index
    %c0_146 = arith.constant 0 : index
    %c0_147 = arith.constant 0 : index
    %348 = vector.load %arg15[%c1_145, %c0_146, %c0_147] : memref<3x1x64xf32, #tpu.memory_space<vmem>>, vector<1x1x64xf32>
    %349 = vector.shape_cast %348 : vector<1x1x64xf32> to vector<1x64xf32>
    %350 = vector.broadcast %349 : vector<1x64xf32> to vector<16x64xf32>
    %351 = arith.addf %347, %350 : vector<16x64xf32>
    %cst_148 = arith.constant 1.702000e+00 : f32
    %352 = vector.broadcast %cst_148 : f32 to vector<16x64xf32>
    %353 = arith.mulf %352, %351 : vector<16x64xf32>
    %354 = arith.negf %353 : vector<16x64xf32>
    %355 = math.exp %354 : vector<16x64xf32>
    %cst_149 = arith.constant 1.000000e+00 : f32
    %356 = vector.broadcast %cst_149 : f32 to vector<16x64xf32>
    %357 = arith.addf %356, %355 : vector<16x64xf32>
    %358 = arith.divf %356, %357 : vector<16x64xf32>
    %359 = arith.mulf %351, %358 : vector<16x64xf32>
    %c1_150 = arith.constant 1 : index
    %c0_151 = arith.constant 0 : index
    %c0_152 = arith.constant 0 : index
    %360 = vector.load %arg16[%c1_150, %c0_151, %c0_152] : memref<3x64x32xf32, #tpu.memory_space<vmem>>, vector<1x64x32xf32>
    %361 = vector.shape_cast %360 : vector<1x64x32xf32> to vector<64x32xf32>
    %362 = arith.truncf %359 : vector<16x64xf32> to vector<16x64xbf16>
    %363 = arith.truncf %361 : vector<64x32xf32> to vector<64x32xbf16>
    %cst_153 = arith.constant dense<0.000000e+00> : vector<16x32xf32>
    %364 = tpu.matmul %362, %363, %cst_153 {dimension_numbers = #tpu.dot_dimension_numbers<[1], [0], [0], [1], [0, 0, 1, 1], [], []>} : vector<16x64xbf16>, vector<64x32xbf16>, vector<16x32xf32> -> vector<16x32xf32>
    %c1_154 = arith.constant 1 : index
    %c0_155 = arith.constant 0 : index
    %c0_156 = arith.constant 0 : index
    %365 = vector.load %arg17[%c1_154, %c0_155, %c0_156] : memref<3x1x32xf32, #tpu.memory_space<vmem>>, vector<1x1x32xf32>
    %366 = vector.shape_cast %365 : vector<1x1x32xf32> to vector<1x32xf32>
    %367 = vector.broadcast %366 : vector<1x32xf32> to vector<16x32xf32>
    %368 = arith.addf %364, %367 : vector<16x32xf32>
    %369 = arith.addf %316, %368 : vector<16x32xf32>
    %c2 = arith.constant 2 : index
    %c0_157 = arith.constant 0 : index
    %c0_158 = arith.constant 0 : index
    %370 = vector.load %arg18[%c2, %c0_157, %c0_158] : memref<4x16x32xf32, #tpu.memory_space<vmem>>, vector<1x16x32xf32>
    %371 = vector.shape_cast %370 : vector<1x16x32xf32> to vector<16x32xf32>
    %372 = vector.shape_cast %369 : vector<16x32xf32> to vector<1x16x32xf32>
    tpu.vector_store %arg18[%c2, %c0_157, %c0_158], %372 {strides = array<i32>} : memref<4x16x32xf32, #tpu.memory_space<vmem>>, vector<1x16x32xf32>,
    %c2_159 = arith.constant 2 : index
    %c0_160 = arith.constant 0 : index
    %c0_161 = arith.constant 0 : index
    %373 = vector.load %arg6[%c2_159, %c0_160, %c0_161] : memref<3x1x32xf32, #tpu.memory_space<vmem>>, vector<1x1x32xf32>
    %374 = vector.shape_cast %373 : vector<1x1x32xf32> to vector<1x32xf32>
    %c2_162 = arith.constant 2 : index
    %c0_163 = arith.constant 0 : index
    %c0_164 = arith.constant 0 : index
    %375 = vector.load %arg7[%c2_162, %c0_163, %c0_164] : memref<3x1x32xf32, #tpu.memory_space<vmem>>, vector<1x1x32xf32>
    %376 = vector.shape_cast %375 : vector<1x1x32xf32> to vector<1x32xf32>
    %cst_165 = arith.constant dense<0.000000e+00> : vector<16xf32>
    %377 = vector.multi_reduction <add>, %369, %cst_165 [1] : vector<16x32xf32> to vector<16xf32>
    %378 = vector.shape_cast %377 : vector<16xf32> to vector<16x1xf32>
    %cst_166 = arith.constant 3.200000e+01 : f32
    %379 = vector.broadcast %cst_166 : f32 to vector<16x1xf32>
    %380 = arith.divf %378, %379 : vector<16x1xf32>
    %381 = vector.broadcast %380 : vector<16x1xf32> to vector<16x32xf32>
    %382 = arith.subf %369, %381 : vector<16x32xf32>
    %383 = arith.mulf %382, %382 : vector<16x32xf32>
    %cst_167 = arith.constant dense<0.000000e+00> : vector<16xf32>
    %384 = vector.multi_reduction <add>, %383, %cst_167 [1] : vector<16x32xf32> to vector<16xf32>
    %385 = vector.shape_cast %384 : vector<16xf32> to vector<16x1xf32>
    %cst_168 = arith.constant 3.200000e+01 : f32
    %386 = vector.broadcast %cst_168 : f32 to vector<16x1xf32>
    %387 = arith.divf %385, %386 : vector<16x1xf32>
    %388 = vector.broadcast %380 : vector<16x1xf32> to vector<16x32xf32>
    %389 = arith.subf %369, %388 : vector<16x32xf32>
    %cst_169 = arith.constant 9.99999974E-6 : f32
    %390 = vector.broadcast %cst_169 : f32 to vector<16x1xf32>
    %391 = arith.addf %387, %390 : vector<16x1xf32>
    %392 = math.rsqrt %391 : vector<16x1xf32>
    %393 = vector.broadcast %392 : vector<16x1xf32> to vector<16x32xf32>
    %394 = arith.mulf %389, %393 : vector<16x32xf32>
    %395 = vector.broadcast %374 : vector<1x32xf32> to vector<16x32xf32>
    %396 = arith.mulf %394, %395 : vector<16x32xf32>
    %397 = vector.broadcast %376 : vector<1x32xf32> to vector<16x32xf32>
    %398 = arith.addf %396, %397 : vector<16x32xf32>
    %c2_170 = arith.constant 2 : index
    %c0_171 = arith.constant 0 : index
    %c0_172 = arith.constant 0 : index
    %399 = vector.load %arg8[%c2_170, %c0_171, %c0_172] : memref<3x32x96xf32, #tpu.memory_space<vmem>>, vector<1x32x96xf32>
    %400 = vector.shape_cast %399 : vector<1x32x96xf32> to vector<32x96xf32>
    %401 = arith.truncf %398 : vector<16x32xf32> to vector<16x32xbf16>
    %402 = arith.truncf %400 : vector<32x96xf32> to vector<32x96xbf16>
    %cst_173 = arith.constant dense<0.000000e+00> : vector<16x96xf32>
    %403 = tpu.matmul %401, %402, %cst_173 {dimension_numbers = #tpu.dot_dimension_numbers<[1], [0], [0], [1], [0, 0, 1, 1], [], []>} : vector<16x32xbf16>, vector<32x96xbf16>, vector<16x96xf32> -> vector<16x96xf32>
    %c2_174 = arith.constant 2 : index
    %c0_175 = arith.constant 0 : index
    %c0_176 = arith.constant 0 : index
    %404 = vector.load %arg9[%c2_174, %c0_175, %c0_176] : memref<3x1x96xf32, #tpu.memory_space<vmem>>, vector<1x1x96xf32>
    %405 = vector.shape_cast %404 : vector<1x1x96xf32> to vector<1x96xf32>
    %406 = vector.broadcast %405 : vector<1x96xf32> to vector<16x96xf32>
    %407 = arith.addf %403, %406 : vector<16x96xf32>
    %408 = vector.extract_strided_slice %407 {offsets = [0, 0], sizes = [16, 32], strides = [1, 1]} : vector<16x96xf32> to vector<16x32xf32>
    %409 = vector.extract_strided_slice %407 {offsets = [0, 32], sizes = [16, 32], strides = [1, 1]} : vector<16x96xf32> to vector<16x32xf32>
    %410 = vector.extract_strided_slice %407 {offsets = [0, 64], sizes = [16, 32], strides = [1, 1]} : vector<16x96xf32> to vector<16x32xf32>
    %411 = vector.extract_strided_slice %408 {offsets = [0, 0], sizes = [16, 8], strides = [1, 1]} : vector<16x32xf32> to vector<16x8xf32>
    %412 = vector.extract_strided_slice %409 {offsets = [0, 0], sizes = [16, 8], strides = [1, 1]} : vector<16x32xf32> to vector<16x8xf32>
    %cst_177 = arith.constant dense<0.000000e+00> : vector<16x16xf32>
    %413 = tpu.matmul %411, %412, %cst_177 {dimension_numbers = #tpu.dot_dimension_numbers<[1], [1], [0], [0], [0, 0, 1, 0], [], []>} : vector<16x8xf32>, vector<16x8xf32>, vector<16x16xf32> -> vector<16x16xf32>
    %414 = arith.addf %413, %34 : vector<16x16xf32>
    %cst_178 = arith.constant dense<0xFF800000> : vector<16xf32>
    %415 = vector.multi_reduction <maximumf>, %414, %cst_178 [1] : vector<16x16xf32> to vector<16xf32>
    %416 = vector.shape_cast %415 : vector<16xf32> to vector<16x1xf32>
    %417 = vector.broadcast %416 : vector<16x1xf32> to vector<16x16xf32>
    %418 = arith.subf %414, %417 : vector<16x16xf32>
    %419 = math.exp %418 : vector<16x16xf32>
    %cst_179 = arith.constant dense<0.000000e+00> : vector<16xf32>
    %420 = vector.multi_reduction <add>, %419, %cst_179 [1] : vector<16x16xf32> to vector<16xf32>
    %421 = vector.shape_cast %420 : vector<16xf32> to vector<16x1xf32>
    %422 = tpu.reciprocal %421 {approx = true} : vector<16x1xf32> -> vector<16x1xf32>
    %423 = vector.broadcast %422 : vector<16x1xf32> to vector<16x16xf32>
    %424 = arith.mulf %419, %423 : vector<16x16xf32>
    %425 = vector.extract_strided_slice %410 {offsets = [0, 0], sizes = [16, 8], strides = [1, 1]} : vector<16x32xf32> to vector<16x8xf32>
    %cst_180 = arith.constant dense<0.000000e+00> : vector<16x8xf32>
    %426 = tpu.matmul %424, %425, %cst_180 {dimension_numbers = #tpu.dot_dimension_numbers<[1], [0], [0], [1], [0, 0, 1, 1], [], []>} : vector<16x16xf32>, vector<16x8xf32>, vector<16x8xf32> -> vector<16x8xf32>
    %427 = vector.extract_strided_slice %408 {offsets = [0, 8], sizes = [16, 8], strides = [1, 1]} : vector<16x32xf32> to vector<16x8xf32>
    %428 = vector.extract_strided_slice %409 {offsets = [0, 8], sizes = [16, 8], strides = [1, 1]} : vector<16x32xf32> to vector<16x8xf32>
    %cst_181 = arith.constant dense<0.000000e+00> : vector<16x16xf32>
    %429 = tpu.matmul %427, %428, %cst_181 {dimension_numbers = #tpu.dot_dimension_numbers<[1], [1], [0], [0], [0, 0, 1, 0], [], []>} : vector<16x8xf32>, vector<16x8xf32>, vector<16x16xf32> -> vector<16x16xf32>
    %430 = arith.addf %429, %34 : vector<16x16xf32>
    %cst_182 = arith.constant dense<0xFF800000> : vector<16xf32>
    %431 = vector.multi_reduction <maximumf>, %430, %cst_182 [1] : vector<16x16xf32> to vector<16xf32>
    %432 = vector.shape_cast %431 : vector<16xf32> to vector<16x1xf32>
    %433 = vector.broadcast %432 : vector<16x1xf32> to vector<16x16xf32>
    %434 = arith.subf %430, %433 : vector<16x16xf32>
    %435 = math.exp %434 : vector<16x16xf32>
    %cst_183 = arith.constant dense<0.000000e+00> : vector<16xf32>
    %436 = vector.multi_reduction <add>, %435, %cst_183 [1] : vector<16x16xf32> to vector<16xf32>
    %437 = vector.shape_cast %436 : vector<16xf32> to vector<16x1xf32>
    %438 = tpu.reciprocal %437 {approx = true} : vector<16x1xf32> -> vector<16x1xf32>
    %439 = vector.broadcast %438 : vector<16x1xf32> to vector<16x16xf32>
    %440 = arith.mulf %435, %439 : vector<16x16xf32>
    %441 = vector.extract_strided_slice %410 {offsets = [0, 8], sizes = [16, 8], strides = [1, 1]} : vector<16x32xf32> to vector<16x8xf32>
    %cst_184 = arith.constant dense<0.000000e+00> : vector<16x8xf32>
    %442 = tpu.matmul %440, %441, %cst_184 {dimension_numbers = #tpu.dot_dimension_numbers<[1], [0], [0], [1], [0, 0, 1, 1], [], []>} : vector<16x16xf32>, vector<16x8xf32>, vector<16x8xf32> -> vector<16x8xf32>
    %443 = vector.extract_strided_slice %408 {offsets = [0, 16], sizes = [16, 8], strides = [1, 1]} : vector<16x32xf32> to vector<16x8xf32>
    %444 = vector.extract_strided_slice %409 {offsets = [0, 16], sizes = [16, 8], strides = [1, 1]} : vector<16x32xf32> to vector<16x8xf32>
    %cst_185 = arith.constant dense<0.000000e+00> : vector<16x16xf32>
    %445 = tpu.matmul %443, %444, %cst_185 {dimension_numbers = #tpu.dot_dimension_numbers<[1], [1], [0], [0], [0, 0, 1, 0], [], []>} : vector<16x8xf32>, vector<16x8xf32>, vector<16x16xf32> -> vector<16x16xf32>
    %446 = arith.addf %445, %34 : vector<16x16xf32>
    %cst_186 = arith.constant dense<0xFF800000> : vector<16xf32>
    %447 = vector.multi_reduction <maximumf>, %446, %cst_186 [1] : vector<16x16xf32> to vector<16xf32>
    %448 = vector.shape_cast %447 : vector<16xf32> to vector<16x1xf32>
    %449 = vector.broadcast %448 : vector<16x1xf32> to vector<16x16xf32>
    %450 = arith.subf %446, %449 : vector<16x16xf32>
    %451 = math.exp %450 : vector<16x16xf32>
    %cst_187 = arith.constant dense<0.000000e+00> : vector<16xf32>
    %452 = vector.multi_reduction <add>, %451, %cst_187 [1] : vector<16x16xf32> to vector<16xf32>
    %453 = vector.shape_cast %452 : vector<16xf32> to vector<16x1xf32>
    %454 = tpu.reciprocal %453 {approx = true} : vector<16x1xf32> -> vector<16x1xf32>
    %455 = vector.broadcast %454 : vector<16x1xf32> to vector<16x16xf32>
    %456 = arith.mulf %451, %455 : vector<16x16xf32>
    %457 = vector.extract_strided_slice %410 {offsets = [0, 16], sizes = [16, 8], strides = [1, 1]} : vector<16x32xf32> to vector<16x8xf32>
    %cst_188 = arith.constant dense<0.000000e+00> : vector<16x8xf32>
    %458 = tpu.matmul %456, %457, %cst_188 {dimension_numbers = #tpu.dot_dimension_numbers<[1], [0], [0], [1], [0, 0, 1, 1], [], []>} : vector<16x16xf32>, vector<16x8xf32>, vector<16x8xf32> -> vector<16x8xf32>
    %459 = vector.extract_strided_slice %408 {offsets = [0, 24], sizes = [16, 8], strides = [1, 1]} : vector<16x32xf32> to vector<16x8xf32>
    %460 = vector.extract_strided_slice %409 {offsets = [0, 24], sizes = [16, 8], strides = [1, 1]} : vector<16x32xf32> to vector<16x8xf32>
    %cst_189 = arith.constant dense<0.000000e+00> : vector<16x16xf32>
    %461 = tpu.matmul %459, %460, %cst_189 {dimension_numbers = #tpu.dot_dimension_numbers<[1], [1], [0], [0], [0, 0, 1, 0], [], []>} : vector<16x8xf32>, vector<16x8xf32>, vector<16x16xf32> -> vector<16x16xf32>
    %462 = arith.addf %461, %34 : vector<16x16xf32>
    %cst_190 = arith.constant dense<0xFF800000> : vector<16xf32>
    %463 = vector.multi_reduction <maximumf>, %462, %cst_190 [1] : vector<16x16xf32> to vector<16xf32>
    %464 = vector.shape_cast %463 : vector<16xf32> to vector<16x1xf32>
    %465 = vector.broadcast %464 : vector<16x1xf32> to vector<16x16xf32>
    %466 = arith.subf %462, %465 : vector<16x16xf32>
    %467 = math.exp %466 : vector<16x16xf32>
    %cst_191 = arith.constant dense<0.000000e+00> : vector<16xf32>
    %468 = vector.multi_reduction <add>, %467, %cst_191 [1] : vector<16x16xf32> to vector<16xf32>
    %469 = vector.shape_cast %468 : vector<16xf32> to vector<16x1xf32>
    %470 = tpu.reciprocal %469 {approx = true} : vector<16x1xf32> -> vector<16x1xf32>
    %471 = vector.broadcast %470 : vector<16x1xf32> to vector<16x16xf32>
    %472 = arith.mulf %467, %471 : vector<16x16xf32>
    %473 = vector.extract_strided_slice %410 {offsets = [0, 24], sizes = [16, 8], strides = [1, 1]} : vector<16x32xf32> to vector<16x8xf32>
    %cst_192 = arith.constant dense<0.000000e+00> : vector<16x8xf32>
    %474 = tpu.matmul %472, %473, %cst_192 {dimension_numbers = #tpu.dot_dimension_numbers<[1], [0], [0], [1], [0, 0, 1, 1], [], []>} : vector<16x16xf32>, vector<16x8xf32>, vector<16x8xf32> -> vector<16x8xf32>
    %475 = tpu.concatenate %426, %442, %458, %474 in 1 : vector<16x8xf32>, vector<16x8xf32>, vector<16x8xf32>, vector<16x8xf32> -> vector<16x32xf32>
    %c2_193 = arith.constant 2 : index
    %c0_194 = arith.constant 0 : index
    %c0_195 = arith.constant 0 : index
    %476 = vector.load %arg10[%c2_193, %c0_194, %c0_195] : memref<3x32x32xf32, #tpu.memory_space<vmem>>, vector<1x32x32xf32>
    %477 = vector.shape_cast %476 : vector<1x32x32xf32> to vector<32x32xf32>
    %478 = arith.truncf %475 : vector<16x32xf32> to vector<16x32xbf16>
    %479 = arith.truncf %477 : vector<32x32xf32> to vector<32x32xbf16>
    %cst_196 = arith.constant dense<0.000000e+00> : vector<16x32xf32>
    %480 = tpu.matmul %478, %479, %cst_196 {dimension_numbers = #tpu.dot_dimension_numbers<[1], [0], [0], [1], [0, 0, 1, 1], [], []>} : vector<16x32xbf16>, vector<32x32xbf16>, vector<16x32xf32> -> vector<16x32xf32>
    %c2_197 = arith.constant 2 : index
    %c0_198 = arith.constant 0 : index
    %c0_199 = arith.constant 0 : index
    %481 = vector.load %arg11[%c2_197, %c0_198, %c0_199] : memref<3x1x32xf32, #tpu.memory_space<vmem>>, vector<1x1x32xf32>
    %482 = vector.shape_cast %481 : vector<1x1x32xf32> to vector<1x32xf32>
    %483 = vector.broadcast %482 : vector<1x32xf32> to vector<16x32xf32>
    %484 = arith.addf %480, %483 : vector<16x32xf32>
    %485 = arith.addf %369, %484 : vector<16x32xf32>
    %c2_200 = arith.constant 2 : index
    %c0_201 = arith.constant 0 : index
    %c0_202 = arith.constant 0 : index
    %486 = vector.load %arg12[%c2_200, %c0_201, %c0_202] : memref<3x1x32xf32, #tpu.memory_space<vmem>>, vector<1x1x32xf32>
    %487 = vector.shape_cast %486 : vector<1x1x32xf32> to vector<1x32xf32>
    %c2_203 = arith.constant 2 : index
    %c0_204 = arith.constant 0 : index
    %c0_205 = arith.constant 0 : index
    %488 = vector.load %arg13[%c2_203, %c0_204, %c0_205] : memref<3x1x32xf32, #tpu.memory_space<vmem>>, vector<1x1x32xf32>
    %489 = vector.shape_cast %488 : vector<1x1x32xf32> to vector<1x32xf32>
    %cst_206 = arith.constant dense<0.000000e+00> : vector<16xf32>
    %490 = vector.multi_reduction <add>, %485, %cst_206 [1] : vector<16x32xf32> to vector<16xf32>
    %491 = vector.shape_cast %490 : vector<16xf32> to vector<16x1xf32>
    %cst_207 = arith.constant 3.200000e+01 : f32
    %492 = vector.broadcast %cst_207 : f32 to vector<16x1xf32>
    %493 = arith.divf %491, %492 : vector<16x1xf32>
    %494 = vector.broadcast %493 : vector<16x1xf32> to vector<16x32xf32>
    %495 = arith.subf %485, %494 : vector<16x32xf32>
    %496 = arith.mulf %495, %495 : vector<16x32xf32>
    %cst_208 = arith.constant dense<0.000000e+00> : vector<16xf32>
    %497 = vector.multi_reduction <add>, %496, %cst_208 [1] : vector<16x32xf32> to vector<16xf32>
    %498 = vector.shape_cast %497 : vector<16xf32> to vector<16x1xf32>
    %cst_209 = arith.constant 3.200000e+01 : f32
    %499 = vector.broadcast %cst_209 : f32 to vector<16x1xf32>
    %500 = arith.divf %498, %499 : vector<16x1xf32>
    %501 = vector.broadcast %493 : vector<16x1xf32> to vector<16x32xf32>
    %502 = arith.subf %485, %501 : vector<16x32xf32>
    %cst_210 = arith.constant 9.99999974E-6 : f32
    %503 = vector.broadcast %cst_210 : f32 to vector<16x1xf32>
    %504 = arith.addf %500, %503 : vector<16x1xf32>
    %505 = math.rsqrt %504 : vector<16x1xf32>
    %506 = vector.broadcast %505 : vector<16x1xf32> to vector<16x32xf32>
    %507 = arith.mulf %502, %506 : vector<16x32xf32>
    %508 = vector.broadcast %487 : vector<1x32xf32> to vector<16x32xf32>
    %509 = arith.mulf %507, %508 : vector<16x32xf32>
    %510 = vector.broadcast %489 : vector<1x32xf32> to vector<16x32xf32>
    %511 = arith.addf %509, %510 : vector<16x32xf32>
    %c2_211 = arith.constant 2 : index
    %c0_212 = arith.constant 0 : index
    %c0_213 = arith.constant 0 : index
    %512 = vector.load %arg14[%c2_211, %c0_212, %c0_213] : memref<3x32x64xf32, #tpu.memory_space<vmem>>, vector<1x32x64xf32>
    %513 = vector.shape_cast %512 : vector<1x32x64xf32> to vector<32x64xf32>
    %514 = arith.truncf %511 : vector<16x32xf32> to vector<16x32xbf16>
    %515 = arith.truncf %513 : vector<32x64xf32> to vector<32x64xbf16>
    %cst_214 = arith.constant dense<0.000000e+00> : vector<16x64xf32>
    %516 = tpu.matmul %514, %515, %cst_214 {dimension_numbers = #tpu.dot_dimension_numbers<[1], [0], [0], [1], [0, 0, 1, 1], [], []>} : vector<16x32xbf16>, vector<32x64xbf16>, vector<16x64xf32> -> vector<16x64xf32>
    %c2_215 = arith.constant 2 : index
    %c0_216 = arith.constant 0 : index
    %c0_217 = arith.constant 0 : index
    %517 = vector.load %arg15[%c2_215, %c0_216, %c0_217] : memref<3x1x64xf32, #tpu.memory_space<vmem>>, vector<1x1x64xf32>
    %518 = vector.shape_cast %517 : vector<1x1x64xf32> to vector<1x64xf32>
    %519 = vector.broadcast %518 : vector<1x64xf32> to vector<16x64xf32>
    %520 = arith.addf %516, %519 : vector<16x64xf32>
    %cst_218 = arith.constant 1.702000e+00 : f32
    %521 = vector.broadcast %cst_218 : f32 to vector<16x64xf32>
    %522 = arith.mulf %521, %520 : vector<16x64xf32>
    %523 = arith.negf %522 : vector<16x64xf32>
    %524 = math.exp %523 : vector<16x64xf32>
    %cst_219 = arith.constant 1.000000e+00 : f32
    %525 = vector.broadcast %cst_219 : f32 to vector<16x64xf32>
    %526 = arith.addf %525, %524 : vector<16x64xf32>
    %527 = arith.divf %525, %526 : vector<16x64xf32>
    %528 = arith.mulf %520, %527 : vector<16x64xf32>
    %c2_220 = arith.constant 2 : index
    %c0_221 = arith.constant 0 : index
    %c0_222 = arith.constant 0 : index
    %529 = vector.load %arg16[%c2_220, %c0_221, %c0_222] : memref<3x64x32xf32, #tpu.memory_space<vmem>>, vector<1x64x32xf32>
    %530 = vector.shape_cast %529 : vector<1x64x32xf32> to vector<64x32xf32>
    %531 = arith.truncf %528 : vector<16x64xf32> to vector<16x64xbf16>
    %532 = arith.truncf %530 : vector<64x32xf32> to vector<64x32xbf16>
    %cst_223 = arith.constant dense<0.000000e+00> : vector<16x32xf32>
    %533 = tpu.matmul %531, %532, %cst_223 {dimension_numbers = #tpu.dot_dimension_numbers<[1], [0], [0], [1], [0, 0, 1, 1], [], []>} : vector<16x64xbf16>, vector<64x32xbf16>, vector<16x32xf32> -> vector<16x32xf32>
    %c2_224 = arith.constant 2 : index
    %c0_225 = arith.constant 0 : index
    %c0_226 = arith.constant 0 : index
    %534 = vector.load %arg17[%c2_224, %c0_225, %c0_226] : memref<3x1x32xf32, #tpu.memory_space<vmem>>, vector<1x1x32xf32>
    %535 = vector.shape_cast %534 : vector<1x1x32xf32> to vector<1x32xf32>
    %536 = vector.broadcast %535 : vector<1x32xf32> to vector<16x32xf32>
    %537 = arith.addf %533, %536 : vector<16x32xf32>
    %538 = arith.addf %485, %537 : vector<16x32xf32>
    %c3 = arith.constant 3 : index
    %c0_227 = arith.constant 0 : index
    %c0_228 = arith.constant 0 : index
    %539 = vector.load %arg18[%c3, %c0_227, %c0_228] : memref<4x16x32xf32, #tpu.memory_space<vmem>>, vector<1x16x32xf32>
    %540 = vector.shape_cast %539 : vector<1x16x32xf32> to vector<16x32xf32>
    %541 = vector.shape_cast %538 : vector<16x32xf32> to vector<1x16x32xf32>
    tpu.vector_store %arg18[%c3, %c0_227, %c0_228], %541 {strides = array<i32>} : memref<4x16x32xf32, #tpu.memory_space<vmem>>, vector<1x16x32xf32>,
    return
  }
}

</mosaic_0001>

<llo_original>
// kernel: tpu_custom_call.1
$region0: #{tpu_custom_call.1}
  #allocation0 [shape = 'u32[]', space=smem, size = 0x4, offset = 0x4, fixed_abs, tag = 'smem constant byte address 0x4 - core index']
  #allocation1 [shape = 'u32[72,128]{1,0:T(1,128)}', space=vmem, size = 0x9000, scoped, tag = 'internal scratch']
  %s0 = inlined_call_operand.vmem [shape: f32[16,192], index: 0, kind: input, shape index: {}]
  %s1 = inlined_call_operand.vmem [shape: f32[192,32], index: 1, kind: input, shape index: {}]
  %s2 = inlined_call_operand.vmem [shape: f32[16,32], index: 2, kind: input, shape index: {}]
  %s3 = inlined_call_operand.vmem [shape: f32[1,32], index: 3, kind: input, shape index: {}]
  %s4 = inlined_call_operand.vmem [shape: f32[1,32], index: 4, kind: input, shape index: {}]
  %s5 = inlined_call_operand.vmem [shape: f32[16,16], index: 5, kind: input, shape index: {}]
  %s6 = inlined_call_operand.vmem [shape: f32[3,1,32], index: 6, kind: input, shape index: {}]
  %s7 = inlined_call_operand.vmem [shape: f32[3,1,32], index: 7, kind: input, shape index: {}]
  %s8 = inlined_call_operand.vmem [shape: f32[3,32,96], index: 8, kind: input, shape index: {}]
  %s9 = inlined_call_operand.vmem [shape: f32[3,1,96], index: 9, kind: input, shape index: {}]
  %s10 = inlined_call_operand.vmem [shape: f32[3,32,32], index: 10, kind: input, shape index: {}]
  %s11 = inlined_call_operand.vmem [shape: f32[3,1,32], index: 11, kind: input, shape index: {}]
  %s12 = inlined_call_operand.vmem [shape: f32[3,1,32], index: 12, kind: input, shape index: {}]
  %s13 = inlined_call_operand.vmem [shape: f32[3,1,32], index: 13, kind: input, shape index: {}]
  %s14 = inlined_call_operand.vmem [shape: f32[3,32,64], index: 14, kind: input, shape index: {}]
  %s15 = inlined_call_operand.vmem [shape: f32[3,1,64], index: 15, kind: input, shape index: {}]
  %s16 = inlined_call_operand.vmem [shape: f32[3,64,32], index: 16, kind: input, shape index: {}]
  %s17 = inlined_call_operand.vmem [shape: f32[3,1,32], index: 17, kind: input, shape index: {}]
  %s18 = inlined_call_operand.hbm [shape: f32[4,16,32], index: 18, kind: output, shape index: {}]
  %s19 = sld [smem:[#allocation0]]
  $region82: #{tpu_custom_call.1} parent=0
    _
  %s21 = ssub.s32 1, %s19
  %s22 = scalar_select 0, %s21, %s19
  $region1: #{tpu_custom_call.1} parent=0
    #allocation2 [shape = 'u8[32768]{0}', space=vmem, size = 0x8000, scoped, tag = 'output window, operand 0, single buffered']
    #allocation3 [shape = 's32[1]{0}', space=sflag, size = 0x4, scoped, tag = 'scoped memory for tpu_custom_call.1']
    %23 = vsyncpa [#allocation3], 0
    // Predicated region
    $region2: #{tpu_custom_call.1} parent=1 // pred_check
      _
    $region3: #{tpu_custom_call.1} parent=1 // pred_check_branch
      %25 = sbr.rel (0) target = $region5
    $region4: #{tpu_custom_call.1} parent=1 // pred_region
      _
    $region5: #{tpu_custom_call.1} parent=1 // pred_fallthru
      _
    // Predicated region
    $region6: #{tpu_custom_call.1} parent=1 // pred_check
      _
    $region7: #{tpu_custom_call.1} parent=1 // pred_check_branch
      %27 = sbr.rel (0) target = $region9
    $region8: #{tpu_custom_call.1} parent=1 // pred_region
      _
    $region9: #{tpu_custom_call.1} parent=1 // pred_fallthru
      _
    // Predicated region
    $region10: #{tpu_custom_call.1} parent=1 // pred_check
      _
    $region11: #{tpu_custom_call.1} parent=1 // pred_check_branch
      %29 = sbr.rel (0) target = $region13
    $region12: #{tpu_custom_call.1} parent=1 // pred_region
      _
    $region13: #{tpu_custom_call.1} parent=1 // pred_fallthru
      _
    // Predicated region
    $region14: #{tpu_custom_call.1} parent=1 // pred_check
      _
    $region15: #{tpu_custom_call.1} parent=1 // pred_check_branch
      %31 = sbr.rel (0) target = $region17
    $region16: #{tpu_custom_call.1} parent=1 // pred_region
      _
    $region17: #{tpu_custom_call.1} parent=1 // pred_fallthru
      _
    // Predicated region
    $region18: #{tpu_custom_call.1} parent=1 // pred_check
      _
    $region19: #{tpu_custom_call.1} parent=1 // pred_check_branch
      %33 = sbr.rel (0) target = $region21
    $region20: #{tpu_custom_call.1} parent=1 // pred_region
      _
    $region21: #{tpu_custom_call.1} parent=1 // pred_fallthru
      _
    // Predicated region
    $region22: #{tpu_custom_call.1} parent=1 // pred_check
      _
    $region23: #{tpu_custom_call.1} parent=1 // pred_check_branch
      %35 = sbr.rel (0) target = $region25
    $region24: #{tpu_custom_call.1} parent=1 // pred_region
      _
    $region25: #{tpu_custom_call.1} parent=1 // pred_fallthru
      _
    // Predicated region
    $region26: #{tpu_custom_call.1} parent=1 // pred_check
      _
    $region27: #{tpu_custom_call.1} parent=1 // pred_check_branch
      %37 = sbr.rel (0) target = $region29
    $region28: #{tpu_custom_call.1} parent=1 // pred_region
      _
    $region29: #{tpu_custom_call.1} parent=1 // pred_fallthru
      _
    // Predicated region
    $region30: #{tpu_custom_call.1} parent=1 // pred_check
      _
    $region31: #{tpu_custom_call.1} parent=1 // pred_check_branch
      %39 = sbr.rel (0) target = $region33
    $region32: #{tpu_custom_call.1} parent=1 // pred_region
      _
    $region33: #{tpu_custom_call.1} parent=1 // pred_fallthru
      _
    // Predicated region
    $region34: #{tpu_custom_call.1} parent=1 // pred_check
      _
    $region35: #{tpu_custom_call.1} parent=1 // pred_check_branch
      %41 = sbr.rel (0) target = $region37
    $region36: #{tpu_custom_call.1} parent=1 // pred_region
      _
    $region37: #{tpu_custom_call.1} parent=1 // pred_fallthru
      _
    // Predicated region
    $region38: #{tpu_custom_call.1} parent=1 // pred_check
      _
    $region39: #{tpu_custom_call.1} parent=1 // pred_check_branch
      %43 = sbr.rel (0) target = $region41
    $region40: #{tpu_custom_call.1} parent=1 // pred_region
      _
    $region41: #{tpu_custom_call.1} parent=1 // pred_fallthru
      _
    // Predicated region
    $region42: #{tpu_custom_call.1} parent=1 // pred_check
      _
    $region43: #{tpu_custom_call.1} parent=1 // pred_check_branch
      %45 = sbr.rel (0) target = $region45
    $region44: #{tpu_custom_call.1} parent=1 // pred_region
      _
    $region45: #{tpu_custom_call.1} parent=1 // pred_fallthru
      _
    // Predicated region
    $region46: #{tpu_custom_call.1} parent=1 // pred_check
      _
    $region47: #{tpu_custom_call.1} parent=1 // pred_check_branch
      %47 = sbr.rel (0) target = $region49
    $region48: #{tpu_custom_call.1} parent=1 // pred_region
      _
    $region49: #{tpu_custom_call.1} parent=1 // pred_fallthru
      _
    // Predicated region
    $region50: #{tpu_custom_call.1} parent=1 // pred_check
      _
    $region51: #{tpu_custom_call.1} parent=1 // pred_check_branch
      %49 = sbr.rel (0) target = $region53
    $region52: #{tpu_custom_call.1} parent=1 // pred_region
      _
    $region53: #{tpu_custom_call.1} parent=1 // pred_fallthru
      _
    // Predicated region
    $region54: #{tpu_custom_call.1} parent=1 // pred_check
      _
    $region55: #{tpu_custom_call.1} parent=1 // pred_check_branch
      %51 = sbr.rel (0) target = $region57
    $region56: #{tpu_custom_call.1} parent=1 // pred_region
      _
    $region57: #{tpu_custom_call.1} parent=1 // pred_fallthru
      _
    // Predicated region
    $region58: #{tpu_custom_call.1} parent=1 // pred_check
      _
    $region59: #{tpu_custom_call.1} parent=1 // pred_check_branch
      %53 = sbr.rel (0) target = $region61
    $region60: #{tpu_custom_call.1} parent=1 // pred_region
      _
    $region61: #{tpu_custom_call.1} parent=1 // pred_fallthru
      _
    // Predicated region
    $region62: #{tpu_custom_call.1} parent=1 // pred_check
      _
    $region63: #{tpu_custom_call.1} parent=1 // pred_check_branch
      %55 = sbr.rel (0) target = $region65
    $region64: #{tpu_custom_call.1} parent=1 // pred_region
      _
    $region65: #{tpu_custom_call.1} parent=1 // pred_fallthru
      _
    // Predicated region
    $region66: #{tpu_custom_call.1} parent=1 // pred_check
      _
    $region67: #{tpu_custom_call.1} parent=1 // pred_check_branch
      %57 = sbr.rel (0) target = $region69
    $region68: #{tpu_custom_call.1} parent=1 // pred_region
      _
    $region69: #{tpu_custom_call.1} parent=1 // pred_fallthru
      _
    // Predicated region
    $region70: #{tpu_custom_call.1} parent=1 // pred_check
      _
    $region71: #{tpu_custom_call.1} parent=1 // pred_check_branch
      %59 = sbr.rel (0) target = $region73
    $region72: #{tpu_custom_call.1} parent=1 // pred_region
      _
    $region73: #{tpu_custom_call.1} parent=1 // pred_fallthru
      _
    %v61 = vld [vmem:[%s0] sm:$0xff]
    %v62 = vld [vmem:[%s0 + $0x8] sm:$0xff]
    %v63 = vld [vmem:[%s0 + $0x10] sm:$0xff]
    %v64 = vld [vmem:[%s0 + $0x18] sm:$0xff]
    %v65 = vld [vmem:[%s1] sm:$0xff]
    %v66 = vld [vmem:[%s1 + $0x8] sm:$0xff]
    %v67 = vld [vmem:[%s1 + $0x10] sm:$0xff]
    %v68 = vld [vmem:[%s1 + $0x18] sm:$0xff]
    %v69 = vld [vmem:[%s1 + $0x20] sm:$0xff]
    %v70 = vld [vmem:[%s1 + $0x28] sm:$0xff]
    %v71 = vld [vmem:[%s1 + $0x30] sm:$0xff]
    %v72 = vld [vmem:[%s1 + $0x38] sm:$0xff]
    %v73 = vld [vmem:[%s1 + $0x40] sm:$0xff]
    %v74 = vld [vmem:[%s1 + $0x48] sm:$0xff]
    %v75 = vld [vmem:[%s1 + $0x50] sm:$0xff]
    %v76 = vld [vmem:[%s1 + $0x58] sm:$0xff]
    %v77 = vld [vmem:[%s1 + $0x60] sm:$0xff]
    %v78 = vld [vmem:[%s1 + $0x68] sm:$0xff]
    %v79 = vld [vmem:[%s1 + $0x70] sm:$0xff]
    %v80 = vld [vmem:[%s1 + $0x78] sm:$0xff]
    %v81 = vld [vmem:[%s1 + $0x80] sm:$0xff]
    %v82 = vld [vmem:[%s1 + $0x88] sm:$0xff]
    %v83 = vld [vmem:[%s1 + $0x90] sm:$0xff]
    %v84 = vld [vmem:[%s1 + $0x98] sm:$0xff]
    %v85 = vld [vmem:[%s1 + $0xa0] sm:$0xff]
    %v86 = vld [vmem:[%s1 + $0xa8] sm:$0xff]
    %v87 = vld [vmem:[%s1 + $0xb0] sm:$0xff]
    %v88 = vld [vmem:[%s1 + $0xb8] sm:$0xff]
    %v89 = vpack.c.bf16 %v63, %v61
    %v90 = vpack.c.bf16 %v64, %v62
    %v91 = vpack.c.bf16 %v66, %v65
    %v92 = vpack.c.bf16 %v68, %v67
    %v93 = vpack.c.bf16 %v70, %v69
    %v94 = vpack.c.bf16 %v72, %v71
    %v95 = vpack.c.bf16 %v74, %v73
    %v96 = vpack.c.bf16 %v76, %v75
    %v97 = vpack.c.bf16 %v78, %v77
    %v98 = vpack.c.bf16 %v80, %v79
    %v99 = vpack.c.bf16 %v82, %v81
    %v100 = vpack.c.bf16 %v84, %v83
    %v101 = vpack.c.bf16 %v86, %v85
    %v102 = vpack.c.bf16 %v88, %v87
    %v103 = vld [vmem:[%s2] sm:$0xff]
    %v104 = vld [vmem:[%s2 + $0x8] sm:$0xff]
    %vm105 = vcmask 523264
    %v107 = vsel %vm105, %v90, 0
    %109 = vmatpush.bf16.msra.mxu0 %v98
    %110 = vmatpush.bf16.msra.mxu0 %v97
    %111 = vmatpush.bf16.msra.mxu0 %v96
    %112 = vmatpush.bf16.msra.mxu0 %v95
    %113 = vmatpush.bf16.msra.mxu0 %v94
    %114 = vmatpush.bf16.msra.mxu0 %v93
    %115 = vmatpush.bf16.msra.mxu0 %v92
    %116 = vmatpush.bf16.msra.mxu0 %v91
    %117 = vmatmul.bf16.gmra.mxu0 %v89
    %v118 = vpop.f32.mrf.mxu0
    %v119 = vadd.f32 %v103, %v118
    %v120 = vpop.f32.mrf.mxu0
    %v121 = vadd.f32 %v104, %v120
    %122 = vdwg.mxu0
    %123 = vmatpush.bf16.msra.mxu0 0
    %124 = vmatpush.bf16.msra.mxu0 0
    %125 = vmatpush.bf16.msra.mxu0 0
    %126 = vmatpush.bf16.msra.mxu0 0
    %127 = vmatpush.bf16.msra.mxu0 %v102
    %128 = vmatpush.bf16.msra.mxu0 %v101
    %129 = vmatpush.bf16.msra.mxu0 %v100
    %130 = vmatpush.bf16.msra.mxu0 %v99
    %131 = vmatmul.bf16.gmra.mxu0 %v107
    %v132 = vpop.f32.mrf.mxu0
    %v133 = vadd.f32 %v119, %v132
    %v134 = vpop.f32.mrf.mxu0
    %v135 = vadd.f32 %v121, %v134
    %136 = vdwg.mxu0
    %v137 = vld [vmem:[%s3] sm:$0x1]
    %v138 = vld [vmem:[%s4] sm:$0x1]
    %vm139 = vcmask 261120
    %v140 = vsel %vm139, %v133, 0.0
    %141 = vadd.xlane.f32.xlu0 %v140
    %v142 = vpop.xlane.xlu0 %141
    %v143 = vsel %vm139, %v135, 0.0
    %144 = vadd.xlane.f32.xlu0 %v143
    %v145 = vpop.xlane.xlu0 %144
    %v146 = vrcp.pop 32.0
    %v147 = vmul.f32 32.0, %v146
    %v148 = vsub.f32 1.0, %v147
    %v149 = vmul.f32 %v146, %v148
    %v150 = vadd.f32 %v146, %v149
    %vm151 = vweird.f32 %v146
    %v152 = vsel %vm151, %v146, %v150
    %v153 = vmul.f32 %v142, %v152
    %v154 = vmul.f32 %v145, %v152
    %v155 = vsub.f32 %v133, %v153
    %v156 = vsub.f32 %v135, %v154
    %v157 = vmul.f32 %v155, %v155
    %v158 = vmul.f32 %v156, %v156
    %v159 = vsel %vm139, %v157, 0.0
    %160 = vadd.xlane.f32.xlu0 %v159
    %v161 = vpop.xlane.xlu0 %160
    %v162 = vsel %vm139, %v158, 0.0
    %163 = vadd.xlane.f32.xlu0 %v162
    %v164 = vpop.xlane.xlu0 %163
    %v165 = vmul.f32 %v161, %v152
    %v166 = vmul.f32 %v164, %v152
    %v167 = vadd.f32 %v165, 1e-05
    %v168 = vadd.f32 %v166, 1e-05
    %v169 = vrsqrt.pop %v167
    %v170 = vmul.f32 %v169, %v167
    %v171 = vmul.f32 %v170, %v169
    %v172 = vmul.f32 0.5, %v171
    %v173 = vsub.f32 1.5, %v172
    %v174 = vmul.f32 %v169, %v173
    %vm175 = vweird.f32 %v167
    %vm176 = vweird.f32 %v169
    %vm177 = vmor %vm175, %vm176
    %v178 = vsel %vm177, %v169, %v174
    %v179 = vrsqrt.pop %v168
    %v180 = vmul.f32 %v179, %v168
    %v181 = vmul.f32 %v180, %v179
    %v182 = vmul.f32 0.5, %v181
    %v183 = vsub.f32 1.5, %v182
    %v184 = vmul.f32 %v179, %v183
    %vm185 = vweird.f32 %v168
    %vm186 = vweird.f32 %v179
    %vm187 = vmor %vm185, %vm186
    %v188 = vsel %vm187, %v179, %v184
    %v189 = vmul.f32 %v155, %v178
    %v190 = vmul.f32 %v156, %v188
    %v192 = vperm.slane %v137, 0
    %v194 = vmul.f32 %v189, %v192
    %v195 = vmul.f32 %v190, %v192
    %v197 = vperm.slane %v138, 0
    %v199 = vadd.f32 %v194, %v197
    %v200 = vadd.f32 %v195, %v197
    %201 = vst.msk [vmem:[#allocation2] sm:$0xff] %vm139, %v199
    %202 = vst.msk [vmem:[#allocation2 + $0x8] sm:$0xff] %vm139, %v200
    %v203 = vld [vmem:[%s5] sm:$0xff]
    %v204 = vld [vmem:[%s5 + $0x8] sm:$0xff]
    %v205 = vld [vmem:[%s6] sm:$0x1]
    %v206 = vld [vmem:[%s7] sm:$0x1]
    %v207 = vsel %vm139, %v199, 0.0
    %208 = vadd.xlane.f32.xlu0 %v207
    %v209 = vpop.xlane.xlu0 %208
    %v210 = vsel %vm139, %v200, 0.0
    %211 = vadd.xlane.f32.xlu0 %v210
    %v212 = vpop.xlane.xlu0 %211
    %v213 = vmul.f32 %v209, %v152
    %v214 = vmul.f32 %v212, %v152
    %v215 = vsub.f32 %v199, %v213
    %v216 = vsub.f32 %v200, %v214
    %v217 = vmul.f32 %v215, %v215
    %v218 = vmul.f32 %v216, %v216
    %v219 = vsel %vm139, %v217, 0.0
    %220 = vadd.xlane.f32.xlu0 %v219
    %v221 = vpop.xlane.xlu0 %220
    %v222 = vsel %vm139, %v218, 0.0
    %223 = vadd.xlane.f32.xlu0 %v222
    %v224 = vpop.xlane.xlu0 %223
    %v225 = vmul.f32 %v221, %v152
    %v226 = vmul.f32 %v224, %v152
    %v227 = vadd.f32 %v225, 1e-05
    %v228 = vadd.f32 %v226, 1e-05
    %v229 = vrsqrt.pop %v227
    %v230 = vmul.f32 %v229, %v227
    %v231 = vmul.f32 %v230, %v229
    %v232 = vmul.f32 0.5, %v231
    %v233 = vsub.f32 1.5, %v232
    %v234 = vmul.f32 %v229, %v233
    %vm235 = vweird.f32 %v227
    %vm236 = vweird.f32 %v229
    %vm237 = vmor %vm235, %vm236
    %v238 = vsel %vm237, %v229, %v234
    %v239 = vrsqrt.pop %v228
    %v240 = vmul.f32 %v239, %v228
    %v241 = vmul.f32 %v240, %v239
    %v242 = vmul.f32 0.5, %v241
    %v243 = vsub.f32 1.5, %v242
    %v244 = vmul.f32 %v239, %v243
    %vm245 = vweird.f32 %v228
    %vm246 = vweird.f32 %v239
    %vm247 = vmor %vm245, %vm246
    %v248 = vsel %vm247, %v239, %v244
    %v249 = vmul.f32 %v215, %v238
    %v250 = vmul.f32 %v216, %v248
    %v252 = vperm.slane %v205, 0
    %v254 = vmul.f32 %v249, %v252
    %v255 = vmul.f32 %v250, %v252
    %v257 = vperm.slane %v206, 0
    %v259 = vadd.f32 %v254, %v257
    %v260 = vadd.f32 %v255, %v257
    %v261 = vld [vmem:[%s8] sm:$0xff]
    %v262 = vld [vmem:[%s8 + $0x8] sm:$0xff]
    %v263 = vld [vmem:[%s8 + $0x10] sm:$0xff]
    %v264 = vld [vmem:[%s8 + $0x18] sm:$0xff]
    %v265 = vpack.c.bf16 %v260, %v259
    %v266 = vpack.c.bf16 %v262, %v261
    %v267 = vpack.c.bf16 %v264, %v263
    %v268 = vld [vmem:[%s9] sm:$0x1]
    %v270 = vperm.slane %v268, 0
    %v273 = vsel %vm139, %v265, 0
    %275 = vmatpush.bf16.msra.mxu0 0
    %276 = vmatpush.bf16.msra.mxu0 0
    %277 = vmatpush.bf16.msra.mxu0 0
    %278 = vmatpush.bf16.msra.mxu0 0
    %279 = vmatpush.bf16.msra.mxu0 0
    %280 = vmatpush.bf16.msra.mxu0 0
    %281 = vmatpush.bf16.msra.mxu0 %v267
    %282 = vmatpush.bf16.msra.mxu0 %v266
    %283 = vmatmul.bf16.gmra.mxu0 %v273
    %v284 = vpop.f32.mrf.mxu0
    %v285 = vadd.f32 %v270, %v284
    %v286 = vpop.f32.mrf.mxu0
    %v287 = vadd.f32 %v270, %v286
    %288 = vdwg.mxu0
    %291 = vrot.lane.b32.xlu0 %v285, 96
    %v292 = vpop.permute.xlu0 %291
    %293 = vrot.lane.b32.xlu0 %v287, 96
    %v294 = vpop.permute.xlu0 %293
    %vm295 = vcmask 64512
    %v296 = vsel %vm295, %v285, 0
    %v298 = vsel %vm295, %v287, 0
    %v300 = vsel %vm295, %v292, 0
    %v302 = vsel %vm295, %v294, 0
    %304 = vmatpush.xpose.msra.mxu0 0.0
    %305 = vmatpush.xpose.msra.mxu0 0.0
    %306 = vmatpush.xpose.msra.mxu0 0.0
    %307 = vmatpush.xpose.msra.mxu0 0.0
    %308 = vmatpush.xpose.msra.mxu0 0.0
    %309 = vmatpush.xpose.msra.mxu0 0.0
    %310 = vmatpush.xpose.msra.mxu0 0.0
    %311 = vmatpush.xpose.msra.mxu0 0.0
    %312 = vmatpush.xpose.msra.mxu0 0.0
    %313 = vmatpush.xpose.msra.mxu0 0.0
    %314 = vmatpush.xpose.msra.mxu0 0.0
    %315 = vmatpush.xpose.msra.mxu0 0.0
    %316 = vmatpush.xpose.msra.mxu0 0.0
    %317 = vmatpush.xpose.msra.mxu0 0.0
    %318 = vmatpush.xpose.msra.mxu0 %v302
    %319 = vmatpush.xpose.msra.mxu0 %v300
    %320 = vmatmul.f32.gmra.mxu0 %v296
    %v321 = vpop.f32.mrf.mxu0
    %v322 = vadd.f32 %v203, %v321
    %323 = vmatmul.f32.gmra.mxu0 %v298
    %v324 = vpop.f32.mrf.mxu0
    %v325 = vadd.f32 %v204, %v324
    %326 = vdwg.mxu0
    %vm327 = vcmask 130048
    %v328 = vsel %vm327, %v322, -inf
    %329 = vmax.xlane.f32.xlu0 %v328
    %v330 = vpop.xlane.xlu0 %329
    %v331 = vsel %vm327, %v325, -inf
    %332 = vmax.xlane.f32.xlu0 %v331
    %v333 = vpop.xlane.xlu0 %332
    %v334 = vsub.f32 %v322, %v330
    %v335 = vsub.f32 %v325, %v333
    %v336 = vmul.f32 %v334, 1.442695
    %v337 = vpow.pop %v336
    %v338 = vmul.f32 %v335, 1.442695
    %v339 = vpow.pop %v338
    %v340 = vsel %vm327, %v337, 0.0
    %341 = vadd.xlane.f32.xlu0 %v340
    %v342 = vpop.xlane.xlu0 %341
    %v343 = vsel %vm327, %v339, 0.0
    %344 = vadd.xlane.f32.xlu0 %v343
    %v345 = vpop.xlane.xlu0 %344
    %v346 = vrcp.pop %v342
    %v347 = vrcp.pop %v345
    %v348 = vmul.f32 %v337, %v346
    %v349 = vmul.f32 %v339, %v347
    %350 = vrot.lane.b32.xlu0 %v285, 64
    %v351 = vpop.permute.xlu0 %350
    %352 = vrot.lane.b32.xlu0 %v287, 64
    %v353 = vpop.permute.xlu0 %352
    %v357 = vsel %vm327, %v348, 0
    %v360 = vsel %vm327, %v349, 0
    %362 = vmatpush.msra.mxu0 0.0
    %363 = vmatpush.msra.mxu0 0.0
    %364 = vmatpush.msra.mxu0 0.0
    %365 = vmatpush.msra.mxu0 0.0
    %366 = vmatpush.msra.mxu0 0.0
    %367 = vmatpush.msra.mxu0 0.0
    %368 = vmatpush.msra.mxu0 0.0
    %369 = vmatpush.msra.mxu0 0.0
    %370 = vmatpush.msra.mxu0 0.0
    %371 = vmatpush.msra.mxu0 0.0
    %372 = vmatpush.msra.mxu0 0.0
    %373 = vmatpush.msra.mxu0 0.0
    %374 = vmatpush.msra.mxu0 0.0
    %375 = vmatpush.msra.mxu0 0.0
    %376 = vmatpush.msra.mxu0 %v353
    %377 = vmatpush.msra.mxu0 %v351
    %378 = vmatmul.f32.gmra.mxu0 %v357
    %v379 = vpop.f32.mrf.mxu0
    %v380 = vadd.f32 0.0, %v379
    %381 = vmatmul.f32.gmra.mxu0 %v360
    %v382 = vpop.f32.mrf.mxu0
    %v383 = vadd.f32 0.0, %v382
    %384 = vdwg.mxu0
    %385 = vrot.lane.b32.xlu0 %v285, 120
    %v386 = vpop.permute.xlu0 %385
    %387 = vrot.lane.b32.xlu0 %v287, 120
    %v388 = vpop.permute.xlu0 %387
    %389 = vrot.lane.b32.xlu0 %v285, 88
    %v390 = vpop.permute.xlu0 %389
    %391 = vrot.lane.b32.xlu0 %v287, 88
    %v392 = vpop.permute.xlu0 %391
    %v393 = vsel %vm295, %v386, 0
    %v395 = vsel %vm295, %v388, 0
    %v397 = vsel %vm295, %v390, 0
    %v399 = vsel %vm295, %v392, 0
    %401 = vmatpush.xpose.msra.mxu0 0.0
    %402 = vmatpush.xpose.msra.mxu0 0.0
    %403 = vmatpush.xpose.msra.mxu0 0.0
    %404 = vmatpush.xpose.msra.mxu0 0.0
    %405 = vmatpush.xpose.msra.mxu0 0.0
    %406 = vmatpush.xpose.msra.mxu0 0.0
    %407 = vmatpush.xpose.msra.mxu0 0.0
    %408 = vmatpush.xpose.msra.mxu0 0.0
    %409 = vmatpush.xpose.msra.mxu0 0.0
    %410 = vmatpush.xpose.msra.mxu0 0.0
    %411 = vmatpush.xpose.msra.mxu0 0.0
    %412 = vmatpush.xpose.msra.mxu0 0.0
    %413 = vmatpush.xpose.msra.mxu0 0.0
    %414 = vmatpush.xpose.msra.mxu0 0.0
    %415 = vmatpush.xpose.msra.mxu0 %v399
    %416 = vmatpush.xpose.msra.mxu0 %v397
    %417 = vmatmul.f32.gmra.mxu0 %v393
    %v418 = vpop.f32.mrf.mxu0
    %v419 = vadd.f32 %v203, %v418
    %420 = vmatmul.f32.gmra.mxu0 %v395
    %v421 = vpop.f32.mrf.mxu0
    %v422 = vadd.f32 %v204, %v421
    %423 = vdwg.mxu0
    %v424 = vsel %vm327, %v419, -inf
    %425 = vmax.xlane.f32.xlu0 %v424
    %v426 = vpop.xlane.xlu0 %425
    %v427 = vsel %vm327, %v422, -inf
    %428 = vmax.xlane.f32.xlu0 %v427
    %v429 = vpop.xlane.xlu0 %428
    %v430 = vsub.f32 %v419, %v426
    %v431 = vsub.f32 %v422, %v429
    %v432 = vmul.f32 %v430, 1.442695
    %v433 = vpow.pop %v432
    %v434 = vmul.f32 %v431, 1.442695
    %v435 = vpow.pop %v434
    %v436 = vsel %vm327, %v433, 0.0
    %437 = vadd.xlane.f32.xlu0 %v436
    %v438 = vpop.xlane.xlu0 %437
    %v439 = vsel %vm327, %v435, 0.0
    %440 = vadd.xlane.f32.xlu0 %v439
    %v441 = vpop.xlane.xlu0 %440
    %v442 = vrcp.pop %v438
    %v443 = vrcp.pop %v441
    %v444 = vmul.f32 %v433, %v442
    %v445 = vmul.f32 %v435, %v443
    %446 = vrot.lane.b32.xlu0 %v285, 56
    %v447 = vpop.permute.xlu0 %446
    %448 = vrot.lane.b32.xlu0 %v287, 56
    %v449 = vpop.permute.xlu0 %448
    %v453 = vsel %vm327, %v444, 0
    %v456 = vsel %vm327, %v445, 0
    %458 = vmatpush.msra.mxu0 0.0
    %459 = vmatpush.msra.mxu0 0.0
    %460 = vmatpush.msra.mxu0 0.0
    %461 = vmatpush.msra.mxu0 0.0
    %462 = vmatpush.msra.mxu0 0.0
    %463 = vmatpush.msra.mxu0 0.0
    %464 = vmatpush.msra.mxu0 0.0
    %465 = vmatpush.msra.mxu0 0.0
    %466 = vmatpush.msra.mxu0 0.0
    %467 = vmatpush.msra.mxu0 0.0
    %468 = vmatpush.msra.mxu0 0.0
    %469 = vmatpush.msra.mxu0 0.0
    %470 = vmatpush.msra.mxu0 0.0
    %471 = vmatpush.msra.mxu0 0.0
    %472 = vmatpush.msra.mxu0 %v449
    %473 = vmatpush.msra.mxu0 %v447
    %474 = vmatmul.f32.gmra.mxu0 %v453
    %v475 = vpop.f32.mrf.mxu0
    %v476 = vadd.f32 0.0, %v475
    %477 = vmatmul.f32.gmra.mxu0 %v456
    %v478 = vpop.f32.mrf.mxu0
    %v479 = vadd.f32 0.0, %v478
    %480 = vdwg.mxu0
    %481 = vrot.lane.b32.xlu0 %v285, 112
    %v482 = vpop.permute.xlu0 %481
    %483 = vrot.lane.b32.xlu0 %v287, 112
    %v484 = vpop.permute.xlu0 %483
    %485 = vrot.lane.b32.xlu0 %v285, 80
    %v486 = vpop.permute.xlu0 %485
    %487 = vrot.lane.b32.xlu0 %v287, 80
    %v488 = vpop.permute.xlu0 %487
    %v489 = vsel %vm295, %v482, 0
    %v491 = vsel %vm295, %v484, 0
    %v493 = vsel %vm295, %v486, 0
    %v495 = vsel %vm295, %v488, 0
    %497 = vmatpush.xpose.msra.mxu0 0.0
    %498 = vmatpush.xpose.msra.mxu0 0.0
    %499 = vmatpush.xpose.msra.mxu0 0.0
    %500 = vmatpush.xpose.msra.mxu0 0.0
    %501 = vmatpush.xpose.msra.mxu0 0.0
    %502 = vmatpush.xpose.msra.mxu0 0.0
    %503 = vmatpush.xpose.msra.mxu0 0.0
    %504 = vmatpush.xpose.msra.mxu0 0.0
    %505 = vmatpush.xpose.msra.mxu0 0.0
    %506 = vmatpush.xpose.msra.mxu0 0.0
    %507 = vmatpush.xpose.msra.mxu0 0.0
    %508 = vmatpush.xpose.msra.mxu0 0.0
    %509 = vmatpush.xpose.msra.mxu0 0.0
    %510 = vmatpush.xpose.msra.mxu0 0.0
    %511 = vmatpush.xpose.msra.mxu0 %v495
    %512 = vmatpush.xpose.msra.mxu0 %v493
    %513 = vmatmul.f32.gmra.mxu0 %v489
    %v514 = vpop.f32.mrf.mxu0
    %v515 = vadd.f32 %v203, %v514
    %516 = vmatmul.f32.gmra.mxu0 %v491
    %v517 = vpop.f32.mrf.mxu0
    %v518 = vadd.f32 %v204, %v517
    %519 = vdwg.mxu0
    %v520 = vsel %vm327, %v515, -inf
    %521 = vmax.xlane.f32.xlu0 %v520
    %v522 = vpop.xlane.xlu0 %521
    %v523 = vsel %vm327, %v518, -inf
    %524 = vmax.xlane.f32.xlu0 %v523
    %v525 = vpop.xlane.xlu0 %524
    %v526 = vsub.f32 %v515, %v522
    %v527 = vsub.f32 %v518, %v525
    %v528 = vmul.f32 %v526, 1.442695
    %v529 = vpow.pop %v528
    %v530 = vmul.f32 %v527, 1.442695
    %v531 = vpow.pop %v530
    %v532 = vsel %vm327, %v529, 0.0
    %533 = vadd.xlane.f32.xlu0 %v532
    %v534 = vpop.xlane.xlu0 %533
    %v535 = vsel %vm327, %v531, 0.0
    %536 = vadd.xlane.f32.xlu0 %v535
    %v537 = vpop.xlane.xlu0 %536
    %v538 = vrcp.pop %v534
    %v539 = vrcp.pop %v537
    %v540 = vmul.f32 %v529, %v538
    %v541 = vmul.f32 %v531, %v539
    %542 = vrot.lane.b32.xlu0 %v285, 48
    %v543 = vpop.permute.xlu0 %542
    %544 = vrot.lane.b32.xlu0 %v287, 48
    %v545 = vpop.permute.xlu0 %544
    %v549 = vsel %vm327, %v540, 0
    %v552 = vsel %vm327, %v541, 0
    %554 = vmatpush.msra.mxu0 0.0
    %555 = vmatpush.msra.mxu0 0.0
    %556 = vmatpush.msra.mxu0 0.0
    %557 = vmatpush.msra.mxu0 0.0
    %558 = vmatpush.msra.mxu0 0.0
    %559 = vmatpush.msra.mxu0 0.0
    %560 = vmatpush.msra.mxu0 0.0
    %561 = vmatpush.msra.mxu0 0.0
    %562 = vmatpush.msra.mxu0 0.0
    %563 = vmatpush.msra.mxu0 0.0
    %564 = vmatpush.msra.mxu0 0.0
    %565 = vmatpush.msra.mxu0 0.0
    %566 = vmatpush.msra.mxu0 0.0
    %567 = vmatpush.msra.mxu0 0.0
    %568 = vmatpush.msra.mxu0 %v545
    %569 = vmatpush.msra.mxu0 %v543
    %570 = vmatmul.f32.gmra.mxu0 %v549
    %v571 = vpop.f32.mrf.mxu0
    %v572 = vadd.f32 0.0, %v571
    %573 = vmatmul.f32.gmra.mxu0 %v552
    %v574 = vpop.f32.mrf.mxu0
    %v575 = vadd.f32 0.0, %v574
    %576 = vdwg.mxu0
    %577 = vrot.lane.b32.xlu0 %v285, 104
    %v578 = vpop.permute.xlu0 %577
    %579 = vrot.lane.b32.xlu0 %v287, 104
    %v580 = vpop.permute.xlu0 %579
    %581 = vrot.lane.b32.xlu0 %v285, 72
    %v582 = vpop.permute.xlu0 %581
    %583 = vrot.lane.b32.xlu0 %v287, 72
    %v584 = vpop.permute.xlu0 %583
    %v585 = vsel %vm295, %v578, 0
    %v587 = vsel %vm295, %v580, 0
    %v589 = vsel %vm295, %v582, 0
    %v591 = vsel %vm295, %v584, 0
    %593 = vmatpush.xpose.msra.mxu0 0.0
    %594 = vmatpush.xpose.msra.mxu0 0.0
    %595 = vmatpush.xpose.msra.mxu0 0.0
    %596 = vmatpush.xpose.msra.mxu0 0.0
    %597 = vmatpush.xpose.msra.mxu0 0.0
    %598 = vmatpush.xpose.msra.mxu0 0.0
    %599 = vmatpush.xpose.msra.mxu0 0.0
    %600 = vmatpush.xpose.msra.mxu0 0.0
    %601 = vmatpush.xpose.msra.mxu0 0.0
    %602 = vmatpush.xpose.msra.mxu0 0.0
    %603 = vmatpush.xpose.msra.mxu0 0.0
    %604 = vmatpush.xpose.msra.mxu0 0.0
    %605 = vmatpush.xpose.msra.mxu0 0.0
    %606 = vmatpush.xpose.msra.mxu0 0.0
    %607 = vmatpush.xpose.msra.mxu0 %v591
    %608 = vmatpush.xpose.msra.mxu0 %v589
    %609 = vmatmul.f32.gmra.mxu0 %v585
    %v610 = vpop.f32.mrf.mxu0
    %v611 = vadd.f32 %v203, %v610
    %612 = vmatmul.f32.gmra.mxu0 %v587
    %v613 = vpop.f32.mrf.mxu0
    %v614 = vadd.f32 %v204, %v613
    %615 = vdwg.mxu0
    %v616 = vsel %vm327, %v611, -inf
    %617 = vmax.xlane.f32.xlu0 %v616
    %v618 = vpop.xlane.xlu0 %617
    %v619 = vsel %vm327, %v614, -inf
    %620 = vmax.xlane.f32.xlu0 %v619
    %v621 = vpop.xlane.xlu0 %620
    %v622 = vsub.f32 %v611, %v618
    %v623 = vsub.f32 %v614, %v621
    %v624 = vmul.f32 %v622, 1.442695
    %v625 = vpow.pop %v624
    %v626 = vmul.f32 %v623, 1.442695
    %v627 = vpow.pop %v626
    %v628 = vsel %vm327, %v625, 0.0
    %629 = vadd.xlane.f32.xlu0 %v628
    %v630 = vpop.xlane.xlu0 %629
    %v631 = vsel %vm327, %v627, 0.0
    %632 = vadd.xlane.f32.xlu0 %v631
    %v633 = vpop.xlane.xlu0 %632
    %v634 = vrcp.pop %v630
    %v635 = vrcp.pop %v633
    %v636 = vmul.f32 %v625, %v634
    %v637 = vmul.f32 %v627, %v635
    %638 = vrot.lane.b32.xlu0 %v285, 40
    %v639 = vpop.permute.xlu0 %638
    %640 = vrot.lane.b32.xlu0 %v287, 40
    %v641 = vpop.permute.xlu0 %640
    %v645 = vsel %vm327, %v636, 0
    %v648 = vsel %vm327, %v637, 0
    %650 = vmatpush.msra.mxu0 0.0
    %651 = vmatpush.msra.mxu0 0.0
    %652 = vmatpush.msra.mxu0 0.0
    %653 = vmatpush.msra.mxu0 0.0
    %654 = vmatpush.msra.mxu0 0.0
    %655 = vmatpush.msra.mxu0 0.0
    %656 = vmatpush.msra.mxu0 0.0
    %657 = vmatpush.msra.mxu0 0.0
    %658 = vmatpush.msra.mxu0 0.0
    %659 = vmatpush.msra.mxu0 0.0
    %660 = vmatpush.msra.mxu0 0.0
    %661 = vmatpush.msra.mxu0 0.0
    %662 = vmatpush.msra.mxu0 0.0
    %663 = vmatpush.msra.mxu0 0.0
    %664 = vmatpush.msra.mxu0 %v641
    %665 = vmatpush.msra.mxu0 %v639
    %666 = vmatmul.f32.gmra.mxu0 %v645
    %v667 = vpop.f32.mrf.mxu0
    %v668 = vadd.f32 0.0, %v667
    %669 = vmatmul.f32.gmra.mxu0 %v648
    %v670 = vpop.f32.mrf.mxu0
    %v671 = vadd.f32 0.0, %v670
    %672 = vdwg.mxu0
    %675 = vrot.lane.b32.xlu0 %v476, 8
    %v676 = vpop.permute.xlu0 %675
    %677 = vrot.lane.b32.xlu0 %v479, 8
    %v678 = vpop.permute.xlu0 %677
    %683 = vrot.lane.b32.xlu0 %v572, 16
    %v684 = vpop.permute.xlu0 %683
    %685 = vrot.lane.b32.xlu0 %v575, 16
    %v686 = vpop.permute.xlu0 %685
    %691 = vrot.lane.b32.xlu0 %v668, 24
    %v692 = vpop.permute.xlu0 %691
    %693 = vrot.lane.b32.xlu0 %v671, 24
    %v694 = vpop.permute.xlu0 %693
    %v697 = vsel %vm295, %v380, %v676
    %v698 = vsel %vm295, %v383, %v678
    %v699 = vsel %vm327, %v697, %v684
    %v700 = vsel %vm327, %v698, %v686
    %vm701 = vcmask 195584
    %v702 = vsel %vm701, %v699, %v692
    %v703 = vsel %vm701, %v700, %v694
    %v704 = vld [vmem:[%s10] sm:$0xff]
    %v705 = vld [vmem:[%s10 + $0x8] sm:$0xff]
    %v706 = vld [vmem:[%s10 + $0x10] sm:$0xff]
    %v707 = vld [vmem:[%s10 + $0x18] sm:$0xff]
    %v708 = vpack.c.bf16 %v703, %v702
    %v709 = vpack.c.bf16 %v705, %v704
    %v710 = vpack.c.bf16 %v707, %v706
    %v711 = vld [vmem:[%s11] sm:$0x1]
    %v713 = vperm.slane %v711, 0
    %v716 = vsel %vm139, %v708, 0
    %718 = vmatpush.bf16.msra.mxu0 0
    %719 = vmatpush.bf16.msra.mxu0 0
    %720 = vmatpush.bf16.msra.mxu0 0
    %721 = vmatpush.bf16.msra.mxu0 0
    %722 = vmatpush.bf16.msra.mxu0 0
    %723 = vmatpush.bf16.msra.mxu0 0
    %724 = vmatpush.bf16.msra.mxu0 %v710
    %725 = vmatpush.bf16.msra.mxu0 %v709
    %726 = vmatmul.bf16.gmra.mxu0 %v716
    %v727 = vpop.f32.mrf.mxu0
    %v728 = vadd.f32 %v713, %v727
    %v729 = vpop.f32.mrf.mxu0
    %v730 = vadd.f32 %v713, %v729
    %731 = vdwg.mxu0
    %v732 = vadd.f32 %v199, %v728
    %v733 = vadd.f32 %v200, %v730
    %v734 = vld [vmem:[%s12] sm:$0x1]
    %v735 = vld [vmem:[%s13] sm:$0x1]
    %v736 = vsel %vm139, %v732, 0.0
    %737 = vadd.xlane.f32.xlu0 %v736
    %v738 = vpop.xlane.xlu0 %737
    %v739 = vsel %vm139, %v733, 0.0
    %740 = vadd.xlane.f32.xlu0 %v739
    %v741 = vpop.xlane.xlu0 %740
    %v742 = vmul.f32 %v738, %v152
    %v743 = vmul.f32 %v741, %v152
    %v744 = vsub.f32 %v732, %v742
    %v745 = vsub.f32 %v733, %v743
    %v746 = vmul.f32 %v744, %v744
    %v747 = vmul.f32 %v745, %v745
    %v748 = vsel %vm139, %v746, 0.0
    %749 = vadd.xlane.f32.xlu0 %v748
    %v750 = vpop.xlane.xlu0 %749
    %v751 = vsel %vm139, %v747, 0.0
    %752 = vadd.xlane.f32.xlu0 %v751
    %v753 = vpop.xlane.xlu0 %752
    %v754 = vmul.f32 %v750, %v152
    %v755 = vmul.f32 %v753, %v152
    %v756 = vadd.f32 %v754, 1e-05
    %v757 = vadd.f32 %v755, 1e-05
    %v758 = vrsqrt.pop %v756
    %v759 = vmul.f32 %v758, %v756
    %v760 = vmul.f32 %v759, %v758
    %v761 = vmul.f32 0.5, %v760
    %v762 = vsub.f32 1.5, %v761
    %v763 = vmul.f32 %v758, %v762
    %vm764 = vweird.f32 %v756
    %vm765 = vweird.f32 %v758
    %vm766 = vmor %vm764, %vm765
    %v767 = vsel %vm766, %v758, %v763
    %v768 = vrsqrt.pop %v757
    %v769 = vmul.f32 %v768, %v757
    %v770 = vmul.f32 %v769, %v768
    %v771 = vmul.f32 0.5, %v770
    %v772 = vsub.f32 1.5, %v771
    %v773 = vmul.f32 %v768, %v772
    %vm774 = vweird.f32 %v757
    %vm775 = vweird.f32 %v768
    %vm776 = vmor %vm774, %vm775
    %v777 = vsel %vm776, %v768, %v773
    %v778 = vmul.f32 %v744, %v767
    %v779 = vmul.f32 %v745, %v777
    %v781 = vperm.slane %v734, 0
    %v783 = vmul.f32 %v778, %v781
    %v784 = vmul.f32 %v779, %v781
    %v786 = vperm.slane %v735, 0
    %v788 = vadd.f32 %v783, %v786
    %v789 = vadd.f32 %v784, %v786
    %v790 = vld [vmem:[%s14] sm:$0xff]
    %v791 = vld [vmem:[%s14 + $0x8] sm:$0xff]
    %v792 = vld [vmem:[%s14 + $0x10] sm:$0xff]
    %v793 = vld [vmem:[%s14 + $0x18] sm:$0xff]
    %v794 = vpack.c.bf16 %v789, %v788
    %v795 = vpack.c.bf16 %v791, %v790
    %v796 = vpack.c.bf16 %v793, %v792
    %v797 = vld [vmem:[%s15] sm:$0x1]
    %v799 = vperm.slane %v797, 0
    %v802 = vsel %vm139, %v794, 0
    %804 = vmatpush.bf16.msra.mxu0 0
    %805 = vmatpush.bf16.msra.mxu0 0
    %806 = vmatpush.bf16.msra.mxu0 0
    %807 = vmatpush.bf16.msra.mxu0 0
    %808 = vmatpush.bf16.msra.mxu0 0
    %809 = vmatpush.bf16.msra.mxu0 0
    %810 = vmatpush.bf16.msra.mxu0 %v796
    %811 = vmatpush.bf16.msra.mxu0 %v795
    %812 = vmatmul.bf16.gmra.mxu0 %v802
    %v813 = vpop.f32.mrf.mxu0
    %v814 = vadd.f32 %v799, %v813
    %v815 = vpop.f32.mrf.mxu0
    %v816 = vadd.f32 %v799, %v815
    %817 = vdwg.mxu0
    %v818 = vmul.f32 %v814, 1.702
    %v819 = vmul.f32 %v816, 1.702
    %v820 = vxor.u32 %v818, 2147483648
    %v821 = vxor.u32 %v819, 2147483648
    %v822 = vmul.f32 %v820, 1.442695
    %v823 = vpow.pop %v822
    %v824 = vmul.f32 %v821, 1.442695
    %v825 = vpow.pop %v824
    %v826 = vadd.f32 %v823, 1.0
    %v827 = vadd.f32 %v825, 1.0
    %v828 = vrcp.pop %v826
    %v829 = vmul.f32 %v826, %v828
    %v830 = vsub.f32 1.0, %v829
    %v831 = vmul.f32 %v828, %v830
    %v832 = vadd.f32 %v828, %v831
    %vm833 = vweird.f32 %v826
    %vm834 = vweird.f32 %v828
    %vm835 = vmor %vm833, %vm834
    %v836 = vsel %vm835, %v828, %v832
    %v837 = vand.u32 2147483647, %v826
    %vm838 = vcmp.eq.f32.partialorder %v837, 8.507059e+37
    %v839 = vand.u32 %v826, 2147483648
    %v840 = vor.u32 1.1754944e-38, %v839
    %v841 = vsel %vm838, %v840, %v836
    %v842 = vmul.f32 1.0, %v841
    %v843 = vrcp.pop %v827
    %v844 = vmul.f32 %v827, %v843
    %v845 = vsub.f32 1.0, %v844
    %v846 = vmul.f32 %v843, %v845
    %v847 = vadd.f32 %v843, %v846
    %vm848 = vweird.f32 %v827
    %vm849 = vweird.f32 %v843
    %vm850 = vmor %vm848, %vm849
    %v851 = vsel %vm850, %v843, %v847
    %v852 = vand.u32 2147483647, %v827
    %vm853 = vcmp.eq.f32.partialorder %v852, 8.507059e+37
    %v854 = vand.u32 %v827, 2147483648
    %v855 = vor.u32 1.1754944e-38, %v854
    %v856 = vsel %vm853, %v855, %v851
    %v857 = vmul.f32 1.0, %v856
    %v858 = vmul.f32 %v814, %v842
    %v859 = vmul.f32 %v816, %v857
    %v860 = vld [vmem:[%s16] sm:$0xff]
    %v861 = vld [vmem:[%s16 + $0x8] sm:$0xff]
    %v862 = vld [vmem:[%s16 + $0x10] sm:$0xff]
    %v863 = vld [vmem:[%s16 + $0x18] sm:$0xff]
    %v864 = vld [vmem:[%s16 + $0x20] sm:$0xff]
    %v865 = vld [vmem:[%s16 + $0x28] sm:$0xff]
    %v866 = vld [vmem:[%s16 + $0x30] sm:$0xff]
    %v867 = vld [vmem:[%s16 + $0x38] sm:$0xff]
    %v868 = vpack.c.bf16 %v859, %v858
    %v869 = vpack.c.bf16 %v861, %v860
    %v870 = vpack.c.bf16 %v863, %v862
    %v871 = vpack.c.bf16 %v865, %v864
    %v872 = vpack.c.bf16 %v867, %v866
    %v873 = vld [vmem:[%s17] sm:$0x1]
    %v875 = vperm.slane %v873, 0
    %v878 = vsel %vm105, %v868, 0
    %880 = vmatpush.bf16.msra.mxu0 0
    %881 = vmatpush.bf16.msra.mxu0 0
    %882 = vmatpush.bf16.msra.mxu0 0
    %883 = vmatpush.bf16.msra.mxu0 0
    %884 = vmatpush.bf16.msra.mxu0 %v872
    %885 = vmatpush.bf16.msra.mxu0 %v871
    %886 = vmatpush.bf16.msra.mxu0 %v870
    %887 = vmatpush.bf16.msra.mxu0 %v869
    %888 = vmatmul.bf16.gmra.mxu0 %v878
    %v889 = vpop.f32.mrf.mxu0
    %v890 = vadd.f32 %v875, %v889
    %v891 = vpop.f32.mrf.mxu0
    %v892 = vadd.f32 %v875, %v891
    %893 = vdwg.mxu0
    %v894 = vadd.f32 %v732, %v890
    %v895 = vadd.f32 %v733, %v892
    %s896 = scalar_lea.vmem [#allocation2], 16
    %897 = vst.msk [vmem:[%s896] sm:$0xff] %vm139, %v894
    %898 = vst.msk [vmem:[%s896 + $0x8] sm:$0xff] %vm139, %v895
    %s899 = scalar_lea.vmem %s6, 1
    %v900 = vld [vmem:[%s899] sm:$0x1]
    %s901 = scalar_lea.vmem %s7, 1
    %v902 = vld [vmem:[%s901] sm:$0x1]
    %v903 = vsel %vm139, %v894, 0.0
    %904 = vadd.xlane.f32.xlu0 %v903
    %v905 = vpop.xlane.xlu0 %904
    %v906 = vsel %vm139, %v895, 0.0
    %907 = vadd.xlane.f32.xlu0 %v906
    %v908 = vpop.xlane.xlu0 %907
    %v909 = vmul.f32 %v905, %v152
    %v910 = vmul.f32 %v908, %v152
    %v911 = vsub.f32 %v894, %v909
    %v912 = vsub.f32 %v895, %v910
    %v913 = vmul.f32 %v911, %v911
    %v914 = vmul.f32 %v912, %v912
    %v915 = vsel %vm139, %v913, 0.0
    %916 = vadd.xlane.f32.xlu0 %v915
    %v917 = vpop.xlane.xlu0 %916
    %v918 = vsel %vm139, %v914, 0.0
    %919 = vadd.xlane.f32.xlu0 %v918
    %v920 = vpop.xlane.xlu0 %919
    %v921 = vmul.f32 %v917, %v152
    %v922 = vmul.f32 %v920, %v152
    %v923 = vadd.f32 %v921, 1e-05
    %v924 = vadd.f32 %v922, 1e-05
    %v925 = vrsqrt.pop %v923
    %v926 = vmul.f32 %v925, %v923
    %v927 = vmul.f32 %v926, %v925
    %v928 = vmul.f32 0.5, %v927
    %v929 = vsub.f32 1.5, %v928
    %v930 = vmul.f32 %v925, %v929
    %vm931 = vweird.f32 %v923
    %vm932 = vweird.f32 %v925
    %vm933 = vmor %vm931, %vm932
    %v934 = vsel %vm933, %v925, %v930
    %v935 = vrsqrt.pop %v924
    %v936 = vmul.f32 %v935, %v924
    %v937 = vmul.f32 %v936, %v935
    %v938 = vmul.f32 0.5, %v937
    %v939 = vsub.f32 1.5, %v938
    %v940 = vmul.f32 %v935, %v939
    %vm941 = vweird.f32 %v924
    %vm942 = vweird.f32 %v935
    %vm943 = vmor %vm941, %vm942
    %v944 = vsel %vm943, %v935, %v940
    %v945 = vmul.f32 %v911, %v934
    %v946 = vmul.f32 %v912, %v944
    %v948 = vperm.slane %v900, 0
    %v950 = vmul.f32 %v945, %v948
    %v951 = vmul.f32 %v946, %v948
    %v953 = vperm.slane %v902, 0
    %v955 = vadd.f32 %v950, %v953
    %v956 = vadd.f32 %v951, %v953
    %s957 = scalar_lea.vmem %s8, 32
    %v958 = vld [vmem:[%s957] sm:$0xff]
    %v959 = vld [vmem:[%s957 + $0x8] sm:$0xff]
    %v960 = vld [vmem:[%s957 + $0x10] sm:$0xff]
    %v961 = vld [vmem:[%s957 + $0x18] sm:$0xff]
    %v962 = vpack.c.bf16 %v956, %v955
    %v963 = vpack.c.bf16 %v959, %v958
    %v964 = vpack.c.bf16 %v961, %v960
    %s965 = scalar_lea.vmem %s9, 1
    %v966 = vld [vmem:[%s965] sm:$0x1]
    %v968 = vperm.slane %v966, 0
    %v971 = vsel %vm139, %v962, 0
    %973 = vmatpush.bf16.msra.mxu0 0
    %974 = vmatpush.bf16.msra.mxu0 0
    %975 = vmatpush.bf16.msra.mxu0 0
    %976 = vmatpush.bf16.msra.mxu0 0
    %977 = vmatpush.bf16.msra.mxu0 0
    %978 = vmatpush.bf16.msra.mxu0 0
    %979 = vmatpush.bf16.msra.mxu0 %v964
    %980 = vmatpush.bf16.msra.mxu0 %v963
    %981 = vmatmul.bf16.gmra.mxu0 %v971
    %v982 = vpop.f32.mrf.mxu0
    %v983 = vadd.f32 %v968, %v982
    %v984 = vpop.f32.mrf.mxu0
    %v985 = vadd.f32 %v968, %v984
    %986 = vdwg.mxu0
    %989 = vrot.lane.b32.xlu0 %v983, 96
    %v990 = vpop.permute.xlu0 %989
    %991 = vrot.lane.b32.xlu0 %v985, 96
    %v992 = vpop.permute.xlu0 %991
    %v993 = vsel %vm295, %v983, 0
    %v995 = vsel %vm295, %v985, 0
    %v997 = vsel %vm295, %v990, 0
    %v999 = vsel %vm295, %v992, 0
    %1001 = vmatpush.xpose.msra.mxu0 0.0
    %1002 = vmatpush.xpose.msra.mxu0 0.0
    %1003 = vmatpush.xpose.msra.mxu0 0.0
    %1004 = vmatpush.xpose.msra.mxu0 0.0
    %1005 = vmatpush.xpose.msra.mxu0 0.0
    %1006 = vmatpush.xpose.msra.mxu0 0.0
    %1007 = vmatpush.xpose.msra.mxu0 0.0
    %1008 = vmatpush.xpose.msra.mxu0 0.0
    %1009 = vmatpush.xpose.msra.mxu0 0.0
    %1010 = vmatpush.xpose.msra.mxu0 0.0
    %1011 = vmatpush.xpose.msra.mxu0 0.0
    %1012 = vmatpush.xpose.msra.mxu0 0.0
    %1013 = vmatpush.xpose.msra.mxu0 0.0
    %1014 = vmatpush.xpose.msra.mxu0 0.0
    %1015 = vmatpush.xpose.msra.mxu0 %v999
    %1016 = vmatpush.xpose.msra.mxu0 %v997
    %1017 = vmatmul.f32.gmra.mxu0 %v993
    %v1018 = vpop.f32.mrf.mxu0
    %v1019 = vadd.f32 %v203, %v1018
    %1020 = vmatmul.f32.gmra.mxu0 %v995
    %v1021 = vpop.f32.mrf.mxu0
    %v1022 = vadd.f32 %v204, %v1021
    %1023 = vdwg.mxu0
    %v1024 = vsel %vm327, %v1019, -inf
    %1025 = vmax.xlane.f32.xlu0 %v1024
    %v1026 = vpop.xlane.xlu0 %1025
    %v1027 = vsel %vm327, %v1022, -inf
    %1028 = vmax.xlane.f32.xlu0 %v1027
    %v1029 = vpop.xlane.xlu0 %1028
    %v1030 = vsub.f32 %v1019, %v1026
    %v1031 = vsub.f32 %v1022, %v1029
    %v1032 = vmul.f32 %v1030, 1.442695
    %v1033 = vpow.pop %v1032
    %v1034 = vmul.f32 %v1031, 1.442695
    %v1035 = vpow.pop %v1034
    %v1036 = vsel %vm327, %v1033, 0.0
    %1037 = vadd.xlane.f32.xlu0 %v1036
    %v1038 = vpop.xlane.xlu0 %1037
    %v1039 = vsel %vm327, %v1035, 0.0
    %1040 = vadd.xlane.f32.xlu0 %v1039
    %v1041 = vpop.xlane.xlu0 %1040
    %v1042 = vrcp.pop %v1038
    %v1043 = vrcp.pop %v1041
    %v1044 = vmul.f32 %v1033, %v1042
    %v1045 = vmul.f32 %v1035, %v1043
    %1046 = vrot.lane.b32.xlu0 %v983, 64
    %v1047 = vpop.permute.xlu0 %1046
    %1048 = vrot.lane.b32.xlu0 %v985, 64
    %v1049 = vpop.permute.xlu0 %1048
    %v1053 = vsel %vm327, %v1044, 0
    %v1056 = vsel %vm327, %v1045, 0
    %1058 = vmatpush.msra.mxu0 0.0
    %1059 = vmatpush.msra.mxu0 0.0
    %1060 = vmatpush.msra.mxu0 0.0
    %1061 = vmatpush.msra.mxu0 0.0
    %1062 = vmatpush.msra.mxu0 0.0
    %1063 = vmatpush.msra.mxu0 0.0
    %1064 = vmatpush.msra.mxu0 0.0
    %1065 = vmatpush.msra.mxu0 0.0
    %1066 = vmatpush.msra.mxu0 0.0
    %1067 = vmatpush.msra.mxu0 0.0
    %1068 = vmatpush.msra.mxu0 0.0
    %1069 = vmatpush.msra.mxu0 0.0
    %1070 = vmatpush.msra.mxu0 0.0
    %1071 = vmatpush.msra.mxu0 0.0
    %1072 = vmatpush.msra.mxu0 %v1049
    %1073 = vmatpush.msra.mxu0 %v1047
    %1074 = vmatmul.f32.gmra.mxu0 %v1053
    %v1075 = vpop.f32.mrf.mxu0
    %v1076 = vadd.f32 0.0, %v1075
    %1077 = vmatmul.f32.gmra.mxu0 %v1056
    %v1078 = vpop.f32.mrf.mxu0
    %v1079 = vadd.f32 0.0, %v1078
    %1080 = vdwg.mxu0
    %1081 = vrot.lane.b32.xlu0 %v983, 120
    %v1082 = vpop.permute.xlu0 %1081
    %1083 = vrot.lane.b32.xlu0 %v985, 120
    %v1084 = vpop.permute.xlu0 %1083
    %1085 = vrot.lane.b32.xlu0 %v983, 88
    %v1086 = vpop.permute.xlu0 %1085
    %1087 = vrot.lane.b32.xlu0 %v985, 88
    %v1088 = vpop.permute.xlu0 %1087
    %v1089 = vsel %vm295, %v1082, 0
    %v1091 = vsel %vm295, %v1084, 0
    %v1093 = vsel %vm295, %v1086, 0
    %v1095 = vsel %vm295, %v1088, 0
    %1097 = vmatpush.xpose.msra.mxu0 0.0
    %1098 = vmatpush.xpose.msra.mxu0 0.0
    %1099 = vmatpush.xpose.msra.mxu0 0.0
    %1100 = vmatpush.xpose.msra.mxu0 0.0
    %1101 = vmatpush.xpose.msra.mxu0 0.0
    %1102 = vmatpush.xpose.msra.mxu0 0.0
    %1103 = vmatpush.xpose.msra.mxu0 0.0
    %1104 = vmatpush.xpose.msra.mxu0 0.0
    %1105 = vmatpush.xpose.msra.mxu0 0.0
    %1106 = vmatpush.xpose.msra.mxu0 0.0
    %1107 = vmatpush.xpose.msra.mxu0 0.0
    %1108 = vmatpush.xpose.msra.mxu0 0.0
    %1109 = vmatpush.xpose.msra.mxu0 0.0
    %1110 = vmatpush.xpose.msra.mxu0 0.0
    %1111 = vmatpush.xpose.msra.mxu0 %v1095
    %1112 = vmatpush.xpose.msra.mxu0 %v1093
    %1113 = vmatmul.f32.gmra.mxu0 %v1089
    %v1114 = vpop.f32.mrf.mxu0
    %v1115 = vadd.f32 %v203, %v1114
    %1116 = vmatmul.f32.gmra.mxu0 %v1091
    %v1117 = vpop.f32.mrf.mxu0
    %v1118 = vadd.f32 %v204, %v1117
    %1119 = vdwg.mxu0
    %v1120 = vsel %vm327, %v1115, -inf
    %1121 = vmax.xlane.f32.xlu0 %v1120
    %v1122 = vpop.xlane.xlu0 %1121
    %v1123 = vsel %vm327, %v1118, -inf
    %1124 = vmax.xlane.f32.xlu0 %v1123
    %v1125 = vpop.xlane.xlu0 %1124
    %v1126 = vsub.f32 %v1115, %v1122
    %v1127 = vsub.f32 %v1118, %v1125
    %v1128 = vmul.f32 %v1126, 1.442695
    %v1129 = vpow.pop %v1128
    %v1130 = vmul.f32 %v1127, 1.442695
    %v1131 = vpow.pop %v1130
    %v1132 = vsel %vm327, %v1129, 0.0
    %1133 = vadd.xlane.f32.xlu0 %v1132
    %v1134 = vpop.xlane.xlu0 %1133
    %v1135 = vsel %vm327, %v1131, 0.0
    %1136 = vadd.xlane.f32.xlu0 %v1135
    %v1137 = vpop.xlane.xlu0 %1136
    %v1138 = vrcp.pop %v1134
    %v1139 = vrcp.pop %v1137
    %v1140 = vmul.f32 %v1129, %v1138
    %v1141 = vmul.f32 %v1131, %v1139
    %1142 = vrot.lane.b32.xlu0 %v983, 56
    %v1143 = vpop.permute.xlu0 %1142
    %1144 = vrot.lane.b32.xlu0 %v985, 56
    %v1145 = vpop.permute.xlu0 %1144
    %v1149 = vsel %vm327, %v1140, 0
    %v1152 = vsel %vm327, %v1141, 0
    %1154 = vmatpush.msra.mxu0 0.0
    %1155 = vmatpush.msra.mxu0 0.0
    %1156 = vmatpush.msra.mxu0 0.0
    %1157 = vmatpush.msra.mxu0 0.0
    %1158 = vmatpush.msra.mxu0 0.0
    %1159 = vmatpush.msra.mxu0 0.0
    %1160 = vmatpush.msra.mxu0 0.0
    %1161 = vmatpush.msra.mxu0 0.0
    %1162 = vmatpush.msra.mxu0 0.0
    %1163 = vmatpush.msra.mxu0 0.0
    %1164 = vmatpush.msra.mxu0 0.0
    %1165 = vmatpush.msra.mxu0 0.0
    %1166 = vmatpush.msra.mxu0 0.0
    %1167 = vmatpush.msra.mxu0 0.0
    %1168 = vmatpush.msra.mxu0 %v1145
    %1169 = vmatpush.msra.mxu0 %v1143
    %1170 = vmatmul.f32.gmra.mxu0 %v1149
    %v1171 = vpop.f32.mrf.mxu0
    %v1172 = vadd.f32 0.0, %v1171
    %1173 = vmatmul.f32.gmra.mxu0 %v1152
    %v1174 = vpop.f32.mrf.mxu0
    %v1175 = vadd.f32 0.0, %v1174
    %1176 = vdwg.mxu0
    %1177 = vrot.lane.b32.xlu0 %v983, 112
    %v1178 = vpop.permute.xlu0 %1177
    %1179 = vrot.lane.b32.xlu0 %v985, 112
    %v1180 = vpop.permute.xlu0 %1179
    %1181 = vrot.lane.b32.xlu0 %v983, 80
    %v1182 = vpop.permute.xlu0 %1181
    %1183 = vrot.lane.b32.xlu0 %v985, 80
    %v1184 = vpop.permute.xlu0 %1183
    %v1185 = vsel %vm295, %v1178, 0
    %v1187 = vsel %vm295, %v1180, 0
    %v1189 = vsel %vm295, %v1182, 0
    %v1191 = vsel %vm295, %v1184, 0
    %1193 = vmatpush.xpose.msra.mxu0 0.0
    %1194 = vmatpush.xpose.msra.mxu0 0.0
    %1195 = vmatpush.xpose.msra.mxu0 0.0
    %1196 = vmatpush.xpose.msra.mxu0 0.0
    %1197 = vmatpush.xpose.msra.mxu0 0.0
    %1198 = vmatpush.xpose.msra.mxu0 0.0
    %1199 = vmatpush.xpose.msra.mxu0 0.0
    %1200 = vmatpush.xpose.msra.mxu0 0.0
    %1201 = vmatpush.xpose.msra.mxu0 0.0
    %1202 = vmatpush.xpose.msra.mxu0 0.0
    %1203 = vmatpush.xpose.msra.mxu0 0.0
    %1204 = vmatpush.xpose.msra.mxu0 0.0
    %1205 = vmatpush.xpose.msra.mxu0 0.0
    %1206 = vmatpush.xpose.msra.mxu0 0.0
    %1207 = vmatpush.xpose.msra.mxu0 %v1191
    %1208 = vmatpush.xpose.msra.mxu0 %v1189
    %1209 = vmatmul.f32.gmra.mxu0 %v1185
    %v1210 = vpop.f32.mrf.mxu0
    %v1211 = vadd.f32 %v203, %v1210
    %1212 = vmatmul.f32.gmra.mxu0 %v1187
    %v1213 = vpop.f32.mrf.mxu0
    %v1214 = vadd.f32 %v204, %v1213
    %1215 = vdwg.mxu0
    %v1216 = vsel %vm327, %v1211, -inf
    %1217 = vmax.xlane.f32.xlu0 %v1216
    %v1218 = vpop.xlane.xlu0 %1217
    %v1219 = vsel %vm327, %v1214, -inf
    %1220 = vmax.xlane.f32.xlu0 %v1219
    %v1221 = vpop.xlane.xlu0 %1220
    %v1222 = vsub.f32 %v1211, %v1218
    %v1223 = vsub.f32 %v1214, %v1221
    %v1224 = vmul.f32 %v1222, 1.442695
    %v1225 = vpow.pop %v1224
    %v1226 = vmul.f32 %v1223, 1.442695
    %v1227 = vpow.pop %v1226
    %v1228 = vsel %vm327, %v1225, 0.0
    %1229 = vadd.xlane.f32.xlu0 %v1228
    %v1230 = vpop.xlane.xlu0 %1229
    %v1231 = vsel %vm327, %v1227, 0.0
    %1232 = vadd.xlane.f32.xlu0 %v1231
    %v1233 = vpop.xlane.xlu0 %1232
    %v1234 = vrcp.pop %v1230
    %v1235 = vrcp.pop %v1233
    %v1236 = vmul.f32 %v1225, %v1234
    %v1237 = vmul.f32 %v1227, %v1235
    %1238 = vrot.lane.b32.xlu0 %v983, 48
    %v1239 = vpop.permute.xlu0 %1238
    %1240 = vrot.lane.b32.xlu0 %v985, 48
    %v1241 = vpop.permute.xlu0 %1240
    %v1245 = vsel %vm327, %v1236, 0
    %v1248 = vsel %vm327, %v1237, 0
    %1250 = vmatpush.msra.mxu0 0.0
    %1251 = vmatpush.msra.mxu0 0.0
    %1252 = vmatpush.msra.mxu0 0.0
    %1253 = vmatpush.msra.mxu0 0.0
    %1254 = vmatpush.msra.mxu0 0.0
    %1255 = vmatpush.msra.mxu0 0.0
    %1256 = vmatpush.msra.mxu0 0.0
    %1257 = vmatpush.msra.mxu0 0.0
    %1258 = vmatpush.msra.mxu0 0.0
    %1259 = vmatpush.msra.mxu0 0.0
    %1260 = vmatpush.msra.mxu0 0.0
    %1261 = vmatpush.msra.mxu0 0.0
    %1262 = vmatpush.msra.mxu0 0.0
    %1263 = vmatpush.msra.mxu0 0.0
    %1264 = vmatpush.msra.mxu0 %v1241
    %1265 = vmatpush.msra.mxu0 %v1239
    %1266 = vmatmul.f32.gmra.mxu0 %v1245
    %v1267 = vpop.f32.mrf.mxu0
    %v1268 = vadd.f32 0.0, %v1267
    %1269 = vmatmul.f32.gmra.mxu0 %v1248
    %v1270 = vpop.f32.mrf.mxu0
    %v1271 = vadd.f32 0.0, %v1270
    %1272 = vdwg.mxu0
    %1273 = vrot.lane.b32.xlu0 %v983, 104
    %v1274 = vpop.permute.xlu0 %1273
    %1275 = vrot.lane.b32.xlu0 %v985, 104
    %v1276 = vpop.permute.xlu0 %1275
    %1277 = vrot.lane.b32.xlu0 %v983, 72
    %v1278 = vpop.permute.xlu0 %1277
    %1279 = vrot.lane.b32.xlu0 %v985, 72
    %v1280 = vpop.permute.xlu0 %1279
    %v1281 = vsel %vm295, %v1274, 0
    %v1283 = vsel %vm295, %v1276, 0
    %v1285 = vsel %vm295, %v1278, 0
    %v1287 = vsel %vm295, %v1280, 0
    %1289 = vmatpush.xpose.msra.mxu0 0.0
    %1290 = vmatpush.xpose.msra.mxu0 0.0
    %1291 = vmatpush.xpose.msra.mxu0 0.0
    %1292 = vmatpush.xpose.msra.mxu0 0.0
    %1293 = vmatpush.xpose.msra.mxu0 0.0
    %1294 = vmatpush.xpose.msra.mxu0 0.0
    %1295 = vmatpush.xpose.msra.mxu0 0.0
    %1296 = vmatpush.xpose.msra.mxu0 0.0
    %1297 = vmatpush.xpose.msra.mxu0 0.0
    %1298 = vmatpush.xpose.msra.mxu0 0.0
    %1299 = vmatpush.xpose.msra.mxu0 0.0
    %1300 = vmatpush.xpose.msra.mxu0 0.0
    %1301 = vmatpush.xpose.msra.mxu0 0.0
    %1302 = vmatpush.xpose.msra.mxu0 0.0
    %1303 = vmatpush.xpose.msra.mxu0 %v1287
    %1304 = vmatpush.xpose.msra.mxu0 %v1285
    %1305 = vmatmul.f32.gmra.mxu0 %v1281
    %v1306 = vpop.f32.mrf.mxu0
    %v1307 = vadd.f32 %v203, %v1306
    %1308 = vmatmul.f32.gmra.mxu0 %v1283
    %v1309 = vpop.f32.mrf.mxu0
    %v1310 = vadd.f32 %v204, %v1309
    %1311 = vdwg.mxu0
    %v1312 = vsel %vm327, %v1307, -inf
    %1313 = vmax.xlane.f32.xlu0 %v1312
    %v1314 = vpop.xlane.xlu0 %1313
    %v1315 = vsel %vm327, %v1310, -inf
    %1316 = vmax.xlane.f32.xlu0 %v1315
    %v1317 = vpop.xlane.xlu0 %1316
    %v1318 = vsub.f32 %v1307, %v1314
    %v1319 = vsub.f32 %v1310, %v1317
    %v1320 = vmul.f32 %v1318, 1.442695
    %v1321 = vpow.pop %v1320
    %v1322 = vmul.f32 %v1319, 1.442695
    %v1323 = vpow.pop %v1322
    %v1324 = vsel %vm327, %v1321, 0.0
    %1325 = vadd.xlane.f32.xlu0 %v1324
    %v1326 = vpop.xlane.xlu0 %1325
    %v1327 = vsel %vm327, %v1323, 0.0
    %1328 = vadd.xlane.f32.xlu0 %v1327
    %v1329 = vpop.xlane.xlu0 %1328
    %v1330 = vrcp.pop %v1326
    %v1331 = vrcp.pop %v1329
    %v1332 = vmul.f32 %v1321, %v1330
    %v1333 = vmul.f32 %v1323, %v1331
    %1334 = vrot.lane.b32.xlu0 %v983, 40
    %v1335 = vpop.permute.xlu0 %1334
    %1336 = vrot.lane.b32.xlu0 %v985, 40
    %v1337 = vpop.permute.xlu0 %1336
    %v1341 = vsel %vm327, %v1332, 0
    %v1344 = vsel %vm327, %v1333, 0
    %1346 = vmatpush.msra.mxu0 0.0
    %1347 = vmatpush.msra.mxu0 0.0
    %1348 = vmatpush.msra.mxu0 0.0
    %1349 = vmatpush.msra.mxu0 0.0
    %1350 = vmatpush.msra.mxu0 0.0
    %1351 = vmatpush.msra.mxu0 0.0
    %1352 = vmatpush.msra.mxu0 0.0
    %1353 = vmatpush.msra.mxu0 0.0
    %1354 = vmatpush.msra.mxu0 0.0
    %1355 = vmatpush.msra.mxu0 0.0
    %1356 = vmatpush.msra.mxu0 0.0
    %1357 = vmatpush.msra.mxu0 0.0
    %1358 = vmatpush.msra.mxu0 0.0
    %1359 = vmatpush.msra.mxu0 0.0
    %1360 = vmatpush.msra.mxu0 %v1337
    %1361 = vmatpush.msra.mxu0 %v1335
    %1362 = vmatmul.f32.gmra.mxu0 %v1341
    %v1363 = vpop.f32.mrf.mxu0
    %v1364 = vadd.f32 0.0, %v1363
    %1365 = vmatmul.f32.gmra.mxu0 %v1344
    %v1366 = vpop.f32.mrf.mxu0
    %v1367 = vadd.f32 0.0, %v1366
    %1368 = vdwg.mxu0
    %1371 = vrot.lane.b32.xlu0 %v1172, 8
    %v1372 = vpop.permute.xlu0 %1371
    %1373 = vrot.lane.b32.xlu0 %v1175, 8
    %v1374 = vpop.permute.xlu0 %1373
    %1379 = vrot.lane.b32.xlu0 %v1268, 16
    %v1380 = vpop.permute.xlu0 %1379
    %1381 = vrot.lane.b32.xlu0 %v1271, 16
    %v1382 = vpop.permute.xlu0 %1381
    %1387 = vrot.lane.b32.xlu0 %v1364, 24
    %v1388 = vpop.permute.xlu0 %1387
    %1389 = vrot.lane.b32.xlu0 %v1367, 24
    %v1390 = vpop.permute.xlu0 %1389
    %v1393 = vsel %vm295, %v1076, %v1372
    %v1394 = vsel %vm295, %v1079, %v1374
    %v1395 = vsel %vm327, %v1393, %v1380
    %v1396 = vsel %vm327, %v1394, %v1382
    %v1397 = vsel %vm701, %v1395, %v1388
    %v1398 = vsel %vm701, %v1396, %v1390
    %s1399 = scalar_lea.vmem %s10, 32
    %v1400 = vld [vmem:[%s1399] sm:$0xff]
    %v1401 = vld [vmem:[%s1399 + $0x8] sm:$0xff]
    %v1402 = vld [vmem:[%s1399 + $0x10] sm:$0xff]
    %v1403 = vld [vmem:[%s1399 + $0x18] sm:$0xff]
    %v1404 = vpack.c.bf16 %v1398, %v1397
    %v1405 = vpack.c.bf16 %v1401, %v1400
    %v1406 = vpack.c.bf16 %v1403, %v1402
    %s1407 = scalar_lea.vmem %s11, 1
    %v1408 = vld [vmem:[%s1407] sm:$0x1]
    %v1410 = vperm.slane %v1408, 0
    %v1413 = vsel %vm139, %v1404, 0
    %1415 = vmatpush.bf16.msra.mxu0 0
    %1416 = vmatpush.bf16.msra.mxu0 0
    %1417 = vmatpush.bf16.msra.mxu0 0
    %1418 = vmatpush.bf16.msra.mxu0 0
    %1419 = vmatpush.bf16.msra.mxu0 0
    %1420 = vmatpush.bf16.msra.mxu0 0
    %1421 = vmatpush.bf16.msra.mxu0 %v1406
    %1422 = vmatpush.bf16.msra.mxu0 %v1405
    %1423 = vmatmul.bf16.gmra.mxu0 %v1413
    %v1424 = vpop.f32.mrf.mxu0
    %v1425 = vadd.f32 %v1410, %v1424
    %v1426 = vpop.f32.mrf.mxu0
    %v1427 = vadd.f32 %v1410, %v1426
    %1428 = vdwg.mxu0
    %v1429 = vadd.f32 %v894, %v1425
    %v1430 = vadd.f32 %v895, %v1427
    %s1431 = scalar_lea.vmem %s12, 1
    %v1432 = vld [vmem:[%s1431] sm:$0x1]
    %s1433 = scalar_lea.vmem %s13, 1
    %v1434 = vld [vmem:[%s1433] sm:$0x1]
    %v1435 = vsel %vm139, %v1429, 0.0
    %1436 = vadd.xlane.f32.xlu0 %v1435
    %v1437 = vpop.xlane.xlu0 %1436
    %v1438 = vsel %vm139, %v1430, 0.0
    %1439 = vadd.xlane.f32.xlu0 %v1438
    %v1440 = vpop.xlane.xlu0 %1439
    %v1441 = vmul.f32 %v1437, %v152
    %v1442 = vmul.f32 %v1440, %v152
    %v1443 = vsub.f32 %v1429, %v1441
    %v1444 = vsub.f32 %v1430, %v1442
    %v1445 = vmul.f32 %v1443, %v1443
    %v1446 = vmul.f32 %v1444, %v1444
    %v1447 = vsel %vm139, %v1445, 0.0
    %1448 = vadd.xlane.f32.xlu0 %v1447
    %v1449 = vpop.xlane.xlu0 %1448
    %v1450 = vsel %vm139, %v1446, 0.0
    %1451 = vadd.xlane.f32.xlu0 %v1450
    %v1452 = vpop.xlane.xlu0 %1451
    %v1453 = vmul.f32 %v1449, %v152
    %v1454 = vmul.f32 %v1452, %v152
    %v1455 = vadd.f32 %v1453, 1e-05
    %v1456 = vadd.f32 %v1454, 1e-05
    %v1457 = vrsqrt.pop %v1455
    %v1458 = vmul.f32 %v1457, %v1455
    %v1459 = vmul.f32 %v1458, %v1457
    %v1460 = vmul.f32 0.5, %v1459
    %v1461 = vsub.f32 1.5, %v1460
    %v1462 = vmul.f32 %v1457, %v1461
    %vm1463 = vweird.f32 %v1455
    %vm1464 = vweird.f32 %v1457
    %vm1465 = vmor %vm1463, %vm1464
    %v1466 = vsel %vm1465, %v1457, %v1462
    %v1467 = vrsqrt.pop %v1456
    %v1468 = vmul.f32 %v1467, %v1456
    %v1469 = vmul.f32 %v1468, %v1467
    %v1470 = vmul.f32 0.5, %v1469
    %v1471 = vsub.f32 1.5, %v1470
    %v1472 = vmul.f32 %v1467, %v1471
    %vm1473 = vweird.f32 %v1456
    %vm1474 = vweird.f32 %v1467
    %vm1475 = vmor %vm1473, %vm1474
    %v1476 = vsel %vm1475, %v1467, %v1472
    %v1477 = vmul.f32 %v1443, %v1466
    %v1478 = vmul.f32 %v1444, %v1476
    %v1480 = vperm.slane %v1432, 0
    %v1482 = vmul.f32 %v1477, %v1480
    %v1483 = vmul.f32 %v1478, %v1480
    %v1485 = vperm.slane %v1434, 0
    %v1487 = vadd.f32 %v1482, %v1485
    %v1488 = vadd.f32 %v1483, %v1485
    %s1489 = scalar_lea.vmem %s14, 32
    %v1490 = vld [vmem:[%s1489] sm:$0xff]
    %v1491 = vld [vmem:[%s1489 + $0x8] sm:$0xff]
    %v1492 = vld [vmem:[%s1489 + $0x10] sm:$0xff]
    %v1493 = vld [vmem:[%s1489 + $0x18] sm:$0xff]
    %v1494 = vpack.c.bf16 %v1488, %v1487
    %v1495 = vpack.c.bf16 %v1491, %v1490
    %v1496 = vpack.c.bf16 %v1493, %v1492
    %s1497 = scalar_lea.vmem %s15, 1
    %v1498 = vld [vmem:[%s1497] sm:$0x1]
    %v1500 = vperm.slane %v1498, 0
    %v1503 = vsel %vm139, %v1494, 0
    %1505 = vmatpush.bf16.msra.mxu0 0
    %1506 = vmatpush.bf16.msra.mxu0 0
    %1507 = vmatpush.bf16.msra.mxu0 0
    %1508 = vmatpush.bf16.msra.mxu0 0
    %1509 = vmatpush.bf16.msra.mxu0 0
    %1510 = vmatpush.bf16.msra.mxu0 0
    %1511 = vmatpush.bf16.msra.mxu0 %v1496
    %1512 = vmatpush.bf16.msra.mxu0 %v1495
    %1513 = vmatmul.bf16.gmra.mxu0 %v1503
    %v1514 = vpop.f32.mrf.mxu0
    %v1515 = vadd.f32 %v1500, %v1514
    %v1516 = vpop.f32.mrf.mxu0
    %v1517 = vadd.f32 %v1500, %v1516
    %1518 = vdwg.mxu0
    %v1519 = vmul.f32 %v1515, 1.702
    %v1520 = vmul.f32 %v1517, 1.702
    %v1521 = vxor.u32 %v1519, 2147483648
    %v1522 = vxor.u32 %v1520, 2147483648
    %v1523 = vmul.f32 %v1521, 1.442695
    %v1524 = vpow.pop %v1523
    %v1525 = vmul.f32 %v1522, 1.442695
    %v1526 = vpow.pop %v1525
    %v1527 = vadd.f32 %v1524, 1.0
    %v1528 = vadd.f32 %v1526, 1.0
    %v1529 = vrcp.pop %v1527
    %v1530 = vmul.f32 %v1527, %v1529
    %v1531 = vsub.f32 1.0, %v1530
    %v1532 = vmul.f32 %v1529, %v1531
    %v1533 = vadd.f32 %v1529, %v1532
    %vm1534 = vweird.f32 %v1527
    %vm1535 = vweird.f32 %v1529
    %vm1536 = vmor %vm1534, %vm1535
    %v1537 = vsel %vm1536, %v1529, %v1533
    %v1538 = vand.u32 2147483647, %v1527
    %vm1539 = vcmp.eq.f32.partialorder %v1538, 8.507059e+37
    %v1540 = vand.u32 %v1527, 2147483648
    %v1541 = vor.u32 1.1754944e-38, %v1540
    %v1542 = vsel %vm1539, %v1541, %v1537
    %v1543 = vmul.f32 1.0, %v1542
    %v1544 = vrcp.pop %v1528
    %v1545 = vmul.f32 %v1528, %v1544
    %v1546 = vsub.f32 1.0, %v1545
    %v1547 = vmul.f32 %v1544, %v1546
    %v1548 = vadd.f32 %v1544, %v1547
    %vm1549 = vweird.f32 %v1528
    %vm1550 = vweird.f32 %v1544
    %vm1551 = vmor %vm1549, %vm1550
    %v1552 = vsel %vm1551, %v1544, %v1548
    %v1553 = vand.u32 2147483647, %v1528
    %vm1554 = vcmp.eq.f32.partialorder %v1553, 8.507059e+37
    %v1555 = vand.u32 %v1528, 2147483648
    %v1556 = vor.u32 1.1754944e-38, %v1555
    %v1557 = vsel %vm1554, %v1556, %v1552
    %v1558 = vmul.f32 1.0, %v1557
    %v1559 = vmul.f32 %v1515, %v1543
    %v1560 = vmul.f32 %v1517, %v1558
    %s1561 = scalar_lea.vmem %s16, 64
    %v1562 = vld [vmem:[%s1561] sm:$0xff]
    %v1563 = vld [vmem:[%s1561 + $0x8] sm:$0xff]
    %v1564 = vld [vmem:[%s1561 + $0x10] sm:$0xff]
    %v1565 = vld [vmem:[%s1561 + $0x18] sm:$0xff]
    %v1566 = vld [vmem:[%s1561 + $0x20] sm:$0xff]
    %v1567 = vld [vmem:[%s1561 + $0x28] sm:$0xff]
    %v1568 = vld [vmem:[%s1561 + $0x30] sm:$0xff]
    %v1569 = vld [vmem:[%s1561 + $0x38] sm:$0xff]
    %v1570 = vpack.c.bf16 %v1560, %v1559
    %v1571 = vpack.c.bf16 %v1563, %v1562
    %v1572 = vpack.c.bf16 %v1565, %v1564
    %v1573 = vpack.c.bf16 %v1567, %v1566
    %v1574 = vpack.c.bf16 %v1569, %v1568
    %s1575 = scalar_lea.vmem %s17, 1
    %v1576 = vld [vmem:[%s1575] sm:$0x1]
    %v1578 = vperm.slane %v1576, 0
    %v1581 = vsel %vm105, %v1570, 0
    %1583 = vmatpush.bf16.msra.mxu0 0
    %1584 = vmatpush.bf16.msra.mxu0 0
    %1585 = vmatpush.bf16.msra.mxu0 0
    %1586 = vmatpush.bf16.msra.mxu0 0
    %1587 = vmatpush.bf16.msra.mxu0 %v1574
    %1588 = vmatpush.bf16.msra.mxu0 %v1573
    %1589 = vmatpush.bf16.msra.mxu0 %v1572
    %1590 = vmatpush.bf16.msra.mxu0 %v1571
    %1591 = vmatmul.bf16.gmra.mxu0 %v1581
    %v1592 = vpop.f32.mrf.mxu0
    %v1593 = vadd.f32 %v1578, %v1592
    %v1594 = vpop.f32.mrf.mxu0
    %v1595 = vadd.f32 %v1578, %v1594
    %1596 = vdwg.mxu0
    %v1597 = vadd.f32 %v1429, %v1593
    %v1598 = vadd.f32 %v1430, %v1595
    %s1599 = scalar_lea.vmem [#allocation2], 32
    %1600 = vst.msk [vmem:[%s1599] sm:$0xff] %vm139, %v1597
    %1601 = vst.msk [vmem:[%s1599 + $0x8] sm:$0xff] %vm139, %v1598
    %s1602 = scalar_lea.vmem %s6, 2
    %v1603 = vld [vmem:[%s1602] sm:$0x1]
    %s1604 = scalar_lea.vmem %s7, 2
    %v1605 = vld [vmem:[%s1604] sm:$0x1]
    %v1606 = vsel %vm139, %v1597, 0.0
    %1607 = vadd.xlane.f32.xlu0 %v1606
    %v1608 = vpop.xlane.xlu0 %1607
    %v1609 = vsel %vm139, %v1598, 0.0
    %1610 = vadd.xlane.f32.xlu0 %v1609
    %v1611 = vpop.xlane.xlu0 %1610
    %v1612 = vmul.f32 %v1608, %v152
    %v1613 = vmul.f32 %v1611, %v152
    %v1614 = vsub.f32 %v1597, %v1612
    %v1615 = vsub.f32 %v1598, %v1613
    %v1616 = vmul.f32 %v1614, %v1614
    %v1617 = vmul.f32 %v1615, %v1615
    %v1618 = vsel %vm139, %v1616, 0.0
    %1619 = vadd.xlane.f32.xlu0 %v1618
    %v1620 = vpop.xlane.xlu0 %1619
    %v1621 = vsel %vm139, %v1617, 0.0
    %1622 = vadd.xlane.f32.xlu0 %v1621
    %v1623 = vpop.xlane.xlu0 %1622
    %v1624 = vmul.f32 %v1620, %v152
    %v1625 = vmul.f32 %v1623, %v152
    %v1626 = vadd.f32 %v1624, 1e-05
    %v1627 = vadd.f32 %v1625, 1e-05
    %v1628 = vrsqrt.pop %v1626
    %v1629 = vmul.f32 %v1628, %v1626
    %v1630 = vmul.f32 %v1629, %v1628
    %v1631 = vmul.f32 0.5, %v1630
    %v1632 = vsub.f32 1.5, %v1631
    %v1633 = vmul.f32 %v1628, %v1632
    %vm1634 = vweird.f32 %v1626
    %vm1635 = vweird.f32 %v1628
    %vm1636 = vmor %vm1634, %vm1635
    %v1637 = vsel %vm1636, %v1628, %v1633
    %v1638 = vrsqrt.pop %v1627
    %v1639 = vmul.f32 %v1638, %v1627
    %v1640 = vmul.f32 %v1639, %v1638
    %v1641 = vmul.f32 0.5, %v1640
    %v1642 = vsub.f32 1.5, %v1641
    %v1643 = vmul.f32 %v1638, %v1642
    %vm1644 = vweird.f32 %v1627
    %vm1645 = vweird.f32 %v1638
    %vm1646 = vmor %vm1644, %vm1645
    %v1647 = vsel %vm1646, %v1638, %v1643
    %v1648 = vmul.f32 %v1614, %v1637
    %v1649 = vmul.f32 %v1615, %v1647
    %v1651 = vperm.slane %v1603, 0
    %v1653 = vmul.f32 %v1648, %v1651
    %v1654 = vmul.f32 %v1649, %v1651
    %v1656 = vperm.slane %v1605, 0
    %v1658 = vadd.f32 %v1653, %v1656
    %v1659 = vadd.f32 %v1654, %v1656
    %s1660 = scalar_lea.vmem %s8, 64
    %v1661 = vld [vmem:[%s1660] sm:$0xff]
    %v1662 = vld [vmem:[%s1660 + $0x8] sm:$0xff]
    %v1663 = vld [vmem:[%s1660 + $0x10] sm:$0xff]
    %v1664 = vld [vmem:[%s1660 + $0x18] sm:$0xff]
    %v1665 = vpack.c.bf16 %v1659, %v1658
    %v1666 = vpack.c.bf16 %v1662, %v1661
    %v1667 = vpack.c.bf16 %v1664, %v1663
    %s1668 = scalar_lea.vmem %s9, 2
    %v1669 = vld [vmem:[%s1668] sm:$0x1]
    %v1671 = vperm.slane %v1669, 0
    %v1674 = vsel %vm139, %v1665, 0
    %1676 = vmatpush.bf16.msra.mxu0 0
    %1677 = vmatpush.bf16.msra.mxu0 0
    %1678 = vmatpush.bf16.msra.mxu0 0
    %1679 = vmatpush.bf16.msra.mxu0 0
    %1680 = vmatpush.bf16.msra.mxu0 0
    %1681 = vmatpush.bf16.msra.mxu0 0
    %1682 = vmatpush.bf16.msra.mxu0 %v1667
    %1683 = vmatpush.bf16.msra.mxu0 %v1666
    %1684 = vmatmul.bf16.gmra.mxu0 %v1674
    %v1685 = vpop.f32.mrf.mxu0
    %v1686 = vadd.f32 %v1671, %v1685
    %v1687 = vpop.f32.mrf.mxu0
    %v1688 = vadd.f32 %v1671, %v1687
    %1689 = vdwg.mxu0
    %1692 = vrot.lane.b32.xlu0 %v1686, 96
    %v1693 = vpop.permute.xlu0 %1692
    %1694 = vrot.lane.b32.xlu0 %v1688, 96
    %v1695 = vpop.permute.xlu0 %1694
    %v1696 = vsel %vm295, %v1686, 0
    %v1698 = vsel %vm295, %v1688, 0
    %v1700 = vsel %vm295, %v1693, 0
    %v1702 = vsel %vm295, %v1695, 0
    %1704 = vmatpush.xpose.msra.mxu0 0.0
    %1705 = vmatpush.xpose.msra.mxu0 0.0
    %1706 = vmatpush.xpose.msra.mxu0 0.0
    %1707 = vmatpush.xpose.msra.mxu0 0.0
    %1708 = vmatpush.xpose.msra.mxu0 0.0
    %1709 = vmatpush.xpose.msra.mxu0 0.0
    %1710 = vmatpush.xpose.msra.mxu0 0.0
    %1711 = vmatpush.xpose.msra.mxu0 0.0
    %1712 = vmatpush.xpose.msra.mxu0 0.0
    %1713 = vmatpush.xpose.msra.mxu0 0.0
    %1714 = vmatpush.xpose.msra.mxu0 0.0
    %1715 = vmatpush.xpose.msra.mxu0 0.0
    %1716 = vmatpush.xpose.msra.mxu0 0.0
    %1717 = vmatpush.xpose.msra.mxu0 0.0
    %1718 = vmatpush.xpose.msra.mxu0 %v1702
    %1719 = vmatpush.xpose.msra.mxu0 %v1700
    %1720 = vmatmul.f32.gmra.mxu0 %v1696
    %v1721 = vpop.f32.mrf.mxu0
    %v1722 = vadd.f32 %v203, %v1721
    %1723 = vmatmul.f32.gmra.mxu0 %v1698
    %v1724 = vpop.f32.mrf.mxu0
    %v1725 = vadd.f32 %v204, %v1724
    %1726 = vdwg.mxu0
    %v1727 = vsel %vm327, %v1722, -inf
    %1728 = vmax.xlane.f32.xlu0 %v1727
    %v1729 = vpop.xlane.xlu0 %1728
    %v1730 = vsel %vm327, %v1725, -inf
    %1731 = vmax.xlane.f32.xlu0 %v1730
    %v1732 = vpop.xlane.xlu0 %1731
    %v1733 = vsub.f32 %v1722, %v1729
    %v1734 = vsub.f32 %v1725, %v1732
    %v1735 = vmul.f32 %v1733, 1.442695
    %v1736 = vpow.pop %v1735
    %v1737 = vmul.f32 %v1734, 1.442695
    %v1738 = vpow.pop %v1737
    %v1739 = vsel %vm327, %v1736, 0.0
    %1740 = vadd.xlane.f32.xlu0 %v1739
    %v1741 = vpop.xlane.xlu0 %1740
    %v1742 = vsel %vm327, %v1738, 0.0
    %1743 = vadd.xlane.f32.xlu0 %v1742
    %v1744 = vpop.xlane.xlu0 %1743
    %v1745 = vrcp.pop %v1741
    %v1746 = vrcp.pop %v1744
    %v1747 = vmul.f32 %v1736, %v1745
    %v1748 = vmul.f32 %v1738, %v1746
    %1749 = vrot.lane.b32.xlu0 %v1686, 64
    %v1750 = vpop.permute.xlu0 %1749
    %1751 = vrot.lane.b32.xlu0 %v1688, 64
    %v1752 = vpop.permute.xlu0 %1751
    %v1756 = vsel %vm327, %v1747, 0
    %v1759 = vsel %vm327, %v1748, 0
    %1761 = vmatpush.msra.mxu0 0.0
    %1762 = vmatpush.msra.mxu0 0.0
    %1763 = vmatpush.msra.mxu0 0.0
    %1764 = vmatpush.msra.mxu0 0.0
    %1765 = vmatpush.msra.mxu0 0.0
    %1766 = vmatpush.msra.mxu0 0.0
    %1767 = vmatpush.msra.mxu0 0.0
    %1768 = vmatpush.msra.mxu0 0.0
    %1769 = vmatpush.msra.mxu0 0.0
    %1770 = vmatpush.msra.mxu0 0.0
    %1771 = vmatpush.msra.mxu0 0.0
    %1772 = vmatpush.msra.mxu0 0.0
    %1773 = vmatpush.msra.mxu0 0.0
    %1774 = vmatpush.msra.mxu0 0.0
    %1775 = vmatpush.msra.mxu0 %v1752
    %1776 = vmatpush.msra.mxu0 %v1750
    %1777 = vmatmul.f32.gmra.mxu0 %v1756
    %v1778 = vpop.f32.mrf.mxu0
    %v1779 = vadd.f32 0.0, %v1778
    %1780 = vmatmul.f32.gmra.mxu0 %v1759
    %v1781 = vpop.f32.mrf.mxu0
    %v1782 = vadd.f32 0.0, %v1781
    %1783 = vdwg.mxu0
    %1784 = vrot.lane.b32.xlu0 %v1686, 120
    %v1785 = vpop.permute.xlu0 %1784
    %1786 = vrot.lane.b32.xlu0 %v1688, 120
    %v1787 = vpop.permute.xlu0 %1786
    %1788 = vrot.lane.b32.xlu0 %v1686, 88
    %v1789 = vpop.permute.xlu0 %1788
    %1790 = vrot.lane.b32.xlu0 %v1688, 88
    %v1791 = vpop.permute.xlu0 %1790
    %v1792 = vsel %vm295, %v1785, 0
    %v1794 = vsel %vm295, %v1787, 0
    %v1796 = vsel %vm295, %v1789, 0
    %v1798 = vsel %vm295, %v1791, 0
    %1800 = vmatpush.xpose.msra.mxu0 0.0
    %1801 = vmatpush.xpose.msra.mxu0 0.0
    %1802 = vmatpush.xpose.msra.mxu0 0.0
    %1803 = vmatpush.xpose.msra.mxu0 0.0
    %1804 = vmatpush.xpose.msra.mxu0 0.0
    %1805 = vmatpush.xpose.msra.mxu0 0.0
    %1806 = vmatpush.xpose.msra.mxu0 0.0
    %1807 = vmatpush.xpose.msra.mxu0 0.0
    %1808 = vmatpush.xpose.msra.mxu0 0.0
    %1809 = vmatpush.xpose.msra.mxu0 0.0
    %1810 = vmatpush.xpose.msra.mxu0 0.0
    %1811 = vmatpush.xpose.msra.mxu0 0.0
    %1812 = vmatpush.xpose.msra.mxu0 0.0
    %1813 = vmatpush.xpose.msra.mxu0 0.0
    %1814 = vmatpush.xpose.msra.mxu0 %v1798
    %1815 = vmatpush.xpose.msra.mxu0 %v1796
    %1816 = vmatmul.f32.gmra.mxu0 %v1792
    %v1817 = vpop.f32.mrf.mxu0
    %v1818 = vadd.f32 %v203, %v1817
    %1819 = vmatmul.f32.gmra.mxu0 %v1794
    %v1820 = vpop.f32.mrf.mxu0
    %v1821 = vadd.f32 %v204, %v1820
    %1822 = vdwg.mxu0
    %v1823 = vsel %vm327, %v1818, -inf
    %1824 = vmax.xlane.f32.xlu0 %v1823
    %v1825 = vpop.xlane.xlu0 %1824
    %v1826 = vsel %vm327, %v1821, -inf
    %1827 = vmax.xlane.f32.xlu0 %v1826
    %v1828 = vpop.xlane.xlu0 %1827
    %v1829 = vsub.f32 %v1818, %v1825
    %v1830 = vsub.f32 %v1821, %v1828
    %v1831 = vmul.f32 %v1829, 1.442695
    %v1832 = vpow.pop %v1831
    %v1833 = vmul.f32 %v1830, 1.442695
    %v1834 = vpow.pop %v1833
    %v1835 = vsel %vm327, %v1832, 0.0
    %1836 = vadd.xlane.f32.xlu0 %v1835
    %v1837 = vpop.xlane.xlu0 %1836
    %v1838 = vsel %vm327, %v1834, 0.0
    %1839 = vadd.xlane.f32.xlu0 %v1838
    %v1840 = vpop.xlane.xlu0 %1839
    %v1841 = vrcp.pop %v1837
    %v1842 = vrcp.pop %v1840
    %v1843 = vmul.f32 %v1832, %v1841
    %v1844 = vmul.f32 %v1834, %v1842
    %1845 = vrot.lane.b32.xlu0 %v1686, 56
    %v1846 = vpop.permute.xlu0 %1845
    %1847 = vrot.lane.b32.xlu0 %v1688, 56
    %v1848 = vpop.permute.xlu0 %1847
    %v1852 = vsel %vm327, %v1843, 0
    %v1855 = vsel %vm327, %v1844, 0
    %1857 = vmatpush.msra.mxu0 0.0
    %1858 = vmatpush.msra.mxu0 0.0
    %1859 = vmatpush.msra.mxu0 0.0
    %1860 = vmatpush.msra.mxu0 0.0
    %1861 = vmatpush.msra.mxu0 0.0
    %1862 = vmatpush.msra.mxu0 0.0
    %1863 = vmatpush.msra.mxu0 0.0
    %1864 = vmatpush.msra.mxu0 0.0
    %1865 = vmatpush.msra.mxu0 0.0
    %1866 = vmatpush.msra.mxu0 0.0
    %1867 = vmatpush.msra.mxu0 0.0
    %1868 = vmatpush.msra.mxu0 0.0
    %1869 = vmatpush.msra.mxu0 0.0
    %1870 = vmatpush.msra.mxu0 0.0
    %1871 = vmatpush.msra.mxu0 %v1848
    %1872 = vmatpush.msra.mxu0 %v1846
    %1873 = vmatmul.f32.gmra.mxu0 %v1852
    %v1874 = vpop.f32.mrf.mxu0
    %v1875 = vadd.f32 0.0, %v1874
    %1876 = vmatmul.f32.gmra.mxu0 %v1855
    %v1877 = vpop.f32.mrf.mxu0
    %v1878 = vadd.f32 0.0, %v1877
    %1879 = vdwg.mxu0
    %1880 = vrot.lane.b32.xlu0 %v1686, 112
    %v1881 = vpop.permute.xlu0 %1880
    %1882 = vrot.lane.b32.xlu0 %v1688, 112
    %v1883 = vpop.permute.xlu0 %1882
    %1884 = vrot.lane.b32.xlu0 %v1686, 80
    %v1885 = vpop.permute.xlu0 %1884
    %1886 = vrot.lane.b32.xlu0 %v1688, 80
    %v1887 = vpop.permute.xlu0 %1886
    %v1888 = vsel %vm295, %v1881, 0
    %v1890 = vsel %vm295, %v1883, 0
    %v1892 = vsel %vm295, %v1885, 0
    %v1894 = vsel %vm295, %v1887, 0
    %1896 = vmatpush.xpose.msra.mxu0 0.0
    %1897 = vmatpush.xpose.msra.mxu0 0.0
    %1898 = vmatpush.xpose.msra.mxu0 0.0
    %1899 = vmatpush.xpose.msra.mxu0 0.0
    %1900 = vmatpush.xpose.msra.mxu0 0.0
    %1901 = vmatpush.xpose.msra.mxu0 0.0
    %1902 = vmatpush.xpose.msra.mxu0 0.0
    %1903 = vmatpush.xpose.msra.mxu0 0.0
    %1904 = vmatpush.xpose.msra.mxu0 0.0
    %1905 = vmatpush.xpose.msra.mxu0 0.0
    %1906 = vmatpush.xpose.msra.mxu0 0.0
    %1907 = vmatpush.xpose.msra.mxu0 0.0
    %1908 = vmatpush.xpose.msra.mxu0 0.0
    %1909 = vmatpush.xpose.msra.mxu0 0.0
    %1910 = vmatpush.xpose.msra.mxu0 %v1894
    %1911 = vmatpush.xpose.msra.mxu0 %v1892
    %1912 = vmatmul.f32.gmra.mxu0 %v1888
    %v1913 = vpop.f32.mrf.mxu0
    %v1914 = vadd.f32 %v203, %v1913
    %1915 = vmatmul.f32.gmra.mxu0 %v1890
    %v1916 = vpop.f32.mrf.mxu0
    %v1917 = vadd.f32 %v204, %v1916
    %1918 = vdwg.mxu0
    %v1919 = vsel %vm327, %v1914, -inf
    %1920 = vmax.xlane.f32.xlu0 %v1919
    %v1921 = vpop.xlane.xlu0 %1920
    %v1922 = vsel %vm327, %v1917, -inf
    %1923 = vmax.xlane.f32.xlu0 %v1922
    %v1924 = vpop.xlane.xlu0 %1923
    %v1925 = vsub.f32 %v1914, %v1921
    %v1926 = vsub.f32 %v1917, %v1924
    %v1927 = vmul.f32 %v1925, 1.442695
    %v1928 = vpow.pop %v1927
    %v1929 = vmul.f32 %v1926, 1.442695
    %v1930 = vpow.pop %v1929
    %v1931 = vsel %vm327, %v1928, 0.0
    %1932 = vadd.xlane.f32.xlu0 %v1931
    %v1933 = vpop.xlane.xlu0 %1932
    %v1934 = vsel %vm327, %v1930, 0.0
    %1935 = vadd.xlane.f32.xlu0 %v1934
    %v1936 = vpop.xlane.xlu0 %1935
    %v1937 = vrcp.pop %v1933
    %v1938 = vrcp.pop %v1936
    %v1939 = vmul.f32 %v1928, %v1937
    %v1940 = vmul.f32 %v1930, %v1938
    %1941 = vrot.lane.b32.xlu0 %v1686, 48
    %v1942 = vpop.permute.xlu0 %1941
    %1943 = vrot.lane.b32.xlu0 %v1688, 48
    %v1944 = vpop.permute.xlu0 %1943
    %v1948 = vsel %vm327, %v1939, 0
    %v1951 = vsel %vm327, %v1940, 0
    %1953 = vmatpush.msra.mxu0 0.0
    %1954 = vmatpush.msra.mxu0 0.0
    %1955 = vmatpush.msra.mxu0 0.0
    %1956 = vmatpush.msra.mxu0 0.0
    %1957 = vmatpush.msra.mxu0 0.0
    %1958 = vmatpush.msra.mxu0 0.0
    %1959 = vmatpush.msra.mxu0 0.0
    %1960 = vmatpush.msra.mxu0 0.0
    %1961 = vmatpush.msra.mxu0 0.0
    %1962 = vmatpush.msra.mxu0 0.0
    %1963 = vmatpush.msra.mxu0 0.0
    %1964 = vmatpush.msra.mxu0 0.0
    %1965 = vmatpush.msra.mxu0 0.0
    %1966 = vmatpush.msra.mxu0 0.0
    %1967 = vmatpush.msra.mxu0 %v1944
    %1968 = vmatpush.msra.mxu0 %v1942
    %1969 = vmatmul.f32.gmra.mxu0 %v1948
    %v1970 = vpop.f32.mrf.mxu0
    %v1971 = vadd.f32 0.0, %v1970
    %1972 = vmatmul.f32.gmra.mxu0 %v1951
    %v1973 = vpop.f32.mrf.mxu0
    %v1974 = vadd.f32 0.0, %v1973
    %1975 = vdwg.mxu0
    %1976 = vrot.lane.b32.xlu0 %v1686, 104
    %v1977 = vpop.permute.xlu0 %1976
    %1978 = vrot.lane.b32.xlu0 %v1688, 104
    %v1979 = vpop.permute.xlu0 %1978
    %1980 = vrot.lane.b32.xlu0 %v1686, 72
    %v1981 = vpop.permute.xlu0 %1980
    %1982 = vrot.lane.b32.xlu0 %v1688, 72
    %v1983 = vpop.permute.xlu0 %1982
    %v1984 = vsel %vm295, %v1977, 0
    %v1986 = vsel %vm295, %v1979, 0
    %v1988 = vsel %vm295, %v1981, 0
    %v1990 = vsel %vm295, %v1983, 0
    %1992 = vmatpush.xpose.msra.mxu0 0.0
    %1993 = vmatpush.xpose.msra.mxu0 0.0
    %1994 = vmatpush.xpose.msra.mxu0 0.0
    %1995 = vmatpush.xpose.msra.mxu0 0.0
    %1996 = vmatpush.xpose.msra.mxu0 0.0
    %1997 = vmatpush.xpose.msra.mxu0 0.0
    %1998 = vmatpush.xpose.msra.mxu0 0.0
    %1999 = vmatpush.xpose.msra.mxu0 0.0
    %2000 = vmatpush.xpose.msra.mxu0 0.0
    %2001 = vmatpush.xpose.msra.mxu0 0.0
    %2002 = vmatpush.xpose.msra.mxu0 0.0
    %2003 = vmatpush.xpose.msra.mxu0 0.0
    %2004 = vmatpush.xpose.msra.mxu0 0.0
    %2005 = vmatpush.xpose.msra.mxu0 0.0
    %2006 = vmatpush.xpose.msra.mxu0 %v1990
    %2007 = vmatpush.xpose.msra.mxu0 %v1988
    %2008 = vmatmul.f32.gmra.mxu0 %v1984
    %v2009 = vpop.f32.mrf.mxu0
    %v2010 = vadd.f32 %v203, %v2009
    %2011 = vmatmul.f32.gmra.mxu0 %v1986
    %v2012 = vpop.f32.mrf.mxu0
    %v2013 = vadd.f32 %v204, %v2012
    %2014 = vdwg.mxu0
    %v2015 = vsel %vm327, %v2010, -inf
    %2016 = vmax.xlane.f32.xlu0 %v2015
    %v2017 = vpop.xlane.xlu0 %2016
    %v2018 = vsel %vm327, %v2013, -inf
    %2019 = vmax.xlane.f32.xlu0 %v2018
    %v2020 = vpop.xlane.xlu0 %2019
    %v2021 = vsub.f32 %v2010, %v2017
    %v2022 = vsub.f32 %v2013, %v2020
    %v2023 = vmul.f32 %v2021, 1.442695
    %v2024 = vpow.pop %v2023
    %v2025 = vmul.f32 %v2022, 1.442695
    %v2026 = vpow.pop %v2025
    %v2027 = vsel %vm327, %v2024, 0.0
    %2028 = vadd.xlane.f32.xlu0 %v2027
    %v2029 = vpop.xlane.xlu0 %2028
    %v2030 = vsel %vm327, %v2026, 0.0
    %2031 = vadd.xlane.f32.xlu0 %v2030
    %v2032 = vpop.xlane.xlu0 %2031
    %v2033 = vrcp.pop %v2029
    %v2034 = vrcp.pop %v2032
    %v2035 = vmul.f32 %v2024, %v2033
    %v2036 = vmul.f32 %v2026, %v2034
    %2037 = vrot.lane.b32.xlu0 %v1686, 40
    %v2038 = vpop.permute.xlu0 %2037
    %2039 = vrot.lane.b32.xlu0 %v1688, 40
    %v2040 = vpop.permute.xlu0 %2039
    %v2044 = vsel %vm327, %v2035, 0
    %v2047 = vsel %vm327, %v2036, 0
    %2049 = vmatpush.msra.mxu0 0.0
    %2050 = vmatpush.msra.mxu0 0.0
    %2051 = vmatpush.msra.mxu0 0.0
    %2052 = vmatpush.msra.mxu0 0.0
    %2053 = vmatpush.msra.mxu0 0.0
    %2054 = vmatpush.msra.mxu0 0.0
    %2055 = vmatpush.msra.mxu0 0.0
    %2056 = vmatpush.msra.mxu0 0.0
    %2057 = vmatpush.msra.mxu0 0.0
    %2058 = vmatpush.msra.mxu0 0.0
    %2059 = vmatpush.msra.mxu0 0.0
    %2060 = vmatpush.msra.mxu0 0.0
    %2061 = vmatpush.msra.mxu0 0.0
    %2062 = vmatpush.msra.mxu0 0.0
    %2063 = vmatpush.msra.mxu0 %v2040
    %2064 = vmatpush.msra.mxu0 %v2038
    %2065 = vmatmul.f32.gmra.mxu0 %v2044
    %v2066 = vpop.f32.mrf.mxu0
    %v2067 = vadd.f32 0.0, %v2066
    %2068 = vmatmul.f32.gmra.mxu0 %v2047
    %v2069 = vpop.f32.mrf.mxu0
    %v2070 = vadd.f32 0.0, %v2069
    %2071 = vdwg.mxu0
    %2074 = vrot.lane.b32.xlu0 %v1875, 8
    %v2075 = vpop.permute.xlu0 %2074
    %2076 = vrot.lane.b32.xlu0 %v1878, 8
    %v2077 = vpop.permute.xlu0 %2076
    %2082 = vrot.lane.b32.xlu0 %v1971, 16
    %v2083 = vpop.permute.xlu0 %2082
    %2084 = vrot.lane.b32.xlu0 %v1974, 16
    %v2085 = vpop.permute.xlu0 %2084
    %2090 = vrot.lane.b32.xlu0 %v2067, 24
    %v2091 = vpop.permute.xlu0 %2090
    %2092 = vrot.lane.b32.xlu0 %v2070, 24
    %v2093 = vpop.permute.xlu0 %2092
    %v2096 = vsel %vm295, %v1779, %v2075
    %v2097 = vsel %vm295, %v1782, %v2077
    %v2098 = vsel %vm327, %v2096, %v2083
    %v2099 = vsel %vm327, %v2097, %v2085
    %v2100 = vsel %vm701, %v2098, %v2091
    %v2101 = vsel %vm701, %v2099, %v2093
    %s2102 = scalar_lea.vmem %s10, 64
    %v2103 = vld [vmem:[%s2102] sm:$0xff]
    %v2104 = vld [vmem:[%s2102 + $0x8] sm:$0xff]
    %v2105 = vld [vmem:[%s2102 + $0x10] sm:$0xff]
    %v2106 = vld [vmem:[%s2102 + $0x18] sm:$0xff]
    %v2107 = vpack.c.bf16 %v2101, %v2100
    %v2108 = vpack.c.bf16 %v2104, %v2103
    %v2109 = vpack.c.bf16 %v2106, %v2105
    %s2110 = scalar_lea.vmem %s11, 2
    %v2111 = vld [vmem:[%s2110] sm:$0x1]
    %v2113 = vperm.slane %v2111, 0
    %v2116 = vsel %vm139, %v2107, 0
    %2118 = vmatpush.bf16.msra.mxu0 0
    %2119 = vmatpush.bf16.msra.mxu0 0
    %2120 = vmatpush.bf16.msra.mxu0 0
    %2121 = vmatpush.bf16.msra.mxu0 0
    %2122 = vmatpush.bf16.msra.mxu0 0
    %2123 = vmatpush.bf16.msra.mxu0 0
    %2124 = vmatpush.bf16.msra.mxu0 %v2109
    %2125 = vmatpush.bf16.msra.mxu0 %v2108
    %2126 = vmatmul.bf16.gmra.mxu0 %v2116
    %v2127 = vpop.f32.mrf.mxu0
    %v2128 = vadd.f32 %v2113, %v2127
    %v2129 = vpop.f32.mrf.mxu0
    %v2130 = vadd.f32 %v2113, %v2129
    %2131 = vdwg.mxu0
    %v2132 = vadd.f32 %v1597, %v2128
    %v2133 = vadd.f32 %v1598, %v2130
    %s2134 = scalar_lea.vmem %s12, 2
    %v2135 = vld [vmem:[%s2134] sm:$0x1]
    %s2136 = scalar_lea.vmem %s13, 2
    %v2137 = vld [vmem:[%s2136] sm:$0x1]
    %v2138 = vsel %vm139, %v2132, 0.0
    %2139 = vadd.xlane.f32.xlu0 %v2138
    %v2140 = vpop.xlane.xlu0 %2139
    %v2141 = vsel %vm139, %v2133, 0.0
    %2142 = vadd.xlane.f32.xlu0 %v2141
    %v2143 = vpop.xlane.xlu0 %2142
    %v2144 = vmul.f32 %v2140, %v152
    %v2145 = vmul.f32 %v2143, %v152
    %v2146 = vsub.f32 %v2132, %v2144
    %v2147 = vsub.f32 %v2133, %v2145
    %v2148 = vmul.f32 %v2146, %v2146
    %v2149 = vmul.f32 %v2147, %v2147
    %v2150 = vsel %vm139, %v2148, 0.0
    %2151 = vadd.xlane.f32.xlu0 %v2150
    %v2152 = vpop.xlane.xlu0 %2151
    %v2153 = vsel %vm139, %v2149, 0.0
    %2154 = vadd.xlane.f32.xlu0 %v2153
    %v2155 = vpop.xlane.xlu0 %2154
    %v2156 = vmul.f32 %v2152, %v152
    %v2157 = vmul.f32 %v2155, %v152
    %v2158 = vadd.f32 %v2156, 1e-05
    %v2159 = vadd.f32 %v2157, 1e-05
    %v2160 = vrsqrt.pop %v2158
    %v2161 = vmul.f32 %v2160, %v2158
    %v2162 = vmul.f32 %v2161, %v2160
    %v2163 = vmul.f32 0.5, %v2162
    %v2164 = vsub.f32 1.5, %v2163
    %v2165 = vmul.f32 %v2160, %v2164
    %vm2166 = vweird.f32 %v2158
    %vm2167 = vweird.f32 %v2160
    %vm2168 = vmor %vm2166, %vm2167
    %v2169 = vsel %vm2168, %v2160, %v2165
    %v2170 = vrsqrt.pop %v2159
    %v2171 = vmul.f32 %v2170, %v2159
    %v2172 = vmul.f32 %v2171, %v2170
    %v2173 = vmul.f32 0.5, %v2172
    %v2174 = vsub.f32 1.5, %v2173
    %v2175 = vmul.f32 %v2170, %v2174
    %vm2176 = vweird.f32 %v2159
    %vm2177 = vweird.f32 %v2170
    %vm2178 = vmor %vm2176, %vm2177
    %v2179 = vsel %vm2178, %v2170, %v2175
    %v2180 = vmul.f32 %v2146, %v2169
    %v2181 = vmul.f32 %v2147, %v2179
    %v2183 = vperm.slane %v2135, 0
    %v2185 = vmul.f32 %v2180, %v2183
    %v2186 = vmul.f32 %v2181, %v2183
    %v2188 = vperm.slane %v2137, 0
    %v2190 = vadd.f32 %v2185, %v2188
    %v2191 = vadd.f32 %v2186, %v2188
    %s2192 = scalar_lea.vmem %s14, 64
    %v2193 = vld [vmem:[%s2192] sm:$0xff]
    %v2194 = vld [vmem:[%s2192 + $0x8] sm:$0xff]
    %v2195 = vld [vmem:[%s2192 + $0x10] sm:$0xff]
    %v2196 = vld [vmem:[%s2192 + $0x18] sm:$0xff]
    %v2197 = vpack.c.bf16 %v2191, %v2190
    %v2198 = vpack.c.bf16 %v2194, %v2193
    %v2199 = vpack.c.bf16 %v2196, %v2195
    %s2200 = scalar_lea.vmem %s15, 2
    %v2201 = vld [vmem:[%s2200] sm:$0x1]
    %v2203 = vperm.slane %v2201, 0
    %v2206 = vsel %vm139, %v2197, 0
    %2208 = vmatpush.bf16.msra.mxu0 0
    %2209 = vmatpush.bf16.msra.mxu0 0
    %2210 = vmatpush.bf16.msra.mxu0 0
    %2211 = vmatpush.bf16.msra.mxu0 0
    %2212 = vmatpush.bf16.msra.mxu0 0
    %2213 = vmatpush.bf16.msra.mxu0 0
    %2214 = vmatpush.bf16.msra.mxu0 %v2199
    %2215 = vmatpush.bf16.msra.mxu0 %v2198
    %2216 = vmatmul.bf16.gmra.mxu0 %v2206
    %v2217 = vpop.f32.mrf.mxu0
    %v2218 = vadd.f32 %v2203, %v2217
    %v2219 = vpop.f32.mrf.mxu0
    %v2220 = vadd.f32 %v2203, %v2219
    %2221 = vdwg.mxu0
    %v2222 = vmul.f32 %v2218, 1.702
    %v2223 = vmul.f32 %v2220, 1.702
    %v2224 = vxor.u32 %v2222, 2147483648
    %v2225 = vxor.u32 %v2223, 2147483648
    %v2226 = vmul.f32 %v2224, 1.442695
    %v2227 = vpow.pop %v2226
    %v2228 = vmul.f32 %v2225, 1.442695
    %v2229 = vpow.pop %v2228
    %v2230 = vadd.f32 %v2227, 1.0
    %v2231 = vadd.f32 %v2229, 1.0
    %v2232 = vrcp.pop %v2230
    %v2233 = vmul.f32 %v2230, %v2232
    %v2234 = vsub.f32 1.0, %v2233
    %v2235 = vmul.f32 %v2232, %v2234
    %v2236 = vadd.f32 %v2232, %v2235
    %vm2237 = vweird.f32 %v2230
    %vm2238 = vweird.f32 %v2232
    %vm2239 = vmor %vm2237, %vm2238
    %v2240 = vsel %vm2239, %v2232, %v2236
    %v2241 = vand.u32 2147483647, %v2230
    %vm2242 = vcmp.eq.f32.partialorder %v2241, 8.507059e+37
    %v2243 = vand.u32 %v2230, 2147483648
    %v2244 = vor.u32 1.1754944e-38, %v2243
    %v2245 = vsel %vm2242, %v2244, %v2240
    %v2246 = vmul.f32 1.0, %v2245
    %v2247 = vrcp.pop %v2231
    %v2248 = vmul.f32 %v2231, %v2247
    %v2249 = vsub.f32 1.0, %v2248
    %v2250 = vmul.f32 %v2247, %v2249
    %v2251 = vadd.f32 %v2247, %v2250
    %vm2252 = vweird.f32 %v2231
    %vm2253 = vweird.f32 %v2247
    %vm2254 = vmor %vm2252, %vm2253
    %v2255 = vsel %vm2254, %v2247, %v2251
    %v2256 = vand.u32 2147483647, %v2231
    %vm2257 = vcmp.eq.f32.partialorder %v2256, 8.507059e+37
    %v2258 = vand.u32 %v2231, 2147483648
    %v2259 = vor.u32 1.1754944e-38, %v2258
    %v2260 = vsel %vm2257, %v2259, %v2255
    %v2261 = vmul.f32 1.0, %v2260
    %v2262 = vmul.f32 %v2218, %v2246
    %v2263 = vmul.f32 %v2220, %v2261
    %s2264 = scalar_lea.vmem %s16, 128
    %v2265 = vld [vmem:[%s2264] sm:$0xff]
    %v2266 = vld [vmem:[%s2264 + $0x8] sm:$0xff]
    %v2267 = vld [vmem:[%s2264 + $0x10] sm:$0xff]
    %v2268 = vld [vmem:[%s2264 + $0x18] sm:$0xff]
    %v2269 = vld [vmem:[%s2264 + $0x20] sm:$0xff]
    %v2270 = vld [vmem:[%s2264 + $0x28] sm:$0xff]
    %v2271 = vld [vmem:[%s2264 + $0x30] sm:$0xff]
    %v2272 = vld [vmem:[%s2264 + $0x38] sm:$0xff]
    %v2273 = vpack.c.bf16 %v2263, %v2262
    %v2274 = vpack.c.bf16 %v2266, %v2265
    %v2275 = vpack.c.bf16 %v2268, %v2267
    %v2276 = vpack.c.bf16 %v2270, %v2269
    %v2277 = vpack.c.bf16 %v2272, %v2271
    %s2278 = scalar_lea.vmem %s17, 2
    %v2279 = vld [vmem:[%s2278] sm:$0x1]
    %v2281 = vperm.slane %v2279, 0
    %v2284 = vsel %vm105, %v2273, 0
    %2286 = vmatpush.bf16.msra.mxu0 0
    %2287 = vmatpush.bf16.msra.mxu0 0
    %2288 = vmatpush.bf16.msra.mxu0 0
    %2289 = vmatpush.bf16.msra.mxu0 0
    %2290 = vmatpush.bf16.msra.mxu0 %v2277
    %2291 = vmatpush.bf16.msra.mxu0 %v2276
    %2292 = vmatpush.bf16.msra.mxu0 %v2275
    %2293 = vmatpush.bf16.msra.mxu0 %v2274
    %2294 = vmatmul.bf16.gmra.mxu0 %v2284
    %v2295 = vpop.f32.mrf.mxu0
    %v2296 = vadd.f32 %v2281, %v2295
    %v2297 = vpop.f32.mrf.mxu0
    %v2298 = vadd.f32 %v2281, %v2297
    %2299 = vdwg.mxu0
    %v2300 = vadd.f32 %v2132, %v2296
    %v2301 = vadd.f32 %v2133, %v2298
    %s2302 = scalar_lea.vmem [#allocation2], 48
    %2303 = vst.msk [vmem:[%s2302] sm:$0xff] %vm139, %v2300
    %2304 = vst.msk [vmem:[%s2302 + $0x8] sm:$0xff] %vm139, %v2301
    // Predicated region
    $region74: #{tpu_custom_call.1} parent=1 // pred_check
      _
    $region75: #{tpu_custom_call.1} parent=1 // pred_check_branch
      %2306 = sbr.rel (0) target = $region77
    $region76: #{tpu_custom_call.1} parent=1 // pred_region
      %2308 = vsyncadd [#allocation3], 0
      %s2309 = sshll.u32 [#allocation2], 4
      %s2310 = int_to_ptr.vmem [resolvable:$true] %s2309
      %s2311 = sshll.u32 %s18, 4
      %s2312 = int_to_ptr.hbm [resolvable:$true] %s2311
      %2317 = dma.vmem_to_hbm [thread:$0]  %s2310, 1024, %s2312, [#allocation3], 128, 128, 8
    $region77: #{tpu_custom_call.1} parent=1 // pred_fallthru
      _
    // Predicated region
    $region78: #{tpu_custom_call.1} parent=1 // pred_check
      _
    $region79: #{tpu_custom_call.1} parent=1 // pred_check_branch
      %2319 = sbr.rel (0) target = $region81
    $region80: #{tpu_custom_call.1} parent=1 // pred_region
      %2321 = dma.done [#allocation3], 1024
    $region81: #{tpu_custom_call.1} parent=1 // pred_fallthru
      _
    %2322 = vsyncpa [#allocation3], 1

</llo_original>
